<compile_context>
chip_gen: v6e
topology: v6e:2x2x1
jax: 0.10.0
libtpu: 0.0.40
codegen_flags: <defaults>
</compile_context>

<pallas_src>
import functools

import jax
import jax.numpy as jnp
from jax.experimental import pallas as pl
from jax.experimental.pallas import tpu as pltpu

_VMEM_LIMIT = 32 * 1024 * 1024


def _pick_pixel_tile(hw, cap=2048):
    """Lane-dense pixel tile: full H*W when small, else a multiple of 128 dividing hw."""
    if hw <= cap:
        return hw
    t = (cap // 128) * 128
    while t >= 128:
        if hw % t == 0:
            return t
        t -= 128
    return hw  # TODO(synk): ragged hw > cap falls back to one full-width tile


def _pick_channel_tile(c, cap=64):
    if c <= cap:
        return c
    t = (cap // 8) * 8
    while t >= 8:
        if c % t == 0:
            return t
        t -= 8
    return c


# -----------------------------------------------------------------------------
# Fused 1x1-conv + folded-BatchNorm + SiLU, multi-input / multi-output matmul.
# -----------------------------------------------------------------------------
def _make_conv1x1_bn_silu_kernel(n_in, n_out):
    def kernel(*refs):
        xs = refs[:n_in]                                    # each (Cin_i, TM)
        ws = refs[n_in:n_in + n_in * n_out]                 # [j][i] -> (Cout_j, Cin_i)
        bs = refs[n_in + n_in * n_out:n_in + n_in * n_out + n_out]  # (Cout_j, 1)
        os_ = refs[n_in + n_in * n_out + n_out:]            # (Cout_j, TM)
        for j in range(n_out):
            acc = None
            for i in range(n_in):
                part = jnp.dot(ws[j * n_in + i][...], xs[i][...],
                               preferred_element_type=jnp.float32)
                acc = part if acc is None else acc + part
            y = acc + bs[j][...]
            # SiLU (BaseConv eval path): divide moved to the EUP via approx recip.
            y = y * pl.reciprocal(1.0 + jnp.exp(-y), approx=True)
            os_[j][...] = y.astype(os_[j].dtype)
    return kernel


def conv1x1_bn_silu(x_list, wb_list):
    """Fused 1x1 conv + folded BN + SiLU.

    x_list : list of (N, Cin_i, HW) activations (concatenation replaced by
             multiple input refs + accumulated partial dots).
    wb_list: list of (w_j, b_j) with w_j: (Cout_j, sum Cin_i), b_j: (Cout_j, 1)
             (multiple outputs = several convs fused over the same inputs).
    Returns list of (N, Cout_j, HW).
    """
    n, _, hw = x_list[0].shape
    for xi in x_list:
        assert xi.shape[0] == n and xi.shape[2] == hw
    cin_list = [xi.shape[1] for xi in x_list]
    cin_total = sum(cin_list)

    n_in, n_out = len(x_list), len(wb_list)
    cout_list = [wb[0].shape[0] for wb in wb_list]

    # One-time split of the (tiny) folded weights per (output, input) block.
    w_blocks, b_blocks = [], []
    for w_j, b_j in wb_list:
        assert w_j.shape[1] == cin_total
        off = 0
        for ci in cin_list:
            w_blocks.append(w_j[:, off:off + ci].astype(jnp.float32))
            off += ci
        b_blocks.append(b_j.astype(jnp.float32))

    tm = _pick_pixel_tile(hw)
    grid = (n, hw // tm)
    dtype = x_list[0].dtype

    in_specs = (
        [pl.BlockSpec((None, ci, tm), lambda bn, i: (bn, 0, i)) for ci in cin_list]
        + [pl.BlockSpec(wb.shape, lambda bn, i: (0, 0)) for wb in w_blocks]
        + [pl.BlockSpec(bb.shape, lambda bn, i: (0, 0)) for bb in b_blocks]
    )
    out_specs = tuple(
        pl.BlockSpec((None, co, tm), lambda bn, i: (bn, 0, i)) for co in cout_list
    )
    out_shape = tuple(jax.ShapeDtypeStruct((n, co, hw), dtype) for co in cout_list)

    outs = pl.pallas_call(
        _make_conv1x1_bn_silu_kernel(n_in, n_out),
        out_shape=out_shape,
        grid=grid,
        in_specs=in_specs,
        out_specs=out_specs,
        compiler_params=pltpu.CompilerParams(
            dimension_semantics=("parallel", "parallel"),
            vmem_limit_bytes=_VMEM_LIMIT,
        ),
    )(*x_list, *w_blocks, *b_blocks)
    return list(outs)


# -----------------------------------------------------------------------------
# Cascaded stride-1 max pools (k = 5, 9, 13), flattened H*W on lanes.
# PyTorch implicit -inf padding is emulated with iota masks (no HBM padding).
# -----------------------------------------------------------------------------
def _maxpool_5_9_13_kernel(x_ref, p5_ref, p9_ref, p13_ref, *, H, W):
    hw = H * W
    x = x_ref[...]                                   # (TC, H*W), image on lanes
    pos = jax.lax.broadcasted_iota(jnp.int32, (1, hw), 1)
    col = pos % W
    neg = jnp.float32(-jnp.inf)

    def shifted(a, offset, mask):
        # out[:, p] = a[:, p + offset] where mask, else -inf (window clamped).
        amount = (-offset) % hw
        v = pltpu.roll(a, shift=amount, axis=1) if amount else a
        return jnp.where(mask, v, neg)

    def pool5(a):
        # Separable masked 5-window max; clamped windows compose exactly like
        # -inf-padded pooling, so pool5∘pool5 = pool9, pool5∘pool5∘pool5 = pool13.
        m = a
        for s in (1, 2):                             # W direction (lane +-s)
            m = jnp.maximum(m, shifted(a, s, col < (W - s)))
            m = jnp.maximum(m, shifted(a, -s, col >= s))
        out = m
        for s in (1, 2):                             # H direction (lane +-s*W)
            out = jnp.maximum(out, shifted(m, s * W, pos < (H - s) * W))
            out = jnp.maximum(out, shifted(m, -s * W, pos >= s * W))
        return out

    p5 = pool5(x)
    p9 = pool5(p5)
    p13 = pool5(p9)
    p5_ref[...] = p5
    p9_ref[...] = p9
    p13_ref[...] = p13


def maxpool_5_9_13(x2, h, w):
    """x2: (N, C, H*W). Returns (p5, p9, p13), each (N, C, H*W)."""
    n, c, hw = x2.shape
    assert hw == h * w
    tc = _pick_channel_tile(c)
    grid = (n, c // tc)

    spec = pl.BlockSpec((None, tc, hw), lambda bn, j: (bn, j, 0))
    out_sds = jax.ShapeDtypeStruct((n, c, hw), x2.dtype)

    p5, p9, p13 = pl.pallas_call(
        functools.partial(_maxpool_5_9_13_kernel, H=h, W=w),
        out_shape=(out_sds, out_sds, out_sds),
        grid=grid,
        in_specs=[spec],
        out_specs=(spec, spec, spec),
        compiler_params=pltpu.CompilerParams(
            dimension_semantics=("parallel", "parallel"),
            vmem_limit_bytes=_VMEM_LIMIT,
        ),
    )(x2)
    return p5, p9, p13


# -----------------------------------------------------------------------------
# SPPELAN forward
# -----------------------------------------------------------------------------
def fold_conv_bn(conv_w, gamma, beta, mean, var, eps=1e-3):
    """conv_w: (Cout, Cin, 1, 1). Returns (w: (Cout, Cin), b: (Cout, 1))."""
    scale = gamma / jnp.sqrt(var + eps)
    w = conv_w[:, :, 0, 0] * scale[:, None]
    b = (beta - mean * scale)[:, None]
    return w, b


def sppelan_forward(x, params):
    """x: (N, c1, H, W) NCHW. params: cv1..cv4 -> (conv_w, gamma, beta, mean, var)."""
    n, c1, h, w = x.shape
    hw = h * w
    w1, b1 = fold_conv_bn(*params["cv1"])
    w2, b2 = fold_conv_bn(*params["cv2"])
    w3, b3 = fold_conv_bn(*params["cv3"])
    w4, b4 = fold_conv_bn(*params["cv4"])
    c2 = w4.shape[0]

    x_cm = x.reshape(n, c1, hw)                      # view only, no transpose

    # cv1 + cv2 fused: one pass over x, two outputs.
    x1, x2 = conv1x1_bn_silu([x_cm], [(w1, b1), (w2, b2)])

    # Stride-1 max pools (5, 9, 13) on x2 (lane-dense flattened image).
    p5, p9, p13 = maxpool_5_9_13(x2, h, w)

    # cv3 over concat([p13, p9, p5, x2], channel) -- concat replaced by
    # multi-input accumulating matmul (torch.cat(x_cats[::-1], 1)).
    (y_cats,) = conv1x1_bn_silu([p13, p9, p5, x2], [(w3, b3)])

    # cv4 over concat([y_cats, x1], channel) -- same trick.
    (out,) = conv1x1_bn_silu([y_cats, x1], [(w4, b4)])

    return out.reshape(n, c2, h, w)                  # view only, NCHW output


# ------------------------------ pure-JAX reference ---------------------------
def _ref_baseconv(x, conv_w, gamma, beta, mean, var, eps=1e-3):
    z = jnp.einsum("oc,nchw->nohw", conv_w[:, :, 0, 0], x, precision="highest")
    scale = gamma / jnp.sqrt(var + eps)
    z = z * scale[None, :, None, None] + (beta - mean * scale)[None, :, None, None]
    return z * jax.nn.sigmoid(z)


def _ref_maxpool(x, k):
    return jax.lax.reduce_window(
        x, -jnp.inf, jax.lax.max, (1, 1, k, k), (1, 1, 1, 1),
        [(0, 0), (0, 0), (k // 2, k // 2), (k // 2, k // 2)])


def _ref_sppelan(x, params):
    x1 = _ref_baseconv(x, *params["cv1"])
    x2 = _ref_baseconv(x, *params["cv2"])
    cats = [x2] + [_ref_maxpool(x2, k) for k in (5, 9, 13)]
    y_cats = _ref_baseconv(jnp.concatenate(cats[::-1], axis=1), *params["cv3"])
    y = jnp.concatenate([y_cats, x1], axis=1)
    return _ref_baseconv(y, *params["cv4"])


def _make_baseconv_params(key, cin, cout):
    k1, k2, k3, k4, k5 = jax.random.split(key, 5)
    conv_w = 0.1 * jax.random.normal(k1, (cout, cin, 1, 1), jnp.float32)
    gamma = 1.0 + 0.1 * jax.random.normal(k2, (cout,), jnp.float32)
    beta = 0.1 * jax.random.normal(k3, (cout,), jnp.float32)
    mean = 0.1 * jax.random.normal(k4, (cout,), jnp.float32)
    var = jax.random.uniform(k5, (cout,), jnp.float32, minval=0.5, maxval=1.5)
    return (conv_w, gamma, beta, mean, var)


if __name__ == "__main__":
    key = jax.random.PRNGKey(0)
    kx, k1, k2, k3, k4 = jax.random.split(key, 5)

    n, c1, c2, h, w = 2, 8, 8, 16, 16
    e = 0.5
    c_ = int(2 * c2 * e)                      # = 8

    x = jax.random.normal(kx, (n, c1, h, w), jnp.float32)
    params = {
        "cv1": _make_baseconv_params(k1, c1, c_),
        "cv2": _make_baseconv_params(k2, c1, c_),
        "cv3": _make_baseconv_params(k3, 4 * c_, c_),
        "cv4": _make_baseconv_params(k4, 2 * c_, c2),
    }

    fwd = jax.jit(sppelan_forward)
    out = jax.block_until_ready(fwd(x, params))

    ref = _ref_sppelan(x, params)
    assert out.shape == (n, c2, h, w), out.shape
    max_err = float(jnp.max(jnp.abs(out - ref)))
    assert jnp.allclose(out, ref, atol=2e-2, rtol=2e-2), max_err
    print("KERNEL_OK")
</pallas_src>

<mosaic_0001>
module attributes {stable_mosaic.version = 11 : i64} {
  func.func @kernel(%arg0: i32, %arg1: i32, %arg2: memref<1x8x256xf32, #tpu.memory_space<vmem>>, %arg3: memref<8x8xf32, #tpu.memory_space<vmem>>, %arg4: memref<8x8xf32, #tpu.memory_space<vmem>>, %arg5: memref<8x1xf32, #tpu.memory_space<vmem>>, %arg6: memref<8x1xf32, #tpu.memory_space<vmem>>, %arg7: memref<1x8x256xf32, #tpu.memory_space<vmem>>, %arg8: memref<1x8x256xf32, #tpu.memory_space<vmem>>) attributes {dimension_semantics = [#tpu.dimension_semantics<parallel>, #tpu.dimension_semantics<parallel>], iteration_bounds = array<i64: 2, 1>, scalar_prefetch = 0 : i64, scratch_operands = 0 : i64, tpu.core_type = #tpu.core_type<tc>, window_params = [{transform_indices = @transform_0, window_bounds = array<i64: 1, 8, 256>}, {pipeline_mode = #tpu.pipeline_mode<synchronous>, transform_indices = @transform_1, window_bounds = array<i64: 8, 8>}, {pipeline_mode = #tpu.pipeline_mode<synchronous>, transform_indices = @transform_2, window_bounds = array<i64: 8, 8>}, {pipeline_mode = #tpu.pipeline_mode<synchronous>, transform_indices = @transform_3, window_bounds = array<i64: 8, 1>}, {pipeline_mode = #tpu.pipeline_mode<synchronous>, transform_indices = @transform_4, window_bounds = array<i64: 8, 1>}, {transform_indices = @transform_5, window_bounds = array<i64: 1, 8, 256>}, {transform_indices = @transform_6, window_bounds = array<i64: 1, 8, 256>}]} {
    %c0 = arith.constant 0 : index
    %c0_0 = arith.constant 0 : index
    %0 = vector.load %arg3[%c0, %c0_0] : memref<8x8xf32, #tpu.memory_space<vmem>>, vector<8x8xf32>
    %c0_1 = arith.constant 0 : index
    %c0_2 = arith.constant 0 : index
    %c0_3 = arith.constant 0 : index
    %1 = vector.load %arg2[%c0_1, %c0_2, %c0_3] : memref<1x8x256xf32, #tpu.memory_space<vmem>>, vector<1x8x256xf32>
    %2 = vector.shape_cast %1 : vector<1x8x256xf32> to vector<8x256xf32>
    %cst = arith.constant dense<0.000000e+00> : vector<8x256xf32>
    %3 = tpu.matmul %0, %2, %cst {dimension_numbers = #tpu.dot_dimension_numbers<[1], [0], [0], [1], [0, 0, 1, 1], [], []>} : vector<8x8xf32>, vector<8x256xf32>, vector<8x256xf32> -> vector<8x256xf32>
    %c0_4 = arith.constant 0 : index
    %c0_5 = arith.constant 0 : index
    %4 = vector.load %arg5[%c0_4, %c0_5] : memref<8x1xf32, #tpu.memory_space<vmem>>, vector<8x1xf32>
    %5 = vector.broadcast %4 : vector<8x1xf32> to vector<8x256xf32>
    %6 = arith.addf %3, %5 : vector<8x256xf32>
    %cst_6 = arith.constant 0.000000e+00 : f32
    %7 = vector.broadcast %cst_6 : f32 to vector<8x256xf32>
    %8 = arith.subf %7, %6 : vector<8x256xf32>
    %9 = math.exp %8 : vector<8x256xf32>
    %cst_7 = arith.constant 1.000000e+00 : f32
    %10 = vector.broadcast %cst_7 : f32 to vector<8x256xf32>
    %11 = arith.addf %10, %9 : vector<8x256xf32>
    %12 = tpu.reciprocal %11 {approx = true} : vector<8x256xf32> -> vector<8x256xf32>
    %13 = arith.mulf %6, %12 : vector<8x256xf32>
    %c0_8 = arith.constant 0 : index
    %c0_9 = arith.constant 0 : index
    %c0_10 = arith.constant 0 : index
    %14 = vector.load %arg7[%c0_8, %c0_9, %c0_10] : memref<1x8x256xf32, #tpu.memory_space<vmem>>, vector<1x8x256xf32>
    %15 = vector.shape_cast %14 : vector<1x8x256xf32> to vector<8x256xf32>
    %16 = vector.shape_cast %13 : vector<8x256xf32> to vector<1x8x256xf32>
    tpu.vector_store %arg7[%c0_8, %c0_9, %c0_10], %16 {strides = array<i32>} : memref<1x8x256xf32, #tpu.memory_space<vmem>>, vector<1x8x256xf32>,
    %c0_11 = arith.constant 0 : index
    %c0_12 = arith.constant 0 : index
    %17 = vector.load %arg4[%c0_11, %c0_12] : memref<8x8xf32, #tpu.memory_space<vmem>>, vector<8x8xf32>
    %c0_13 = arith.constant 0 : index
    %c0_14 = arith.constant 0 : index
    %c0_15 = arith.constant 0 : index
    %18 = vector.load %arg2[%c0_13, %c0_14, %c0_15] : memref<1x8x256xf32, #tpu.memory_space<vmem>>, vector<1x8x256xf32>
    %19 = vector.shape_cast %18 : vector<1x8x256xf32> to vector<8x256xf32>
    %cst_16 = arith.constant dense<0.000000e+00> : vector<8x256xf32>
    %20 = tpu.matmul %17, %19, %cst_16 {dimension_numbers = #tpu.dot_dimension_numbers<[1], [0], [0], [1], [0, 0, 1, 1], [], []>} : vector<8x8xf32>, vector<8x256xf32>, vector<8x256xf32> -> vector<8x256xf32>
    %c0_17 = arith.constant 0 : index
    %c0_18 = arith.constant 0 : index
    %21 = vector.load %arg6[%c0_17, %c0_18] : memref<8x1xf32, #tpu.memory_space<vmem>>, vector<8x1xf32>
    %22 = vector.broadcast %21 : vector<8x1xf32> to vector<8x256xf32>
    %23 = arith.addf %20, %22 : vector<8x256xf32>
    %cst_19 = arith.constant 0.000000e+00 : f32
    %24 = vector.broadcast %cst_19 : f32 to vector<8x256xf32>
    %25 = arith.subf %24, %23 : vector<8x256xf32>
    %26 = math.exp %25 : vector<8x256xf32>
    %cst_20 = arith.constant 1.000000e+00 : f32
    %27 = vector.broadcast %cst_20 : f32 to vector<8x256xf32>
    %28 = arith.addf %27, %26 : vector<8x256xf32>
    %29 = tpu.reciprocal %28 {approx = true} : vector<8x256xf32> -> vector<8x256xf32>
    %30 = arith.mulf %23, %29 : vector<8x256xf32>
    %c0_21 = arith.constant 0 : index
    %c0_22 = arith.constant 0 : index
    %c0_23 = arith.constant 0 : index
    %31 = vector.load %arg8[%c0_21, %c0_22, %c0_23] : memref<1x8x256xf32, #tpu.memory_space<vmem>>, vector<1x8x256xf32>
    %32 = vector.shape_cast %31 : vector<1x8x256xf32> to vector<8x256xf32>
    %33 = vector.shape_cast %30 : vector<8x256xf32> to vector<1x8x256xf32>
    tpu.vector_store %arg8[%c0_21, %c0_22, %c0_23], %33 {strides = array<i32>} : memref<1x8x256xf32, #tpu.memory_space<vmem>>, vector<1x8x256xf32>,
    return
  }
  func.func @transform_0(%arg0: i32, %arg1: i32) -> (i32, i32, i32) {
    %c0_i32 = arith.constant 0 : i32
    %c0_i32_0 = arith.constant 0 : i32
    return %arg0, %c0_i32, %arg1 : i32, i32, i32
  }
  func.func @transform_1(%arg0: i32, %arg1: i32) -> (i32, i32) {
    %c0_i32 = arith.constant 0 : i32
    %c0_i32_0 = arith.constant 0 : i32
    %c0_i32_1 = arith.constant 0 : i32
    return %c0_i32, %c0_i32_0 : i32, i32
  }
  func.func @transform_2(%arg0: i32, %arg1: i32) -> (i32, i32) {
    %c0_i32 = arith.constant 0 : i32
    %c0_i32_0 = arith.constant 0 : i32
    %c0_i32_1 = arith.constant 0 : i32
    return %c0_i32, %c0_i32_0 : i32, i32
  }
  func.func @transform_3(%arg0: i32, %arg1: i32) -> (i32, i32) {
    %c0_i32 = arith.constant 0 : i32
    %c0_i32_0 = arith.constant 0 : i32
    %c0_i32_1 = arith.constant 0 : i32
    return %c0_i32, %c0_i32_0 : i32, i32
  }
  func.func @transform_4(%arg0: i32, %arg1: i32) -> (i32, i32) {
    %c0_i32 = arith.constant 0 : i32
    %c0_i32_0 = arith.constant 0 : i32
    %c0_i32_1 = arith.constant 0 : i32
    return %c0_i32, %c0_i32_0 : i32, i32
  }
  func.func @transform_5(%arg0: i32, %arg1: i32) -> (i32, i32, i32) {
    %c0_i32 = arith.constant 0 : i32
    %c0_i32_0 = arith.constant 0 : i32
    return %arg0, %c0_i32, %arg1 : i32, i32, i32
  }
  func.func @transform_6(%arg0: i32, %arg1: i32) -> (i32, i32, i32) {
    %c0_i32 = arith.constant 0 : i32
    %c0_i32_0 = arith.constant 0 : i32
    return %arg0, %c0_i32, %arg1 : i32, i32, i32
  }
}

module attributes {stable_mosaic.version = 11 : i64} {
  func.func @kernel(%arg0: i32, %arg1: i32, %arg2: memref<1x8x256xf32, #tpu.memory_space<vmem>>, %arg3: memref<1x8x256xf32, #tpu.memory_space<vmem>>, %arg4: memref<1x8x256xf32, #tpu.memory_space<vmem>>, %arg5: memref<1x8x256xf32, #tpu.memory_space<vmem>>, %arg6: memref<8x8xf32, #tpu.memory_space<vmem>>, %arg7: memref<8x8xf32, #tpu.memory_space<vmem>>, %arg8: memref<8x8xf32, #tpu.memory_space<vmem>>, %arg9: memref<8x8xf32, #tpu.memory_space<vmem>>, %arg10: memref<8x1xf32, #tpu.memory_space<vmem>>, %arg11: memref<1x8x256xf32, #tpu.memory_space<vmem>>) attributes {dimension_semantics = [#tpu.dimension_semantics<parallel>, #tpu.dimension_semantics<parallel>], iteration_bounds = array<i64: 2, 1>, scalar_prefetch = 0 : i64, scratch_operands = 0 : i64, tpu.core_type = #tpu.core_type<tc>, window_params = [{transform_indices = @transform_0, window_bounds = array<i64: 1, 8, 256>}, {transform_indices = @transform_1, window_bounds = array<i64: 1, 8, 256>}, {transform_indices = @transform_2, window_bounds = array<i64: 1, 8, 256>}, {transform_indices = @transform_3, window_bounds = array<i64: 1, 8, 256>}, {pipeline_mode = #tpu.pipeline_mode<synchronous>, transform_indices = @transform_4, window_bounds = array<i64: 8, 8>}, {pipeline_mode = #tpu.pipeline_mode<synchronous>, transform_indices = @transform_5, window_bounds = array<i64: 8, 8>}, {pipeline_mode = #tpu.pipeline_mode<synchronous>, transform_indices = @transform_6, window_bounds = array<i64: 8, 8>}, {pipeline_mode = #tpu.pipeline_mode<synchronous>, transform_indices = @transform_7, window_bounds = array<i64: 8, 8>}, {pipeline_mode = #tpu.pipeline_mode<synchronous>, transform_indices = @transform_8, window_bounds = array<i64: 8, 1>}, {transform_indices = @transform_9, window_bounds = array<i64: 1, 8, 256>}]} {
    %c0 = arith.constant 0 : index
    %c0_0 = arith.constant 0 : index
    %0 = vector.load %arg6[%c0, %c0_0] : memref<8x8xf32, #tpu.memory_space<vmem>>, vector<8x8xf32>
    %c0_1 = arith.constant 0 : index
    %c0_2 = arith.constant 0 : index
    %c0_3 = arith.constant 0 : index
    %1 = vector.load %arg2[%c0_1, %c0_2, %c0_3] : memref<1x8x256xf32, #tpu.memory_space<vmem>>, vector<1x8x256xf32>
    %2 = vector.shape_cast %1 : vector<1x8x256xf32> to vector<8x256xf32>
    %cst = arith.constant dense<0.000000e+00> : vector<8x256xf32>
    %3 = tpu.matmul %0, %2, %cst {dimension_numbers = #tpu.dot_dimension_numbers<[1], [0], [0], [1], [0, 0, 1, 1], [], []>} : vector<8x8xf32>, vector<8x256xf32>, vector<8x256xf32> -> vector<8x256xf32>
    %c0_4 = arith.constant 0 : index
    %c0_5 = arith.constant 0 : index
    %4 = vector.load %arg7[%c0_4, %c0_5] : memref<8x8xf32, #tpu.memory_space<vmem>>, vector<8x8xf32>
    %c0_6 = arith.constant 0 : index
    %c0_7 = arith.constant 0 : index
    %c0_8 = arith.constant 0 : index
    %5 = vector.load %arg3[%c0_6, %c0_7, %c0_8] : memref<1x8x256xf32, #tpu.memory_space<vmem>>, vector<1x8x256xf32>
    %6 = vector.shape_cast %5 : vector<1x8x256xf32> to vector<8x256xf32>
    %cst_9 = arith.constant dense<0.000000e+00> : vector<8x256xf32>
    %7 = tpu.matmul %4, %6, %cst_9 {dimension_numbers = #tpu.dot_dimension_numbers<[1], [0], [0], [1], [0, 0, 1, 1], [], []>} : vector<8x8xf32>, vector<8x256xf32>, vector<8x256xf32> -> vector<8x256xf32>
    %8 = arith.addf %3, %7 : vector<8x256xf32>
    %c0_10 = arith.constant 0 : index
    %c0_11 = arith.constant 0 : index
    %9 = vector.load %arg8[%c0_10, %c0_11] : memref<8x8xf32, #tpu.memory_space<vmem>>, vector<8x8xf32>
    %c0_12 = arith.constant 0 : index
    %c0_13 = arith.constant 0 : index
    %c0_14 = arith.constant 0 : index
    %10 = vector.load %arg4[%c0_12, %c0_13, %c0_14] : memref<1x8x256xf32, #tpu.memory_space<vmem>>, vector<1x8x256xf32>
    %11 = vector.shape_cast %10 : vector<1x8x256xf32> to vector<8x256xf32>
    %cst_15 = arith.constant dense<0.000000e+00> : vector<8x256xf32>
    %12 = tpu.matmul %9, %11, %cst_15 {dimension_numbers = #tpu.dot_dimension_numbers<[1], [0], [0], [1], [0, 0, 1, 1], [], []>} : vector<8x8xf32>, vector<8x256xf32>, vector<8x256xf32> -> vector<8x256xf32>
    %13 = arith.addf %8, %12 : vector<8x256xf32>
    %c0_16 = arith.constant 0 : index
    %c0_17 = arith.constant 0 : index
    %14 = vector.load %arg9[%c0_16, %c0_17] : memref<8x8xf32, #tpu.memory_space<vmem>>, vector<8x8xf32>
    %c0_18 = arith.constant 0 : index
    %c0_19 = arith.constant 0 : index
    %c0_20 = arith.constant 0 : index
    %15 = vector.load %arg5[%c0_18, %c0_19, %c0_20] : memref<1x8x256xf32, #tpu.memory_space<vmem>>, vector<1x8x256xf32>
    %16 = vector.shape_cast %15 : vector<1x8x256xf32> to vector<8x256xf32>
    %cst_21 = arith.constant dense<0.000000e+00> : vector<8x256xf32>
    %17 = tpu.matmul %14, %16, %cst_21 {dimension_numbers = #tpu.dot_dimension_numbers<[1], [0], [0], [1], [0, 0, 1, 1], [], []>} : vector<8x8xf32>, vector<8x256xf32>, vector<8x256xf32> -> vector<8x256xf32>
    %18 = arith.addf %13, %17 : vector<8x256xf32>
    %c0_22 = arith.constant 0 : index
    %c0_23 = arith.constant 0 : index
    %19 = vector.load %arg10[%c0_22, %c0_23] : memref<8x1xf32, #tpu.memory_space<vmem>>, vector<8x1xf32>
    %20 = vector.broadcast %19 : vector<8x1xf32> to vector<8x256xf32>
    %21 = arith.addf %18, %20 : vector<8x256xf32>
    %cst_24 = arith.constant 0.000000e+00 : f32
    %22 = vector.broadcast %cst_24 : f32 to vector<8x256xf32>
    %23 = arith.subf %22, %21 : vector<8x256xf32>
    %24 = math.exp %23 : vector<8x256xf32>
    %cst_25 = arith.constant 1.000000e+00 : f32
    %25 = vector.broadcast %cst_25 : f32 to vector<8x256xf32>
    %26 = arith.addf %25, %24 : vector<8x256xf32>
    %27 = tpu.reciprocal %26 {approx = true} : vector<8x256xf32> -> vector<8x256xf32>
    %28 = arith.mulf %21, %27 : vector<8x256xf32>
    %c0_26 = arith.constant 0 : index
    %c0_27 = arith.constant 0 : index
    %c0_28 = arith.constant 0 : index
    %29 = vector.load %arg11[%c0_26, %c0_27, %c0_28] : memref<1x8x256xf32, #tpu.memory_space<vmem>>, vector<1x8x256xf32>
    %30 = vector.shape_cast %29 : vector<1x8x256xf32> to vector<8x256xf32>
    %31 = vector.shape_cast %28 : vector<8x256xf32> to vector<1x8x256xf32>
    tpu.vector_store %arg11[%c0_26, %c0_27, %c0_28], %31 {strides = array<i32>} : memref<1x8x256xf32, #tpu.memory_space<vmem>>, vector<1x8x256xf32>,
    return
  }
  func.func @transform_0(%arg0: i32, %arg1: i32) -> (i32, i32, i32) {
    %c0_i32 = arith.constant 0 : i32
    %c0_i32_0 = arith.constant 0 : i32
    return %arg0, %c0_i32, %arg1 : i32, i32, i32
  }
  func.func @transform_1(%arg0: i32, %arg1: i32) -> (i32, i32, i32) {
    %c0_i32 = arith.constant 0 : i32
    %c0_i32_0 = arith.constant 0 : i32
    return %arg0, %c0_i32, %arg1 : i32, i32, i32
  }
  func.func @transform_2(%arg0: i32, %arg1: i32) -> (i32, i32, i32) {
    %c0_i32 = arith.constant 0 : i32
    %c0_i32_0 = arith.constant 0 : i32
    return %arg0, %c0_i32, %arg1 : i32, i32, i32
  }
  func.func @transform_3(%arg0: i32, %arg1: i32) -> (i32, i32, i32) {
    %c0_i32 = arith.constant 0 : i32
    %c0_i32_0 = arith.constant 0 : i32
    return %arg0, %c0_i32, %arg1 : i32, i32, i32
  }
  func.func @transform_4(%arg0: i32, %arg1: i32) -> (i32, i32) {
    %c0_i32 = arith.constant 0 : i32
    %c0_i32_0 = arith.constant 0 : i32
    %c0_i32_1 = arith.constant 0 : i32
    return %c0_i32, %c0_i32_0 : i32, i32
  }
  func.func @transform_5(%arg0: i32, %arg1: i32) -> (i32, i32) {
    %c0_i32 = arith.constant 0 : i32
    %c0_i32_0 = arith.constant 0 : i32
    %c0_i32_1 = arith.constant 0 : i32
    return %c0_i32, %c0_i32_0 : i32, i32
  }
  func.func @transform_6(%arg0: i32, %arg1: i32) -> (i32, i32) {
    %c0_i32 = arith.constant 0 : i32
    %c0_i32_0 = arith.constant 0 : i32
    %c0_i32_1 = arith.constant 0 : i32
    return %c0_i32, %c0_i32_0 : i32, i32
  }
  func.func @transform_7(%arg0: i32, %arg1: i32) -> (i32, i32) {
    %c0_i32 = arith.constant 0 : i32
    %c0_i32_0 = arith.constant 0 : i32
    %c0_i32_1 = arith.constant 0 : i32
    return %c0_i32, %c0_i32_0 : i32, i32
  }
  func.func @transform_8(%arg0: i32, %arg1: i32) -> (i32, i32) {
    %c0_i32 = arith.constant 0 : i32
    %c0_i32_0 = arith.constant 0 : i32
    %c0_i32_1 = arith.constant 0 : i32
    return %c0_i32, %c0_i32_0 : i32, i32
  }
  func.func @transform_9(%arg0: i32, %arg1: i32) -> (i32, i32, i32) {
    %c0_i32 = arith.constant 0 : i32
    %c0_i32_0 = arith.constant 0 : i32
    return %arg0, %c0_i32, %arg1 : i32, i32, i32
  }
}

module attributes {stable_mosaic.version = 11 : i64} {
  func.func @_maxpool_5_9_13_kernel(%arg0: i32, %arg1: i32, %arg2: memref<1x8x256xf32, #tpu.memory_space<vmem>>, %arg3: memref<1x8x256xf32, #tpu.memory_space<vmem>>, %arg4: memref<1x8x256xf32, #tpu.memory_space<vmem>>, %arg5: memref<1x8x256xf32, #tpu.memory_space<vmem>>) attributes {dimension_semantics = [#tpu.dimension_semantics<parallel>, #tpu.dimension_semantics<parallel>], iteration_bounds = array<i64: 2, 1>, scalar_prefetch = 0 : i64, scratch_operands = 0 : i64, tpu.core_type = #tpu.core_type<tc>, window_params = [{transform_indices = @transform_0, window_bounds = array<i64: 1, 8, 256>}, {transform_indices = @transform_1, window_bounds = array<i64: 1, 8, 256>}, {transform_indices = @transform_2, window_bounds = array<i64: 1, 8, 256>}, {transform_indices = @transform_3, window_bounds = array<i64: 1, 8, 256>}]} {
    %c0 = arith.constant 0 : index
    %c0_0 = arith.constant 0 : index
    %c0_1 = arith.constant 0 : index
    %0 = vector.load %arg2[%c0, %c0_0, %c0_1] : memref<1x8x256xf32, #tpu.memory_space<vmem>>, vector<1x8x256xf32>
    %1 = vector.shape_cast %0 : vector<1x8x256xf32> to vector<8x256xf32>
    %2 = tpu.iota {dimensions = array<i32: 1>} : vector<1x256xi32>
    %c16_i32 = arith.constant 16 : i32
    %c0_i32 = arith.constant 0 : i32
    %3 = arith.cmpi eq, %c16_i32, %c0_i32 : i32
    %c1_i32 = arith.constant 1 : i32
    %4 = arith.select %3, %c1_i32, %c16_i32 : i32
    %5 = vector.broadcast %4 : i32 to vector<1x256xi32>
    %6 = arith.remsi %2, %5 : vector<1x256xi32>
    %c0_i32_2 = arith.constant 0 : i32
    %7 = vector.broadcast %c0_i32_2 : i32 to vector<1x256xi32>
    %8 = arith.cmpi ne, %6, %7 : vector<1x256xi32>
    %c0_i32_3 = arith.constant 0 : i32
    %9 = vector.broadcast %c0_i32_3 : i32 to vector<1x256xi32>
    %10 = arith.cmpi slt, %6, %9 : vector<1x256xi32>
    %c0_i32_4 = arith.constant 0 : i32
    %11 = arith.cmpi slt, %4, %c0_i32_4 : i32
    %12 = vector.broadcast %11 : i1 to vector<1x256xi1>
    %13 = vector.broadcast %12 : vector<1x256xi1> to vector<1x256xi1>
    %14 = arith.xori %10, %13 : vector<1x256xi1>
    %15 = arith.andi %14, %8 : vector<1x256xi1>
    %16 = vector.broadcast %4 : i32 to vector<1x256xi32>
    %17 = arith.addi %6, %16 : vector<1x256xi32>
    %18 = arith.select %15, %17, %6 : vector<1x256xi1>, vector<1x256xi32>
    %c15_i32 = arith.constant 15 : i32
    %19 = vector.broadcast %c15_i32 : i32 to vector<1x256xi32>
    %20 = arith.cmpi slt, %18, %19 : vector<1x256xi32>
    %c255_i32 = arith.constant 255 : i32
    %21 = tpu.dynamic_rotate %1 by %c255_i32 dim 1 : vector<8x256xf32>, i32 -> vector<8x256xf32>
    %cst = arith.constant 0xFF800000 : f32
    %22 = vector.shape_cast %20 : vector<1x256xi1> to vector<1x256xi1>
    %23 = vector.broadcast %22 : vector<1x256xi1> to vector<8x256xi1>
    %24 = vector.broadcast %cst : f32 to vector<8x256xf32>
    %25 = arith.select %23, %21, %24 : vector<8x256xi1>, vector<8x256xf32>
    %26 = arith.maximumf %1, %25 : vector<8x256xf32>
    %c1_i32_5 = arith.constant 1 : i32
    %27 = vector.broadcast %c1_i32_5 : i32 to vector<1x256xi32>
    %28 = arith.cmpi sge, %18, %27 : vector<1x256xi32>
    %c1_i32_6 = arith.constant 1 : i32
    %29 = tpu.dynamic_rotate %1 by %c1_i32_6 dim 1 : vector<8x256xf32>, i32 -> vector<8x256xf32>
    %cst_7 = arith.constant 0xFF800000 : f32
    %30 = vector.shape_cast %28 : vector<1x256xi1> to vector<1x256xi1>
    %31 = vector.broadcast %30 : vector<1x256xi1> to vector<8x256xi1>
    %32 = vector.broadcast %cst_7 : f32 to vector<8x256xf32>
    %33 = arith.select %31, %29, %32 : vector<8x256xi1>, vector<8x256xf32>
    %34 = arith.maximumf %26, %33 : vector<8x256xf32>
    %c14_i32 = arith.constant 14 : i32
    %35 = vector.broadcast %c14_i32 : i32 to vector<1x256xi32>
    %36 = arith.cmpi slt, %18, %35 : vector<1x256xi32>
    %c254_i32 = arith.constant 254 : i32
    %37 = tpu.dynamic_rotate %1 by %c254_i32 dim 1 : vector<8x256xf32>, i32 -> vector<8x256xf32>
    %cst_8 = arith.constant 0xFF800000 : f32
    %38 = vector.shape_cast %36 : vector<1x256xi1> to vector<1x256xi1>
    %39 = vector.broadcast %38 : vector<1x256xi1> to vector<8x256xi1>
    %40 = vector.broadcast %cst_8 : f32 to vector<8x256xf32>
    %41 = arith.select %39, %37, %40 : vector<8x256xi1>, vector<8x256xf32>
    %42 = arith.maximumf %34, %41 : vector<8x256xf32>
    %c2_i32 = arith.constant 2 : i32
    %43 = vector.broadcast %c2_i32 : i32 to vector<1x256xi32>
    %44 = arith.cmpi sge, %18, %43 : vector<1x256xi32>
    %c2_i32_9 = arith.constant 2 : i32
    %45 = tpu.dynamic_rotate %1 by %c2_i32_9 dim 1 : vector<8x256xf32>, i32 -> vector<8x256xf32>
    %cst_10 = arith.constant 0xFF800000 : f32
    %46 = vector.shape_cast %44 : vector<1x256xi1> to vector<1x256xi1>
    %47 = vector.broadcast %46 : vector<1x256xi1> to vector<8x256xi1>
    %48 = vector.broadcast %cst_10 : f32 to vector<8x256xf32>
    %49 = arith.select %47, %45, %48 : vector<8x256xi1>, vector<8x256xf32>
    %50 = arith.maximumf %42, %49 : vector<8x256xf32>
    %c240_i32 = arith.constant 240 : i32
    %51 = vector.broadcast %c240_i32 : i32 to vector<1x256xi32>
    %52 = arith.cmpi slt, %2, %51 : vector<1x256xi32>
    %c240_i32_11 = arith.constant 240 : i32
    %53 = tpu.dynamic_rotate %50 by %c240_i32_11 dim 1 : vector<8x256xf32>, i32 -> vector<8x256xf32>
    %cst_12 = arith.constant 0xFF800000 : f32
    %54 = vector.shape_cast %52 : vector<1x256xi1> to vector<1x256xi1>
    %55 = vector.broadcast %54 : vector<1x256xi1> to vector<8x256xi1>
    %56 = vector.broadcast %cst_12 : f32 to vector<8x256xf32>
    %57 = arith.select %55, %53, %56 : vector<8x256xi1>, vector<8x256xf32>
    %58 = arith.maximumf %50, %57 : vector<8x256xf32>
    %c16_i32_13 = arith.constant 16 : i32
    %59 = vector.broadcast %c16_i32_13 : i32 to vector<1x256xi32>
    %60 = arith.cmpi sge, %2, %59 : vector<1x256xi32>
    %c16_i32_14 = arith.constant 16 : i32
    %61 = tpu.dynamic_rotate %50 by %c16_i32_14 dim 1 : vector<8x256xf32>, i32 -> vector<8x256xf32>
    %cst_15 = arith.constant 0xFF800000 : f32
    %62 = vector.shape_cast %60 : vector<1x256xi1> to vector<1x256xi1>
    %63 = vector.broadcast %62 : vector<1x256xi1> to vector<8x256xi1>
    %64 = vector.broadcast %cst_15 : f32 to vector<8x256xf32>
    %65 = arith.select %63, %61, %64 : vector<8x256xi1>, vector<8x256xf32>
    %66 = arith.maximumf %58, %65 : vector<8x256xf32>
    %c224_i32 = arith.constant 224 : i32
    %67 = vector.broadcast %c224_i32 : i32 to vector<1x256xi32>
    %68 = arith.cmpi slt, %2, %67 : vector<1x256xi32>
    %c224_i32_16 = arith.constant 224 : i32
    %69 = tpu.dynamic_rotate %50 by %c224_i32_16 dim 1 : vector<8x256xf32>, i32 -> vector<8x256xf32>
    %cst_17 = arith.constant 0xFF800000 : f32
    %70 = vector.shape_cast %68 : vector<1x256xi1> to vector<1x256xi1>
    %71 = vector.broadcast %70 : vector<1x256xi1> to vector<8x256xi1>
    %72 = vector.broadcast %cst_17 : f32 to vector<8x256xf32>
    %73 = arith.select %71, %69, %72 : vector<8x256xi1>, vector<8x256xf32>
    %74 = arith.maximumf %66, %73 : vector<8x256xf32>
    %c32_i32 = arith.constant 32 : i32
    %75 = vector.broadcast %c32_i32 : i32 to vector<1x256xi32>
    %76 = arith.cmpi sge, %2, %75 : vector<1x256xi32>
    %c32_i32_18 = arith.constant 32 : i32
    %77 = tpu.dynamic_rotate %50 by %c32_i32_18 dim 1 : vector<8x256xf32>, i32 -> vector<8x256xf32>
    %cst_19 = arith.constant 0xFF800000 : f32
    %78 = vector.shape_cast %76 : vector<1x256xi1> to vector<1x256xi1>
    %79 = vector.broadcast %78 : vector<1x256xi1> to vector<8x256xi1>
    %80 = vector.broadcast %cst_19 : f32 to vector<8x256xf32>
    %81 = arith.select %79, %77, %80 : vector<8x256xi1>, vector<8x256xf32>
    %82 = arith.maximumf %74, %81 : vector<8x256xf32>
    %c15_i32_20 = arith.constant 15 : i32
    %83 = vector.broadcast %c15_i32_20 : i32 to vector<1x256xi32>
    %84 = arith.cmpi slt, %18, %83 : vector<1x256xi32>
    %c255_i32_21 = arith.constant 255 : i32
    %85 = tpu.dynamic_rotate %82 by %c255_i32_21 dim 1 : vector<8x256xf32>, i32 -> vector<8x256xf32>
    %cst_22 = arith.constant 0xFF800000 : f32
    %86 = vector.shape_cast %84 : vector<1x256xi1> to vector<1x256xi1>
    %87 = vector.broadcast %86 : vector<1x256xi1> to vector<8x256xi1>
    %88 = vector.broadcast %cst_22 : f32 to vector<8x256xf32>
    %89 = arith.select %87, %85, %88 : vector<8x256xi1>, vector<8x256xf32>
    %90 = arith.maximumf %82, %89 : vector<8x256xf32>
    %c1_i32_23 = arith.constant 1 : i32
    %91 = vector.broadcast %c1_i32_23 : i32 to vector<1x256xi32>
    %92 = arith.cmpi sge, %18, %91 : vector<1x256xi32>
    %c1_i32_24 = arith.constant 1 : i32
    %93 = tpu.dynamic_rotate %82 by %c1_i32_24 dim 1 : vector<8x256xf32>, i32 -> vector<8x256xf32>
    %cst_25 = arith.constant 0xFF800000 : f32
    %94 = vector.shape_cast %92 : vector<1x256xi1> to vector<1x256xi1>
    %95 = vector.broadcast %94 : vector<1x256xi1> to vector<8x256xi1>
    %96 = vector.broadcast %cst_25 : f32 to vector<8x256xf32>
    %97 = arith.select %95, %93, %96 : vector<8x256xi1>, vector<8x256xf32>
    %98 = arith.maximumf %90, %97 : vector<8x256xf32>
    %c14_i32_26 = arith.constant 14 : i32
    %99 = vector.broadcast %c14_i32_26 : i32 to vector<1x256xi32>
    %100 = arith.cmpi slt, %18, %99 : vector<1x256xi32>
    %c254_i32_27 = arith.constant 254 : i32
    %101 = tpu.dynamic_rotate %82 by %c254_i32_27 dim 1 : vector<8x256xf32>, i32 -> vector<8x256xf32>
    %cst_28 = arith.constant 0xFF800000 : f32
    %102 = vector.shape_cast %100 : vector<1x256xi1> to vector<1x256xi1>
    %103 = vector.broadcast %102 : vector<1x256xi1> to vector<8x256xi1>
    %104 = vector.broadcast %cst_28 : f32 to vector<8x256xf32>
    %105 = arith.select %103, %101, %104 : vector<8x256xi1>, vector<8x256xf32>
    %106 = arith.maximumf %98, %105 : vector<8x256xf32>
    %c2_i32_29 = arith.constant 2 : i32
    %107 = vector.broadcast %c2_i32_29 : i32 to vector<1x256xi32>
    %108 = arith.cmpi sge, %18, %107 : vector<1x256xi32>
    %c2_i32_30 = arith.constant 2 : i32
    %109 = tpu.dynamic_rotate %82 by %c2_i32_30 dim 1 : vector<8x256xf32>, i32 -> vector<8x256xf32>
    %cst_31 = arith.constant 0xFF800000 : f32
    %110 = vector.shape_cast %108 : vector<1x256xi1> to vector<1x256xi1>
    %111 = vector.broadcast %110 : vector<1x256xi1> to vector<8x256xi1>
    %112 = vector.broadcast %cst_31 : f32 to vector<8x256xf32>
    %113 = arith.select %111, %109, %112 : vector<8x256xi1>, vector<8x256xf32>
    %114 = arith.maximumf %106, %113 : vector<8x256xf32>
    %c240_i32_32 = arith.constant 240 : i32
    %115 = vector.broadcast %c240_i32_32 : i32 to vector<1x256xi32>
    %116 = arith.cmpi slt, %2, %115 : vector<1x256xi32>
    %c240_i32_33 = arith.constant 240 : i32
    %117 = tpu.dynamic_rotate %114 by %c240_i32_33 dim 1 : vector<8x256xf32>, i32 -> vector<8x256xf32>
    %cst_34 = arith.constant 0xFF800000 : f32
    %118 = vector.shape_cast %116 : vector<1x256xi1> to vector<1x256xi1>
    %119 = vector.broadcast %118 : vector<1x256xi1> to vector<8x256xi1>
    %120 = vector.broadcast %cst_34 : f32 to vector<8x256xf32>
    %121 = arith.select %119, %117, %120 : vector<8x256xi1>, vector<8x256xf32>
    %122 = arith.maximumf %114, %121 : vector<8x256xf32>
    %c16_i32_35 = arith.constant 16 : i32
    %123 = vector.broadcast %c16_i32_35 : i32 to vector<1x256xi32>
    %124 = arith.cmpi sge, %2, %123 : vector<1x256xi32>
    %c16_i32_36 = arith.constant 16 : i32
    %125 = tpu.dynamic_rotate %114 by %c16_i32_36 dim 1 : vector<8x256xf32>, i32 -> vector<8x256xf32>
    %cst_37 = arith.constant 0xFF800000 : f32
    %126 = vector.shape_cast %124 : vector<1x256xi1> to vector<1x256xi1>
    %127 = vector.broadcast %126 : vector<1x256xi1> to vector<8x256xi1>
    %128 = vector.broadcast %cst_37 : f32 to vector<8x256xf32>
    %129 = arith.select %127, %125, %128 : vector<8x256xi1>, vector<8x256xf32>
    %130 = arith.maximumf %122, %129 : vector<8x256xf32>
    %c224_i32_38 = arith.constant 224 : i32
    %131 = vector.broadcast %c224_i32_38 : i32 to vector<1x256xi32>
    %132 = arith.cmpi slt, %2, %131 : vector<1x256xi32>
    %c224_i32_39 = arith.constant 224 : i32
    %133 = tpu.dynamic_rotate %114 by %c224_i32_39 dim 1 : vector<8x256xf32>, i32 -> vector<8x256xf32>
    %cst_40 = arith.constant 0xFF800000 : f32
    %134 = vector.shape_cast %132 : vector<1x256xi1> to vector<1x256xi1>
    %135 = vector.broadcast %134 : vector<1x256xi1> to vector<8x256xi1>
    %136 = vector.broadcast %cst_40 : f32 to vector<8x256xf32>
    %137 = arith.select %135, %133, %136 : vector<8x256xi1>, vector<8x256xf32>
    %138 = arith.maximumf %130, %137 : vector<8x256xf32>
    %c32_i32_41 = arith.constant 32 : i32
    %139 = vector.broadcast %c32_i32_41 : i32 to vector<1x256xi32>
    %140 = arith.cmpi sge, %2, %139 : vector<1x256xi32>
    %c32_i32_42 = arith.constant 32 : i32
    %141 = tpu.dynamic_rotate %114 by %c32_i32_42 dim 1 : vector<8x256xf32>, i32 -> vector<8x256xf32>
    %cst_43 = arith.constant 0xFF800000 : f32
    %142 = vector.shape_cast %140 : vector<1x256xi1> to vector<1x256xi1>
    %143 = vector.broadcast %142 : vector<1x256xi1> to vector<8x256xi1>
    %144 = vector.broadcast %cst_43 : f32 to vector<8x256xf32>
    %145 = arith.select %143, %141, %144 : vector<8x256xi1>, vector<8x256xf32>
    %146 = arith.maximumf %138, %145 : vector<8x256xf32>
    %c15_i32_44 = arith.constant 15 : i32
    %147 = vector.broadcast %c15_i32_44 : i32 to vector<1x256xi32>
    %148 = arith.cmpi slt, %18, %147 : vector<1x256xi32>
    %c255_i32_45 = arith.constant 255 : i32
    %149 = tpu.dynamic_rotate %146 by %c255_i32_45 dim 1 : vector<8x256xf32>, i32 -> vector<8x256xf32>
    %cst_46 = arith.constant 0xFF800000 : f32
    %150 = vector.shape_cast %148 : vector<1x256xi1> to vector<1x256xi1>
    %151 = vector.broadcast %150 : vector<1x256xi1> to vector<8x256xi1>
    %152 = vector.broadcast %cst_46 : f32 to vector<8x256xf32>
    %153 = arith.select %151, %149, %152 : vector<8x256xi1>, vector<8x256xf32>
    %154 = arith.maximumf %146, %153 : vector<8x256xf32>
    %c1_i32_47 = arith.constant 1 : i32
    %155 = vector.broadcast %c1_i32_47 : i32 to vector<1x256xi32>
    %156 = arith.cmpi sge, %18, %155 : vector<1x256xi32>
    %c1_i32_48 = arith.constant 1 : i32
    %157 = tpu.dynamic_rotate %146 by %c1_i32_48 dim 1 : vector<8x256xf32>, i32 -> vector<8x256xf32>
    %cst_49 = arith.constant 0xFF800000 : f32
    %158 = vector.shape_cast %156 : vector<1x256xi1> to vector<1x256xi1>
    %159 = vector.broadcast %158 : vector<1x256xi1> to vector<8x256xi1>
    %160 = vector.broadcast %cst_49 : f32 to vector<8x256xf32>
    %161 = arith.select %159, %157, %160 : vector<8x256xi1>, vector<8x256xf32>
    %162 = arith.maximumf %154, %161 : vector<8x256xf32>
    %c14_i32_50 = arith.constant 14 : i32
    %163 = vector.broadcast %c14_i32_50 : i32 to vector<1x256xi32>
    %164 = arith.cmpi slt, %18, %163 : vector<1x256xi32>
    %c254_i32_51 = arith.constant 254 : i32
    %165 = tpu.dynamic_rotate %146 by %c254_i32_51 dim 1 : vector<8x256xf32>, i32 -> vector<8x256xf32>
    %cst_52 = arith.constant 0xFF800000 : f32
    %166 = vector.shape_cast %164 : vector<1x256xi1> to vector<1x256xi1>
    %167 = vector.broadcast %166 : vector<1x256xi1> to vector<8x256xi1>
    %168 = vector.broadcast %cst_52 : f32 to vector<8x256xf32>
    %169 = arith.select %167, %165, %168 : vector<8x256xi1>, vector<8x256xf32>
    %170 = arith.maximumf %162, %169 : vector<8x256xf32>
    %c2_i32_53 = arith.constant 2 : i32
    %171 = vector.broadcast %c2_i32_53 : i32 to vector<1x256xi32>
    %172 = arith.cmpi sge, %18, %171 : vector<1x256xi32>
    %c2_i32_54 = arith.constant 2 : i32
    %173 = tpu.dynamic_rotate %146 by %c2_i32_54 dim 1 : vector<8x256xf32>, i32 -> vector<8x256xf32>
    %cst_55 = arith.constant 0xFF800000 : f32
    %174 = vector.shape_cast %172 : vector<1x256xi1> to vector<1x256xi1>
    %175 = vector.broadcast %174 : vector<1x256xi1> to vector<8x256xi1>
    %176 = vector.broadcast %cst_55 : f32 to vector<8x256xf32>
    %177 = arith.select %175, %173, %176 : vector<8x256xi1>, vector<8x256xf32>
    %178 = arith.maximumf %170, %177 : vector<8x256xf32>
    %c240_i32_56 = arith.constant 240 : i32
    %179 = vector.broadcast %c240_i32_56 : i32 to vector<1x256xi32>
    %180 = arith.cmpi slt, %2, %179 : vector<1x256xi32>
    %c240_i32_57 = arith.constant 240 : i32
    %181 = tpu.dynamic_rotate %178 by %c240_i32_57 dim 1 : vector<8x256xf32>, i32 -> vector<8x256xf32>
    %cst_58 = arith.constant 0xFF800000 : f32
    %182 = vector.shape_cast %180 : vector<1x256xi1> to vector<1x256xi1>
    %183 = vector.broadcast %182 : vector<1x256xi1> to vector<8x256xi1>
    %184 = vector.broadcast %cst_58 : f32 to vector<8x256xf32>
    %185 = arith.select %183, %181, %184 : vector<8x256xi1>, vector<8x256xf32>
    %186 = arith.maximumf %178, %185 : vector<8x256xf32>
    %c16_i32_59 = arith.constant 16 : i32
    %187 = vector.broadcast %c16_i32_59 : i32 to vector<1x256xi32>
    %188 = arith.cmpi sge, %2, %187 : vector<1x256xi32>
    %c16_i32_60 = arith.constant 16 : i32
    %189 = tpu.dynamic_rotate %178 by %c16_i32_60 dim 1 : vector<8x256xf32>, i32 -> vector<8x256xf32>
    %cst_61 = arith.constant 0xFF800000 : f32
    %190 = vector.shape_cast %188 : vector<1x256xi1> to vector<1x256xi1>
    %191 = vector.broadcast %190 : vector<1x256xi1> to vector<8x256xi1>
    %192 = vector.broadcast %cst_61 : f32 to vector<8x256xf32>
    %193 = arith.select %191, %189, %192 : vector<8x256xi1>, vector<8x256xf32>
    %194 = arith.maximumf %186, %193 : vector<8x256xf32>
    %c224_i32_62 = arith.constant 224 : i32
    %195 = vector.broadcast %c224_i32_62 : i32 to vector<1x256xi32>
    %196 = arith.cmpi slt, %2, %195 : vector<1x256xi32>
    %c224_i32_63 = arith.constant 224 : i32
    %197 = tpu.dynamic_rotate %178 by %c224_i32_63 dim 1 : vector<8x256xf32>, i32 -> vector<8x256xf32>
    %cst_64 = arith.constant 0xFF800000 : f32
    %198 = vector.shape_cast %196 : vector<1x256xi1> to vector<1x256xi1>
    %199 = vector.broadcast %198 : vector<1x256xi1> to vector<8x256xi1>
    %200 = vector.broadcast %cst_64 : f32 to vector<8x256xf32>
    %201 = arith.select %199, %197, %200 : vector<8x256xi1>, vector<8x256xf32>
    %202 = arith.maximumf %194, %201 : vector<8x256xf32>
    %c32_i32_65 = arith.constant 32 : i32
    %203 = vector.broadcast %c32_i32_65 : i32 to vector<1x256xi32>
    %204 = arith.cmpi sge, %2, %203 : vector<1x256xi32>
    %c32_i32_66 = arith.constant 32 : i32
    %205 = tpu.dynamic_rotate %178 by %c32_i32_66 dim 1 : vector<8x256xf32>, i32 -> vector<8x256xf32>
    %cst_67 = arith.constant 0xFF800000 : f32
    %206 = vector.shape_cast %204 : vector<1x256xi1> to vector<1x256xi1>
    %207 = vector.broadcast %206 : vector<1x256xi1> to vector<8x256xi1>
    %208 = vector.broadcast %cst_67 : f32 to vector<8x256xf32>
    %209 = arith.select %207, %205, %208 : vector<8x256xi1>, vector<8x256xf32>
    %210 = arith.maximumf %202, %209 : vector<8x256xf32>
    %c0_68 = arith.constant 0 : index
    %c0_69 = arith.constant 0 : index
    %c0_70 = arith.constant 0 : index
    %211 = vector.load %arg3[%c0_68, %c0_69, %c0_70] : memref<1x8x256xf32, #tpu.memory_space<vmem>>, vector<1x8x256xf32>
    %212 = vector.shape_cast %211 : vector<1x8x256xf32> to vector<8x256xf32>
    %213 = vector.shape_cast %82 : vector<8x256xf32> to vector<1x8x256xf32>
    tpu.vector_store %arg3[%c0_68, %c0_69, %c0_70], %213 {strides = array<i32>} : memref<1x8x256xf32, #tpu.memory_space<vmem>>, vector<1x8x256xf32>,
    %c0_71 = arith.constant 0 : index
    %c0_72 = arith.constant 0 : index
    %c0_73 = arith.constant 0 : index
    %214 = vector.load %arg4[%c0_71, %c0_72, %c0_73] : memref<1x8x256xf32, #tpu.memory_space<vmem>>, vector<1x8x256xf32>
    %215 = vector.shape_cast %214 : vector<1x8x256xf32> to vector<8x256xf32>
    %216 = vector.shape_cast %146 : vector<8x256xf32> to vector<1x8x256xf32>
    tpu.vector_store %arg4[%c0_71, %c0_72, %c0_73], %216 {strides = array<i32>} : memref<1x8x256xf32, #tpu.memory_space<vmem>>, vector<1x8x256xf32>,
    %c0_74 = arith.constant 0 : index
    %c0_75 = arith.constant 0 : index
    %c0_76 = arith.constant 0 : index
    %217 = vector.load %arg5[%c0_74, %c0_75, %c0_76] : memref<1x8x256xf32, #tpu.memory_space<vmem>>, vector<1x8x256xf32>
    %218 = vector.shape_cast %217 : vector<1x8x256xf32> to vector<8x256xf32>
    %219 = vector.shape_cast %210 : vector<8x256xf32> to vector<1x8x256xf32>
    tpu.vector_store %arg5[%c0_74, %c0_75, %c0_76], %219 {strides = array<i32>} : memref<1x8x256xf32, #tpu.memory_space<vmem>>, vector<1x8x256xf32>,
    return
  }
  func.func @transform_0(%arg0: i32, %arg1: i32) -> (i32, i32, i32) {
    %c0_i32 = arith.constant 0 : i32
    %c0_i32_0 = arith.constant 0 : i32
    return %arg0, %arg1, %c0_i32 : i32, i32, i32
  }
  func.func @transform_1(%arg0: i32, %arg1: i32) -> (i32, i32, i32) {
    %c0_i32 = arith.constant 0 : i32
    %c0_i32_0 = arith.constant 0 : i32
    return %arg0, %arg1, %c0_i32 : i32, i32, i32
  }
  func.func @transform_2(%arg0: i32, %arg1: i32) -> (i32, i32, i32) {
    %c0_i32 = arith.constant 0 : i32
    %c0_i32_0 = arith.constant 0 : i32
    return %arg0, %arg1, %c0_i32 : i32, i32, i32
  }
  func.func @transform_3(%arg0: i32, %arg1: i32) -> (i32, i32, i32) {
    %c0_i32 = arith.constant 0 : i32
    %c0_i32_0 = arith.constant 0 : i32
    return %arg0, %arg1, %c0_i32 : i32, i32, i32
  }
}

module attributes {stable_mosaic.version = 11 : i64} {
  func.func @kernel(%arg0: i32, %arg1: i32, %arg2: memref<1x8x256xf32, #tpu.memory_space<vmem>>, %arg3: memref<1x8x256xf32, #tpu.memory_space<vmem>>, %arg4: memref<8x8xf32, #tpu.memory_space<vmem>>, %arg5: memref<8x8xf32, #tpu.memory_space<vmem>>, %arg6: memref<8x1xf32, #tpu.memory_space<vmem>>, %arg7: memref<1x8x256xf32, #tpu.memory_space<vmem>>) attributes {dimension_semantics = [#tpu.dimension_semantics<parallel>, #tpu.dimension_semantics<parallel>], iteration_bounds = array<i64: 2, 1>, scalar_prefetch = 0 : i64, scratch_operands = 0 : i64, tpu.core_type = #tpu.core_type<tc>, window_params = [{transform_indices = @transform_0, window_bounds = array<i64: 1, 8, 256>}, {transform_indices = @transform_1, window_bounds = array<i64: 1, 8, 256>}, {pipeline_mode = #tpu.pipeline_mode<synchronous>, transform_indices = @transform_2, window_bounds = array<i64: 8, 8>}, {pipeline_mode = #tpu.pipeline_mode<synchronous>, transform_indices = @transform_3, window_bounds = array<i64: 8, 8>}, {pipeline_mode = #tpu.pipeline_mode<synchronous>, transform_indices = @transform_4, window_bounds = array<i64: 8, 1>}, {transform_indices = @transform_5, window_bounds = array<i64: 1, 8, 256>}]} {
    %c0 = arith.constant 0 : index
    %c0_0 = arith.constant 0 : index
    %0 = vector.load %arg4[%c0, %c0_0] : memref<8x8xf32, #tpu.memory_space<vmem>>, vector<8x8xf32>
    %c0_1 = arith.constant 0 : index
    %c0_2 = arith.constant 0 : index
    %c0_3 = arith.constant 0 : index
    %1 = vector.load %arg2[%c0_1, %c0_2, %c0_3] : memref<1x8x256xf32, #tpu.memory_space<vmem>>, vector<1x8x256xf32>
    %2 = vector.shape_cast %1 : vector<1x8x256xf32> to vector<8x256xf32>
    %cst = arith.constant dense<0.000000e+00> : vector<8x256xf32>
    %3 = tpu.matmul %0, %2, %cst {dimension_numbers = #tpu.dot_dimension_numbers<[1], [0], [0], [1], [0, 0, 1, 1], [], []>} : vector<8x8xf32>, vector<8x256xf32>, vector<8x256xf32> -> vector<8x256xf32>
    %c0_4 = arith.constant 0 : index
    %c0_5 = arith.constant 0 : index
    %4 = vector.load %arg5[%c0_4, %c0_5] : memref<8x8xf32, #tpu.memory_space<vmem>>, vector<8x8xf32>
    %c0_6 = arith.constant 0 : index
    %c0_7 = arith.constant 0 : index
    %c0_8 = arith.constant 0 : index
    %5 = vector.load %arg3[%c0_6, %c0_7, %c0_8] : memref<1x8x256xf32, #tpu.memory_space<vmem>>, vector<1x8x256xf32>
    %6 = vector.shape_cast %5 : vector<1x8x256xf32> to vector<8x256xf32>
    %cst_9 = arith.constant dense<0.000000e+00> : vector<8x256xf32>
    %7 = tpu.matmul %4, %6, %cst_9 {dimension_numbers = #tpu.dot_dimension_numbers<[1], [0], [0], [1], [0, 0, 1, 1], [], []>} : vector<8x8xf32>, vector<8x256xf32>, vector<8x256xf32> -> vector<8x256xf32>
    %8 = arith.addf %3, %7 : vector<8x256xf32>
    %c0_10 = arith.constant 0 : index
    %c0_11 = arith.constant 0 : index
    %9 = vector.load %arg6[%c0_10, %c0_11] : memref<8x1xf32, #tpu.memory_space<vmem>>, vector<8x1xf32>
    %10 = vector.broadcast %9 : vector<8x1xf32> to vector<8x256xf32>
    %11 = arith.addf %8, %10 : vector<8x256xf32>
    %cst_12 = arith.constant 0.000000e+00 : f32
    %12 = vector.broadcast %cst_12 : f32 to vector<8x256xf32>
    %13 = arith.subf %12, %11 : vector<8x256xf32>
    %14 = math.exp %13 : vector<8x256xf32>
    %cst_13 = arith.constant 1.000000e+00 : f32
    %15 = vector.broadcast %cst_13 : f32 to vector<8x256xf32>
    %16 = arith.addf %15, %14 : vector<8x256xf32>
    %17 = tpu.reciprocal %16 {approx = true} : vector<8x256xf32> -> vector<8x256xf32>
    %18 = arith.mulf %11, %17 : vector<8x256xf32>
    %c0_14 = arith.constant 0 : index
    %c0_15 = arith.constant 0 : index
    %c0_16 = arith.constant 0 : index
    %19 = vector.load %arg7[%c0_14, %c0_15, %c0_16] : memref<1x8x256xf32, #tpu.memory_space<vmem>>, vector<1x8x256xf32>
    %20 = vector.shape_cast %19 : vector<1x8x256xf32> to vector<8x256xf32>
    %21 = vector.shape_cast %18 : vector<8x256xf32> to vector<1x8x256xf32>
    tpu.vector_store %arg7[%c0_14, %c0_15, %c0_16], %21 {strides = array<i32>} : memref<1x8x256xf32, #tpu.memory_space<vmem>>, vector<1x8x256xf32>,
    return
  }
  func.func @transform_0(%arg0: i32, %arg1: i32) -> (i32, i32, i32) {
    %c0_i32 = arith.constant 0 : i32
    %c0_i32_0 = arith.constant 0 : i32
    return %arg0, %c0_i32, %arg1 : i32, i32, i32
  }
  func.func @transform_1(%arg0: i32, %arg1: i32) -> (i32, i32, i32) {
    %c0_i32 = arith.constant 0 : i32
    %c0_i32_0 = arith.constant 0 : i32
    return %arg0, %c0_i32, %arg1 : i32, i32, i32
  }
  func.func @transform_2(%arg0: i32, %arg1: i32) -> (i32, i32) {
    %c0_i32 = arith.constant 0 : i32
    %c0_i32_0 = arith.constant 0 : i32
    %c0_i32_1 = arith.constant 0 : i32
    return %c0_i32, %c0_i32_0 : i32, i32
  }
  func.func @transform_3(%arg0: i32, %arg1: i32) -> (i32, i32) {
    %c0_i32 = arith.constant 0 : i32
    %c0_i32_0 = arith.constant 0 : i32
    %c0_i32_1 = arith.constant 0 : i32
    return %c0_i32, %c0_i32_0 : i32, i32
  }
  func.func @transform_4(%arg0: i32, %arg1: i32) -> (i32, i32) {
    %c0_i32 = arith.constant 0 : i32
    %c0_i32_0 = arith.constant 0 : i32
    %c0_i32_1 = arith.constant 0 : i32
    return %c0_i32, %c0_i32_0 : i32, i32
  }
  func.func @transform_5(%arg0: i32, %arg1: i32) -> (i32, i32, i32) {
    %c0_i32 = arith.constant 0 : i32
    %c0_i32_0 = arith.constant 0 : i32
    return %arg0, %c0_i32, %arg1 : i32, i32, i32
  }
}

</mosaic_0001>

<llo_original>
// kernel: sppelan_forward.6
$region0: #{sppelan_forward.6}
  #allocation0 [shape = 'u32[]', space=smem, size = 0x4, offset = 0x4, fixed_abs, tag = 'smem constant byte address 0x4 - core index']
  #allocation1 [shape = 'u32[144,128]{1,0:T(1,128)}', space=vmem, size = 0x12000, scoped, tag = 'internal scratch']
  %s0 = inlined_call_operand.vmem [shape: f32[2,8,256], index: 0, kind: input, shape index: {}]
  %s1 = inlined_call_operand.vmem [shape: f32[2,8,256], index: 1, kind: input, shape index: {}]
  %s2 = inlined_call_operand.vmem [shape: f32[2,8,256], index: 2, kind: input, shape index: {}]
  %s3 = inlined_call_operand.vmem [shape: f32[2,8,256], index: 3, kind: input, shape index: {}]
  %s4 = inlined_call_operand.vmem [shape: f32[8,8], index: 4, kind: input, shape index: {}]
  %s5 = inlined_call_operand.vmem [shape: f32[8,8], index: 5, kind: input, shape index: {}]
  %s6 = inlined_call_operand.vmem [shape: f32[8,8], index: 6, kind: input, shape index: {}]
  %s7 = inlined_call_operand.vmem [shape: f32[8,8], index: 7, kind: input, shape index: {}]
  %s8 = inlined_call_operand.vmem [shape: f32[8,1], index: 8, kind: input, shape index: {}]
  %s9 = inlined_call_operand.vmem [shape: f32[2,8,256], index: 9, kind: output, shape index: {}]
  %s10 = sld [smem:[#allocation0]]
  $region69: #{sppelan_forward.6} parent=0
    _
  %s12 = ssub.s32 1, %s10
  %s13 = scalar_select 0, %s12, %s10
  loop: start=0, step=1, limit=4
  $region2: #{sppelan_forward.6} parent=0 // loop_pre_header
    _
  $region3: #{sppelan_forward.6} parent=0 // loop_header
    %s15 = sphi 0, %s19
    %p16 = scmp.ge.s32.totalorder %s15, 4
    %s22 = sphi 0, %s34
    %s23 = sphi 0, %s30
    %s24 = sphi 0, %s22
    %s25 = sphi 0, %s23
    %s26 = sphi 0, %s24
    %s27 = sphi 0, %s25
    %s39 = sphi 0, %s41
    %s42 = sphi 0, %s39
    %s43 = sphi 0, %s42
    %s59 = sphi 0, %s43
    %s67 = sphi 0, %s69
    %s70 = sphi 0, %s67
    %s71 = sphi 0, %s70
    %s87 = sphi 0, %s71
    %s95 = sphi 0, %s97
    %s98 = sphi 0, %s95
    %s99 = sphi 0, %s98
    %s115 = sphi 0, %s99
    %s123 = sphi 0, %s125
    %s126 = sphi 0, %s123
    %s127 = sphi 0, %s126
    %s143 = sphi 0, %s127
    %s147 = sphi 0, %s147
    %s149 = sphi 0, %s147
    %s150 = sphi 0, %s149
    %s164 = sphi 0, %s150
    %s168 = sphi 0, %s168
    %s170 = sphi 0, %s168
    %s171 = sphi 0, %s170
    %s185 = sphi 0, %s171
    %s189 = sphi 0, %s189
    %s191 = sphi 0, %s189
    %s192 = sphi 0, %s191
    %s206 = sphi 0, %s192
    %s210 = sphi 0, %s210
    %s212 = sphi 0, %s210
    %s213 = sphi 0, %s212
    %s227 = sphi 0, %s213
    %s231 = sphi 0, %s231
    %s233 = sphi 0, %s231
    %s234 = sphi 0, %s233
    %s248 = sphi 0, %s234
    %s256 = sphi 0, %s258
    %s259 = sphi 0, %s256
    %s260 = sphi 0, %s259
    %s276 = sphi 0, %s260
  $region4: #{sppelan_forward.6} parent=0 // loop_header_branch
    %18 = sbr.rel (%p16) target = $region8
  $region5: #{sppelan_forward.6} parent=0 // loop_body
    %s20 = ssub.s32 %s15, 1
    %s21 = ssub.s32 %s15, 2
    %s28 = sadd.s32 1, %s23
    %p29 = scmp.ge.s32.totalorder %s28, 1
    %s30 = scalar_select %p29, 0, %s28
    %s31 = sadd.s32 1, %s22
    %s32 = scalar_select %p29, %s31, %s22
    %p33 = scmp.ge.s32.totalorder %s32, 2
    %s34 = scalar_select %p33, 0, %s32
    %s35 = ssub.s32 %s22, %s34
    %s36 = ssub.s32 %s23, %s30
    %s37 = sor.u32 %s35, %s36
    %p38 = scmp.eq.s32.totalorder %s37, 0
    %s40 = sadd.s32 %s39, 1
    %s41 = scalar_select %p38, %s39, %s40
    %p44 = pneg %p38
    %p45 = scmp.eq.s32.totalorder %s15, 1
    %p46 = por %p44, %p45
    %p47 = scmp.ne.s32.totalorder %s39, %s42
    %p48 = scmp.eq.s32.totalorder %s15, 0
    %p49 = por %p47, %p48
    %p50 = scmp.ne.s32.totalorder %s39, %s42
    %p51 = scmp.eq.s32.totalorder %s20, 1
    %p52 = por %p50, %p51
    %p53 = scmp.ne.s32.totalorder %s42, %s43
    %p54 = scmp.eq.s32.totalorder %s20, 0
    %p55 = por %p53, %p54
    %p56 = scmp.ne.s32.totalorder %s42, %s43
    %p57 = scmp.eq.s32.totalorder %s21, 1
    %p58 = por %p56, %p57
    %p60 = scmp.ne.s32.totalorder %s43, %s59
    %p61 = scmp.eq.s32.totalorder %s21, 0
    %p62 = por %p60, %p61
    %s63 = ssub.s32 %s22, %s34
    %s64 = ssub.s32 %s23, %s30
    %s65 = sor.u32 %s63, %s64
    %p66 = scmp.eq.s32.totalorder %s65, 0
    %s68 = sadd.s32 %s67, 1
    %s69 = scalar_select %p66, %s67, %s68
    %p72 = pneg %p66
    %p73 = scmp.eq.s32.totalorder %s15, 1
    %p74 = por %p72, %p73
    %p75 = scmp.ne.s32.totalorder %s67, %s70
    %p76 = scmp.eq.s32.totalorder %s15, 0
    %p77 = por %p75, %p76
    %p78 = scmp.ne.s32.totalorder %s67, %s70
    %p79 = scmp.eq.s32.totalorder %s20, 1
    %p80 = por %p78, %p79
    %p81 = scmp.ne.s32.totalorder %s70, %s71
    %p82 = scmp.eq.s32.totalorder %s20, 0
    %p83 = por %p81, %p82
    %p84 = scmp.ne.s32.totalorder %s70, %s71
    %p85 = scmp.eq.s32.totalorder %s21, 1
    %p86 = por %p84, %p85
    %p88 = scmp.ne.s32.totalorder %s71, %s87
    %p89 = scmp.eq.s32.totalorder %s21, 0
    %p90 = por %p88, %p89
    %s91 = ssub.s32 %s22, %s34
    %s92 = ssub.s32 %s23, %s30
    %s93 = sor.u32 %s91, %s92
    %p94 = scmp.eq.s32.totalorder %s93, 0
    %s96 = sadd.s32 %s95, 1
    %s97 = scalar_select %p94, %s95, %s96
    %p100 = pneg %p94
    %p101 = scmp.eq.s32.totalorder %s15, 1
    %p102 = por %p100, %p101
    %p103 = scmp.ne.s32.totalorder %s95, %s98
    %p104 = scmp.eq.s32.totalorder %s15, 0
    %p105 = por %p103, %p104
    %p106 = scmp.ne.s32.totalorder %s95, %s98
    %p107 = scmp.eq.s32.totalorder %s20, 1
    %p108 = por %p106, %p107
    %p109 = scmp.ne.s32.totalorder %s98, %s99
    %p110 = scmp.eq.s32.totalorder %s20, 0
    %p111 = por %p109, %p110
    %p112 = scmp.ne.s32.totalorder %s98, %s99
    %p113 = scmp.eq.s32.totalorder %s21, 1
    %p114 = por %p112, %p113
    %p116 = scmp.ne.s32.totalorder %s99, %s115
    %p117 = scmp.eq.s32.totalorder %s21, 0
    %p118 = por %p116, %p117
    %s119 = ssub.s32 %s22, %s34
    %s120 = ssub.s32 %s23, %s30
    %s121 = sor.u32 %s119, %s120
    %p122 = scmp.eq.s32.totalorder %s121, 0
    %s124 = sadd.s32 %s123, 1
    %s125 = scalar_select %p122, %s123, %s124
    %p128 = pneg %p122
    %p129 = scmp.eq.s32.totalorder %s15, 1
    %p130 = por %p128, %p129
    %p131 = scmp.ne.s32.totalorder %s123, %s126
    %p132 = scmp.eq.s32.totalorder %s15, 0
    %p133 = por %p131, %p132
    %p134 = scmp.ne.s32.totalorder %s123, %s126
    %p135 = scmp.eq.s32.totalorder %s20, 1
    %p136 = por %p134, %p135
    %p137 = scmp.ne.s32.totalorder %s126, %s127
    %p138 = scmp.eq.s32.totalorder %s20, 0
    %p139 = por %p137, %p138
    %p140 = scmp.ne.s32.totalorder %s126, %s127
    %p141 = scmp.eq.s32.totalorder %s21, 1
    %p142 = por %p140, %p141
    %p144 = scmp.ne.s32.totalorder %s127, %s143
    %p145 = scmp.eq.s32.totalorder %s21, 0
    %p146 = por %p144, %p145
    %s148 = sadd.s32 %s147, 1
    %p151 = scmp.eq.s32.totalorder %s15, 1
    %p152 = scmp.ne.s32.totalorder %s147, %s149
    %p153 = scmp.eq.s32.totalorder %s15, 0
    %p154 = por %p152, %p153
    %p155 = scmp.ne.s32.totalorder %s147, %s149
    %p156 = scmp.eq.s32.totalorder %s20, 1
    %p157 = por %p155, %p156
    %p158 = scmp.ne.s32.totalorder %s149, %s150
    %p159 = scmp.eq.s32.totalorder %s20, 0
    %p160 = por %p158, %p159
    %p161 = scmp.ne.s32.totalorder %s149, %s150
    %p162 = scmp.eq.s32.totalorder %s21, 1
    %p163 = por %p161, %p162
    %p165 = scmp.ne.s32.totalorder %s150, %s164
    %p166 = scmp.eq.s32.totalorder %s21, 0
    %p167 = por %p165, %p166
    %s169 = sadd.s32 %s168, 1
    %p172 = scmp.eq.s32.totalorder %s15, 1
    %p173 = scmp.ne.s32.totalorder %s168, %s170
    %p174 = scmp.eq.s32.totalorder %s15, 0
    %p175 = por %p173, %p174
    %p176 = scmp.ne.s32.totalorder %s168, %s170
    %p177 = scmp.eq.s32.totalorder %s20, 1
    %p178 = por %p176, %p177
    %p179 = scmp.ne.s32.totalorder %s170, %s171
    %p180 = scmp.eq.s32.totalorder %s20, 0
    %p181 = por %p179, %p180
    %p182 = scmp.ne.s32.totalorder %s170, %s171
    %p183 = scmp.eq.s32.totalorder %s21, 1
    %p184 = por %p182, %p183
    %p186 = scmp.ne.s32.totalorder %s171, %s185
    %p187 = scmp.eq.s32.totalorder %s21, 0
    %p188 = por %p186, %p187
    %s190 = sadd.s32 %s189, 1
    %p193 = scmp.eq.s32.totalorder %s15, 1
    %p194 = scmp.ne.s32.totalorder %s189, %s191
    %p195 = scmp.eq.s32.totalorder %s15, 0
    %p196 = por %p194, %p195
    %p197 = scmp.ne.s32.totalorder %s189, %s191
    %p198 = scmp.eq.s32.totalorder %s20, 1
    %p199 = por %p197, %p198
    %p200 = scmp.ne.s32.totalorder %s191, %s192
    %p201 = scmp.eq.s32.totalorder %s20, 0
    %p202 = por %p200, %p201
    %p203 = scmp.ne.s32.totalorder %s191, %s192
    %p204 = scmp.eq.s32.totalorder %s21, 1
    %p205 = por %p203, %p204
    %p207 = scmp.ne.s32.totalorder %s192, %s206
    %p208 = scmp.eq.s32.totalorder %s21, 0
    %p209 = por %p207, %p208
    %s211 = sadd.s32 %s210, 1
    %p214 = scmp.eq.s32.totalorder %s15, 1
    %p215 = scmp.ne.s32.totalorder %s210, %s212
    %p216 = scmp.eq.s32.totalorder %s15, 0
    %p217 = por %p215, %p216
    %p218 = scmp.ne.s32.totalorder %s210, %s212
    %p219 = scmp.eq.s32.totalorder %s20, 1
    %p220 = por %p218, %p219
    %p221 = scmp.ne.s32.totalorder %s212, %s213
    %p222 = scmp.eq.s32.totalorder %s20, 0
    %p223 = por %p221, %p222
    %p224 = scmp.ne.s32.totalorder %s212, %s213
    %p225 = scmp.eq.s32.totalorder %s21, 1
    %p226 = por %p224, %p225
    %p228 = scmp.ne.s32.totalorder %s213, %s227
    %p229 = scmp.eq.s32.totalorder %s21, 0
    %p230 = por %p228, %p229
    %s232 = sadd.s32 %s231, 1
    %p235 = scmp.eq.s32.totalorder %s15, 1
    %p236 = scmp.ne.s32.totalorder %s231, %s233
    %p237 = scmp.eq.s32.totalorder %s15, 0
    %p238 = por %p236, %p237
    %p239 = scmp.ne.s32.totalorder %s231, %s233
    %p240 = scmp.eq.s32.totalorder %s20, 1
    %p241 = por %p239, %p240
    %p242 = scmp.ne.s32.totalorder %s233, %s234
    %p243 = scmp.eq.s32.totalorder %s20, 0
    %p244 = por %p242, %p243
    %p245 = scmp.ne.s32.totalorder %s233, %s234
    %p246 = scmp.eq.s32.totalorder %s21, 1
    %p247 = por %p245, %p246
    %p249 = scmp.ne.s32.totalorder %s234, %s248
    %p250 = scmp.eq.s32.totalorder %s21, 0
    %p251 = por %p249, %p250
    %s252 = ssub.s32 %s22, %s34
    %s253 = ssub.s32 %s23, %s30
    %s254 = sor.u32 %s252, %s253
    %p255 = scmp.eq.s32.totalorder %s254, 0
    %s257 = sadd.s32 %s256, 1
    %s258 = scalar_select %p255, %s256, %s257
    %p261 = pneg %p255
    %p262 = scmp.eq.s32.totalorder %s15, 1
    %p263 = por %p261, %p262
    %p264 = scmp.ne.s32.totalorder %s256, %s259
    %p265 = scmp.eq.s32.totalorder %s15, 0
    %p266 = por %p264, %p265
    %p267 = scmp.ne.s32.totalorder %s256, %s259
    %p268 = scmp.eq.s32.totalorder %s20, 1
    %p269 = por %p267, %p268
    %p270 = scmp.ne.s32.totalorder %s259, %s260
    %p271 = scmp.eq.s32.totalorder %s20, 0
    %p272 = por %p270, %p271
    %p273 = scmp.ne.s32.totalorder %s259, %s260
    %p274 = scmp.eq.s32.totalorder %s21, 1
    %p275 = por %p273, %p274
    %p277 = scmp.ne.s32.totalorder %s260, %s276
    %p278 = scmp.eq.s32.totalorder %s21, 0
    %p279 = por %p277, %p278
    %p280 = scmp.le.s32.totalorder 1, %s15
    %p281 = scmp.lt.s32.totalorder %s15, 3
    %p282 = pnand %p280, %p281
    %p283 = pneg %p282
    // Predicated region
    $region9: #{sppelan_forward.6} parent=5 // pred_check
      _
    $region10: #{sppelan_forward.6} parent=5 // pred_check_branch
      %285 = sbr.rel (%p282) target = $region12
    $region11: #{sppelan_forward.6} parent=5 // pred_region
      %s286 = ssub.s32 %s15, 1
      // Predicated region
      $region13: #{sppelan_forward.6} parent=11 // pred_check
        %p287 = pneg %p160
      $region14: #{sppelan_forward.6} parent=11 // pred_check_branch
        %289 = sbr.rel (%p287) target = $region16
      $region15: #{sppelan_forward.6} parent=11 // pred_region
        _
      $region16: #{sppelan_forward.6} parent=11 // pred_fallthru
        _
      // Predicated region
      $region17: #{sppelan_forward.6} parent=11 // pred_check
        %p290 = pneg %p181
      $region18: #{sppelan_forward.6} parent=11 // pred_check_branch
        %292 = sbr.rel (%p290) target = $region20
      $region19: #{sppelan_forward.6} parent=11 // pred_region
        _
      $region20: #{sppelan_forward.6} parent=11 // pred_fallthru
        _
      // Predicated region
      $region21: #{sppelan_forward.6} parent=11 // pred_check
        %p293 = pneg %p202
      $region22: #{sppelan_forward.6} parent=11 // pred_check_branch
        %295 = sbr.rel (%p293) target = $region24
      $region23: #{sppelan_forward.6} parent=11 // pred_region
        _
      $region24: #{sppelan_forward.6} parent=11 // pred_fallthru
        _
      // Predicated region
      $region25: #{sppelan_forward.6} parent=11 // pred_check
        %p296 = pneg %p223
      $region26: #{sppelan_forward.6} parent=11 // pred_check_branch
        %298 = sbr.rel (%p296) target = $region28
      $region27: #{sppelan_forward.6} parent=11 // pred_region
        _
      $region28: #{sppelan_forward.6} parent=11 // pred_fallthru
        _
      // Predicated region
      $region29: #{sppelan_forward.6} parent=11 // pred_check
        %p299 = pneg %p244
      $region30: #{sppelan_forward.6} parent=11 // pred_check_branch
        %301 = sbr.rel (%p299) target = $region32
      $region31: #{sppelan_forward.6} parent=11 // pred_region
        _
      $region32: #{sppelan_forward.6} parent=11 // pred_fallthru
        _
    $region12: #{sppelan_forward.6} parent=5 // pred_fallthru
      _
    %p302 = scmp.lt.s32.totalorder %s15, 2
    // Predicated region
    $region33: #{sppelan_forward.6} parent=5 // pred_check
      %p303 = pneg %p302
    $region34: #{sppelan_forward.6} parent=5 // pred_check_branch
      %305 = sbr.rel (%p303) target = $region36
    $region35: #{sppelan_forward.6} parent=5 // pred_region
      // Predicated region
      $region37: #{sppelan_forward.6} parent=35 // pred_check
        %p306 = pneg %p49
      $region38: #{sppelan_forward.6} parent=35 // pred_check_branch
        %308 = sbr.rel (%p306) target = $region40
      $region39: #{sppelan_forward.6} parent=35 // pred_region
        %s309 = smul.u32 2, %s23
        %p310 = scmp.lt.s32.totalorder %s22, 1
        %s311 = scalar_select %p310, %s22, 1
        %p312 = scmp.lt.s32.totalorder %s309, 1
        %s313 = scalar_select %p312, %s309, 1
        %s314 = smul.addr %s311, 2
        %s315 = sadd.s32 %s313, %s314
        %s316 = smul.addr %s315, 8
        %s317 = scalar_lea.vmem %s0, %s316
        %s318 = smul.u32 2, %s23
      $region40: #{sppelan_forward.6} parent=35 // pred_fallthru
        _
      // Predicated region
      $region41: #{sppelan_forward.6} parent=35 // pred_check
        %p319 = pneg %p77
      $region42: #{sppelan_forward.6} parent=35 // pred_check_branch
        %321 = sbr.rel (%p319) target = $region44
      $region43: #{sppelan_forward.6} parent=35 // pred_region
        %s322 = smul.u32 2, %s23
        %p323 = scmp.lt.s32.totalorder %s22, 1
        %s324 = scalar_select %p323, %s22, 1
        %p325 = scmp.lt.s32.totalorder %s322, 1
        %s326 = scalar_select %p325, %s322, 1
        %s327 = smul.addr %s324, 2
        %s328 = sadd.s32 %s326, %s327
        %s329 = smul.addr %s328, 8
        %s330 = scalar_lea.vmem %s1, %s329
        %s331 = smul.u32 2, %s23
      $region44: #{sppelan_forward.6} parent=35 // pred_fallthru
        _
      // Predicated region
      $region45: #{sppelan_forward.6} parent=35 // pred_check
        %p332 = pneg %p105
      $region46: #{sppelan_forward.6} parent=35 // pred_check_branch
        %334 = sbr.rel (%p332) target = $region48
      $region47: #{sppelan_forward.6} parent=35 // pred_region
        %s335 = smul.u32 2, %s23
        %p336 = scmp.lt.s32.totalorder %s22, 1
        %s337 = scalar_select %p336, %s22, 1
        %p338 = scmp.lt.s32.totalorder %s335, 1
        %s339 = scalar_select %p338, %s335, 1
        %s340 = smul.addr %s337, 2
        %s341 = sadd.s32 %s339, %s340
        %s342 = smul.addr %s341, 8
        %s343 = scalar_lea.vmem %s2, %s342
        %s344 = smul.u32 2, %s23
      $region48: #{sppelan_forward.6} parent=35 // pred_fallthru
        _
      // Predicated region
      $region49: #{sppelan_forward.6} parent=35 // pred_check
        %p345 = pneg %p133
      $region50: #{sppelan_forward.6} parent=35 // pred_check_branch
        %347 = sbr.rel (%p345) target = $region52
      $region51: #{sppelan_forward.6} parent=35 // pred_region
        %s348 = smul.u32 2, %s23
        %p349 = scmp.lt.s32.totalorder %s22, 1
        %s350 = scalar_select %p349, %s22, 1
        %p351 = scmp.lt.s32.totalorder %s348, 1
        %s352 = scalar_select %p351, %s348, 1
        %s353 = smul.addr %s350, 2
        %s354 = sadd.s32 %s352, %s353
        %s355 = smul.addr %s354, 8
        %s356 = scalar_lea.vmem %s3, %s355
        %s357 = smul.u32 2, %s23
      $region52: #{sppelan_forward.6} parent=35 // pred_fallthru
        _
    $region36: #{sppelan_forward.6} parent=5 // pred_fallthru
      _
    %p358 = scmp.le.s32.totalorder 1, %s15
    %p359 = scmp.lt.s32.totalorder %s15, 3
    %p360 = pnand %p358, %p359
    %p361 = pneg %p360
    // Predicated region
    $region53: #{sppelan_forward.6} parent=5 // pred_check
      _
    $region54: #{sppelan_forward.6} parent=5 // pred_check_branch
      %363 = sbr.rel (%p360) target = $region56
    $region55: #{sppelan_forward.6} parent=5 // pred_region
      %s364 = ssub.s32 %s15, 1
      %s365 = smul.u32 2, %s25
      %p366 = scmp.lt.s32.totalorder %s24, 1
      %s367 = scalar_select %p366, %s24, 1
      %p368 = scmp.lt.s32.totalorder %s365, 1
      %s369 = scalar_select %p368, %s365, 1
      %s370 = smul.addr %s367, 2
      %s371 = sadd.s32 %s369, %s370
      %s372 = smul.addr %s371, 8
      %s373 = scalar_lea.vmem %s0, %s372
      %p374 = pneg %p55
      %p375 = pneg %p52
      %s376 = smul.u32 2, %s25
      %p377 = scmp.lt.s32.totalorder %s24, 1
      %s378 = scalar_select %p377, %s24, 1
      %p379 = scmp.lt.s32.totalorder %s376, 1
      %s380 = scalar_select %p379, %s376, 1
      %s381 = smul.addr %s378, 2
      %s382 = sadd.s32 %s380, %s381
      %s383 = smul.addr %s382, 8
      %s384 = scalar_lea.vmem %s1, %s383
      %p385 = pneg %p83
      %p386 = pneg %p80
      %s387 = smul.u32 2, %s25
      %p388 = scmp.lt.s32.totalorder %s24, 1
      %s389 = scalar_select %p388, %s24, 1
      %p390 = scmp.lt.s32.totalorder %s387, 1
      %s391 = scalar_select %p390, %s387, 1
      %s392 = smul.addr %s389, 2
      %s393 = sadd.s32 %s391, %s392
      %s394 = smul.addr %s393, 8
      %s395 = scalar_lea.vmem %s2, %s394
      %p396 = pneg %p111
      %p397 = pneg %p108
      %s398 = smul.u32 2, %s25
      %p399 = scmp.lt.s32.totalorder %s24, 1
      %s400 = scalar_select %p399, %s24, 1
      %p401 = scmp.lt.s32.totalorder %s398, 1
      %s402 = scalar_select %p401, %s398, 1
      %s403 = smul.addr %s400, 2
      %s404 = sadd.s32 %s402, %s403
      %s405 = smul.addr %s404, 8
      %s406 = scalar_lea.vmem %s3, %s405
      %p407 = pneg %p139
      %p408 = pneg %p136
      %p409 = pneg %p160
      %p410 = pneg %p157
      %p411 = pneg %p181
      %p412 = pneg %p178
      %p413 = pneg %p202
      %p414 = pneg %p199
      %p415 = pneg %p223
      %p416 = pneg %p220
      %p417 = pneg %p244
      %p418 = pneg %p241
      %p419 = pneg %p272
      %p420 = pneg %p269
      %s421 = smul.u32 2, %s25
      %p422 = scmp.lt.s32.totalorder %s24, 1
      %s423 = scalar_select %p422, %s24, 1
      %p424 = scmp.lt.s32.totalorder %s421, 1
      %s425 = scalar_select %p424, %s421, 1
      %s426 = smul.addr %s423, 2
      %s427 = sadd.s32 %s425, %s426
      %s428 = smul.addr %s427, 8
      %s429 = scalar_lea.vmem %s9, %s428
      %s430 = smul.u32 2, %s25
      %p431 = scmp.lt.s32.totalorder %s24, 1
      %s432 = scalar_select %p431, %s24, 1
      %p433 = scmp.lt.s32.totalorder %s430, 1
      %s434 = scalar_select %p433, %s430, 1
      %s435 = smul.addr %s432, 2
      %s436 = sadd.s32 %s434, %s435
      %s437 = smul.addr %s436, 8
      %s438 = scalar_lea.vmem %s0, %s437
      %s439 = smul.u32 2, %s25
      %s440 = smul.u32 2, %s25
      %p441 = scmp.lt.s32.totalorder %s24, 1
      %s442 = scalar_select %p441, %s24, 1
      %p443 = scmp.lt.s32.totalorder %s440, 1
      %s444 = scalar_select %p443, %s440, 1
      %s445 = smul.addr %s442, 2
      %s446 = sadd.s32 %s444, %s445
      %s447 = smul.addr %s446, 8
      %s448 = scalar_lea.vmem %s1, %s447
      %s449 = smul.u32 2, %s25
      %s450 = smul.u32 2, %s25
      %p451 = scmp.lt.s32.totalorder %s24, 1
      %s452 = scalar_select %p451, %s24, 1
      %p453 = scmp.lt.s32.totalorder %s450, 1
      %s454 = scalar_select %p453, %s450, 1
      %s455 = smul.addr %s452, 2
      %s456 = sadd.s32 %s454, %s455
      %s457 = smul.addr %s456, 8
      %s458 = scalar_lea.vmem %s2, %s457
      %s459 = smul.u32 2, %s25
      %s460 = smul.u32 2, %s25
      %p461 = scmp.lt.s32.totalorder %s24, 1
      %s462 = scalar_select %p461, %s24, 1
      %p463 = scmp.lt.s32.totalorder %s460, 1
      %s464 = scalar_select %p463, %s460, 1
      %s465 = smul.addr %s462, 2
      %s466 = sadd.s32 %s464, %s465
      %s467 = smul.addr %s466, 8
      %s468 = scalar_lea.vmem %s3, %s467
      %s469 = smul.u32 2, %s25
      %s470 = smul.u32 2, %s25
      %p471 = scmp.lt.s32.totalorder %s24, 1
      %s472 = scalar_select %p471, %s24, 1
      %p473 = scmp.lt.s32.totalorder %s470, 1
      %s474 = scalar_select %p473, %s470, 1
      %s475 = smul.addr %s472, 2
      %s476 = sadd.s32 %s474, %s475
      %s477 = smul.addr %s476, 8
      %s478 = scalar_lea.vmem %s9, %s477
      %s479 = smul.u32 2, %s25
      %v480 = vld [vmem:[%s4] sm:$0xff]
      %v481 = vld [vmem:[%s438] sm:$0xff]
      %v482 = vld [vmem:[%s438 + $0x8] sm:$0xff]
      %v483 = vld [vmem:[%s5] sm:$0xff]
      %v484 = vld [vmem:[%s448] sm:$0xff]
      %v485 = vld [vmem:[%s448 + $0x8] sm:$0xff]
      %vm486 = vcmask 64512
      %v488 = vsel %vm486, %v483, 0
      %490 = vmatprep.subr.mxu0 0.0
      %491 = vmatpush1.msra.mxu0 0.0
      %492 = vmatprep.subr.mxu0 0.0
      %493 = vmatpush1.msra.mxu0 0.0
      %494 = vmatprep.subr.mxu0 0.0
      %495 = vmatpush1.msra.mxu0 0.0
      %496 = vmatprep.subr.mxu0 0.0
      %497 = vmatpush1.msra.mxu0 0.0
      %498 = vmatprep.subr.mxu0 0.0
      %499 = vmatpush1.msra.mxu0 0.0
      %500 = vmatprep.subr.mxu0 0.0
      %501 = vmatpush1.msra.mxu0 0.0
      %502 = vmatprep.subr.mxu0 0.0
      %503 = vmatpush1.msra.mxu0 0.0
      %504 = vmatprep.subr.mxu0 0.0
      %505 = vmatpush1.msra.mxu0 0.0
      %506 = vmatprep.subr.mxu0 0.0
      %507 = vmatpush1.msra.mxu0 0.0
      %508 = vmatprep.subr.mxu0 0.0
      %509 = vmatpush1.msra.mxu0 0.0
      %510 = vmatprep.subr.mxu0 0.0
      %511 = vmatpush1.msra.mxu0 0.0
      %512 = vmatprep.subr.mxu0 0.0
      %513 = vmatpush1.msra.mxu0 0.0
      %514 = vmatprep.subr.mxu0 0.0
      %515 = vmatpush1.msra.mxu0 0.0
      %516 = vmatprep.subr.mxu0 0.0
      %517 = vmatpush1.msra.mxu0 0.0
      %518 = vmatprep.subr.mxu0 0.0
      %519 = vmatpush1.msra.mxu0 0.0
      %520 = vmatprep.subr.mxu0 %v485
      %521 = vmatpush1.msra.mxu0 %v484
      %522 = vmatprep.subr.mxu0 0.0
      %523 = vmatpush2.msra.mxu0 0.0
      %524 = vmatprep.subr.mxu0 0.0
      %525 = vmatpush2.msra.mxu0 0.0
      %526 = vmatprep.subr.mxu0 0.0
      %527 = vmatpush2.msra.mxu0 0.0
      %528 = vmatprep.subr.mxu0 0.0
      %529 = vmatpush2.msra.mxu0 0.0
      %530 = vmatprep.subr.mxu0 0.0
      %531 = vmatpush2.msra.mxu0 0.0
      %532 = vmatprep.subr.mxu0 0.0
      %533 = vmatpush2.msra.mxu0 0.0
      %534 = vmatprep.subr.mxu0 0.0
      %535 = vmatpush2.msra.mxu0 0.0
      %536 = vmatprep.subr.mxu0 0.0
      %537 = vmatpush2.msra.mxu0 0.0
      %538 = vmatprep.subr.mxu0 0.0
      %539 = vmatpush2.msra.mxu0 0.0
      %540 = vmatprep.subr.mxu0 0.0
      %541 = vmatpush2.msra.mxu0 0.0
      %542 = vmatprep.subr.mxu0 0.0
      %543 = vmatpush2.msra.mxu0 0.0
      %544 = vmatprep.subr.mxu0 0.0
      %545 = vmatpush2.msra.mxu0 0.0
      %546 = vmatprep.subr.mxu0 0.0
      %547 = vmatpush2.msra.mxu0 0.0
      %548 = vmatprep.subr.mxu0 0.0
      %549 = vmatpush2.msra.mxu0 0.0
      %550 = vmatprep.subr.mxu0 0.0
      %551 = vmatpush2.msra.mxu0 0.0
      %552 = vmatprep.subr.mxu0 0.0
      %553 = vmatpush2.msra.mxu0 0.0
      %554 = vmatprep.mubr.f32.mxu0 0.0
      %555 = vmatmul.mubr.f32.gmra.mxu0 %v488
      %v556 = vpop.f32.mrf.mxu0
      %v557 = vadd.f32 0.0, %v556
      %v558 = vpop.f32.mrf.mxu0
      %v559 = vadd.f32 0.0, %v558
      %560 = vdwg.mxu0
      %v562 = vsel %vm486, %v480, 0
      %564 = vmatprep.subr.mxu0 0.0
      %565 = vmatpush1.msra.mxu0 0.0
      %566 = vmatprep.subr.mxu0 0.0
      %567 = vmatpush1.msra.mxu0 0.0
      %568 = vmatprep.subr.mxu0 0.0
      %569 = vmatpush1.msra.mxu0 0.0
      %570 = vmatprep.subr.mxu0 0.0
      %571 = vmatpush1.msra.mxu0 0.0
      %572 = vmatprep.subr.mxu0 0.0
      %573 = vmatpush1.msra.mxu0 0.0
      %574 = vmatprep.subr.mxu0 0.0
      %575 = vmatpush1.msra.mxu0 0.0
      %576 = vmatprep.subr.mxu0 0.0
      %577 = vmatpush1.msra.mxu0 0.0
      %578 = vmatprep.subr.mxu0 0.0
      %579 = vmatpush1.msra.mxu0 0.0
      %580 = vmatprep.subr.mxu0 0.0
      %581 = vmatpush1.msra.mxu0 0.0
      %582 = vmatprep.subr.mxu0 0.0
      %583 = vmatpush1.msra.mxu0 0.0
      %584 = vmatprep.subr.mxu0 0.0
      %585 = vmatpush1.msra.mxu0 0.0
      %586 = vmatprep.subr.mxu0 0.0
      %587 = vmatpush1.msra.mxu0 0.0
      %588 = vmatprep.subr.mxu0 0.0
      %589 = vmatpush1.msra.mxu0 0.0
      %590 = vmatprep.subr.mxu0 0.0
      %591 = vmatpush1.msra.mxu0 0.0
      %592 = vmatprep.subr.mxu0 0.0
      %593 = vmatpush1.msra.mxu0 0.0
      %594 = vmatprep.subr.mxu0 %v482
      %595 = vmatpush1.msra.mxu0 %v481
      %596 = vmatprep.subr.mxu0 0.0
      %597 = vmatpush2.msra.mxu0 0.0
      %598 = vmatprep.subr.mxu0 0.0
      %599 = vmatpush2.msra.mxu0 0.0
      %600 = vmatprep.subr.mxu0 0.0
      %601 = vmatpush2.msra.mxu0 0.0
      %602 = vmatprep.subr.mxu0 0.0
      %603 = vmatpush2.msra.mxu0 0.0
      %604 = vmatprep.subr.mxu0 0.0
      %605 = vmatpush2.msra.mxu0 0.0
      %606 = vmatprep.subr.mxu0 0.0
      %607 = vmatpush2.msra.mxu0 0.0
      %608 = vmatprep.subr.mxu0 0.0
      %609 = vmatpush2.msra.mxu0 0.0
      %610 = vmatprep.subr.mxu0 0.0
      %611 = vmatpush2.msra.mxu0 0.0
      %612 = vmatprep.subr.mxu0 0.0
      %613 = vmatpush2.msra.mxu0 0.0
      %614 = vmatprep.subr.mxu0 0.0
      %615 = vmatpush2.msra.mxu0 0.0
      %616 = vmatprep.subr.mxu0 0.0
      %617 = vmatpush2.msra.mxu0 0.0
      %618 = vmatprep.subr.mxu0 0.0
      %619 = vmatpush2.msra.mxu0 0.0
      %620 = vmatprep.subr.mxu0 0.0
      %621 = vmatpush2.msra.mxu0 0.0
      %622 = vmatprep.subr.mxu0 0.0
      %623 = vmatpush2.msra.mxu0 0.0
      %624 = vmatprep.subr.mxu0 0.0
      %625 = vmatpush2.msra.mxu0 0.0
      %626 = vmatprep.subr.mxu0 0.0
      %627 = vmatpush2.msra.mxu0 0.0
      %628 = vmatprep.mubr.f32.mxu0 0.0
      %629 = vmatmul.mubr.f32.gmra.mxu0 %v562
      %v630 = vpop.f32.mrf.mxu0
      %v631 = vadd.f32 %v557, %v630
      %v632 = vpop.f32.mrf.mxu0
      %v633 = vadd.f32 %v559, %v632
      %634 = vdwg.mxu0
      %v635 = vld [vmem:[%s6] sm:$0xff]
      %v636 = vld [vmem:[%s458] sm:$0xff]
      %v637 = vld [vmem:[%s458 + $0x8] sm:$0xff]
      %v639 = vsel %vm486, %v635, 0
      %641 = vmatprep.subr.mxu0 0.0
      %642 = vmatpush1.msra.mxu0 0.0
      %643 = vmatprep.subr.mxu0 0.0
      %644 = vmatpush1.msra.mxu0 0.0
      %645 = vmatprep.subr.mxu0 0.0
      %646 = vmatpush1.msra.mxu0 0.0
      %647 = vmatprep.subr.mxu0 0.0
      %648 = vmatpush1.msra.mxu0 0.0
      %649 = vmatprep.subr.mxu0 0.0
      %650 = vmatpush1.msra.mxu0 0.0
      %651 = vmatprep.subr.mxu0 0.0
      %652 = vmatpush1.msra.mxu0 0.0
      %653 = vmatprep.subr.mxu0 0.0
      %654 = vmatpush1.msra.mxu0 0.0
      %655 = vmatprep.subr.mxu0 0.0
      %656 = vmatpush1.msra.mxu0 0.0
      %657 = vmatprep.subr.mxu0 0.0
      %658 = vmatpush1.msra.mxu0 0.0
      %659 = vmatprep.subr.mxu0 0.0
      %660 = vmatpush1.msra.mxu0 0.0
      %661 = vmatprep.subr.mxu0 0.0
      %662 = vmatpush1.msra.mxu0 0.0
      %663 = vmatprep.subr.mxu0 0.0
      %664 = vmatpush1.msra.mxu0 0.0
      %665 = vmatprep.subr.mxu0 0.0
      %666 = vmatpush1.msra.mxu0 0.0
      %667 = vmatprep.subr.mxu0 0.0
      %668 = vmatpush1.msra.mxu0 0.0
      %669 = vmatprep.subr.mxu0 0.0
      %670 = vmatpush1.msra.mxu0 0.0
      %671 = vmatprep.subr.mxu0 %v637
      %672 = vmatpush1.msra.mxu0 %v636
      %673 = vmatprep.subr.mxu0 0.0
      %674 = vmatpush2.msra.mxu0 0.0
      %675 = vmatprep.subr.mxu0 0.0
      %676 = vmatpush2.msra.mxu0 0.0
      %677 = vmatprep.subr.mxu0 0.0
      %678 = vmatpush2.msra.mxu0 0.0
      %679 = vmatprep.subr.mxu0 0.0
      %680 = vmatpush2.msra.mxu0 0.0
      %681 = vmatprep.subr.mxu0 0.0
      %682 = vmatpush2.msra.mxu0 0.0
      %683 = vmatprep.subr.mxu0 0.0
      %684 = vmatpush2.msra.mxu0 0.0
      %685 = vmatprep.subr.mxu0 0.0
      %686 = vmatpush2.msra.mxu0 0.0
      %687 = vmatprep.subr.mxu0 0.0
      %688 = vmatpush2.msra.mxu0 0.0
      %689 = vmatprep.subr.mxu0 0.0
      %690 = vmatpush2.msra.mxu0 0.0
      %691 = vmatprep.subr.mxu0 0.0
      %692 = vmatpush2.msra.mxu0 0.0
      %693 = vmatprep.subr.mxu0 0.0
      %694 = vmatpush2.msra.mxu0 0.0
      %695 = vmatprep.subr.mxu0 0.0
      %696 = vmatpush2.msra.mxu0 0.0
      %697 = vmatprep.subr.mxu0 0.0
      %698 = vmatpush2.msra.mxu0 0.0
      %699 = vmatprep.subr.mxu0 0.0
      %700 = vmatpush2.msra.mxu0 0.0
      %701 = vmatprep.subr.mxu0 0.0
      %702 = vmatpush2.msra.mxu0 0.0
      %703 = vmatprep.subr.mxu0 0.0
      %704 = vmatpush2.msra.mxu0 0.0
      %705 = vmatprep.mubr.f32.mxu0 0.0
      %706 = vmatmul.mubr.f32.gmra.mxu0 %v639
      %v707 = vpop.f32.mrf.mxu0
      %v708 = vadd.f32 0.0, %v707
      %v709 = vpop.f32.mrf.mxu0
      %v710 = vadd.f32 0.0, %v709
      %711 = vdwg.mxu0
      %v712 = vadd.f32 %v631, %v708
      %v713 = vadd.f32 %v633, %v710
      %v714 = vld [vmem:[%s7] sm:$0xff]
      %v715 = vld [vmem:[%s468] sm:$0xff]
      %v716 = vld [vmem:[%s468 + $0x8] sm:$0xff]
      %v718 = vsel %vm486, %v714, 0
      %720 = vmatprep.subr.mxu0 0.0
      %721 = vmatpush1.msra.mxu0 0.0
      %722 = vmatprep.subr.mxu0 0.0
      %723 = vmatpush1.msra.mxu0 0.0
      %724 = vmatprep.subr.mxu0 0.0
      %725 = vmatpush1.msra.mxu0 0.0
      %726 = vmatprep.subr.mxu0 0.0
      %727 = vmatpush1.msra.mxu0 0.0
      %728 = vmatprep.subr.mxu0 0.0
      %729 = vmatpush1.msra.mxu0 0.0
      %730 = vmatprep.subr.mxu0 0.0
      %731 = vmatpush1.msra.mxu0 0.0
      %732 = vmatprep.subr.mxu0 0.0
      %733 = vmatpush1.msra.mxu0 0.0
      %734 = vmatprep.subr.mxu0 0.0
      %735 = vmatpush1.msra.mxu0 0.0
      %736 = vmatprep.subr.mxu0 0.0
      %737 = vmatpush1.msra.mxu0 0.0
      %738 = vmatprep.subr.mxu0 0.0
      %739 = vmatpush1.msra.mxu0 0.0
      %740 = vmatprep.subr.mxu0 0.0
      %741 = vmatpush1.msra.mxu0 0.0
      %742 = vmatprep.subr.mxu0 0.0
      %743 = vmatpush1.msra.mxu0 0.0
      %744 = vmatprep.subr.mxu0 0.0
      %745 = vmatpush1.msra.mxu0 0.0
      %746 = vmatprep.subr.mxu0 0.0
      %747 = vmatpush1.msra.mxu0 0.0
      %748 = vmatprep.subr.mxu0 0.0
      %749 = vmatpush1.msra.mxu0 0.0
      %750 = vmatprep.subr.mxu0 %v716
      %751 = vmatpush1.msra.mxu0 %v715
      %752 = vmatprep.subr.mxu0 0.0
      %753 = vmatpush2.msra.mxu0 0.0
      %754 = vmatprep.subr.mxu0 0.0
      %755 = vmatpush2.msra.mxu0 0.0
      %756 = vmatprep.subr.mxu0 0.0
      %757 = vmatpush2.msra.mxu0 0.0
      %758 = vmatprep.subr.mxu0 0.0
      %759 = vmatpush2.msra.mxu0 0.0
      %760 = vmatprep.subr.mxu0 0.0
      %761 = vmatpush2.msra.mxu0 0.0
      %762 = vmatprep.subr.mxu0 0.0
      %763 = vmatpush2.msra.mxu0 0.0
      %764 = vmatprep.subr.mxu0 0.0
      %765 = vmatpush2.msra.mxu0 0.0
      %766 = vmatprep.subr.mxu0 0.0
      %767 = vmatpush2.msra.mxu0 0.0
      %768 = vmatprep.subr.mxu0 0.0
      %769 = vmatpush2.msra.mxu0 0.0
      %770 = vmatprep.subr.mxu0 0.0
      %771 = vmatpush2.msra.mxu0 0.0
      %772 = vmatprep.subr.mxu0 0.0
      %773 = vmatpush2.msra.mxu0 0.0
      %774 = vmatprep.subr.mxu0 0.0
      %775 = vmatpush2.msra.mxu0 0.0
      %776 = vmatprep.subr.mxu0 0.0
      %777 = vmatpush2.msra.mxu0 0.0
      %778 = vmatprep.subr.mxu0 0.0
      %779 = vmatpush2.msra.mxu0 0.0
      %780 = vmatprep.subr.mxu0 0.0
      %781 = vmatpush2.msra.mxu0 0.0
      %782 = vmatprep.subr.mxu0 0.0
      %783 = vmatpush2.msra.mxu0 0.0
      %784 = vmatprep.mubr.f32.mxu0 0.0
      %785 = vmatmul.mubr.f32.gmra.mxu0 %v718
      %v786 = vpop.f32.mrf.mxu0
      %v787 = vadd.f32 0.0, %v786
      %v788 = vpop.f32.mrf.mxu0
      %v789 = vadd.f32 0.0, %v788
      %790 = vdwg.mxu0
      %v791 = vadd.f32 %v712, %v787
      %v792 = vadd.f32 %v713, %v789
      %v793 = vld [vmem:[%s8] sm:$0xff]
      %795 = vset.pattern.permute.xlu0 0
      %796 = vperm.xlu0 %795, %v793
      %v797 = vpop.permute.xlu0 %796
      %v799 = vadd.f32 %v791, %v797
      %v800 = vadd.f32 %v792, %v797
      %v801 = vsub.f32 0.0, %v799
      %v802 = vsub.f32 0.0, %v800
      %v803 = vmul.f32 %v801, 1.442695
      %v804 = vpow.pop %v803
      %v805 = vmul.f32 %v802, 1.442695
      %v806 = vpow.pop %v805
      %v807 = vadd.f32 %v804, 1.0
      %v808 = vadd.f32 %v806, 1.0
      %v809 = vrcp.pop %v807
      %v810 = vrcp.pop %v808
      %v811 = vmul.f32 %v799, %v809
      %v812 = vmul.f32 %v800, %v810
      %813 = vst [vmem:[%s478] sm:$0xff] %v811
      %814 = vst [vmem:[%s478 + $0x8] sm:$0xff] %v812
      %s815 = smul.u32 2, %s25
      %p816 = scmp.lt.s32.totalorder %s24, 1
      %s817 = scalar_select %p816, %s24, 1
      %p818 = scmp.lt.s32.totalorder %s815, 1
      %s819 = scalar_select %p818, %s815, 1
      %s820 = smul.addr %s817, 2
      %s821 = sadd.s32 %s819, %s820
      %s822 = smul.addr %s821, 8
      %s823 = scalar_lea.vmem %s9, %s822
      // Predicated region
      $region57: #{sppelan_forward.6} parent=55 // pred_check
        %p824 = pneg %p269
      $region58: #{sppelan_forward.6} parent=55 // pred_check_branch
        %826 = sbr.rel (%p824) target = $region60
      $region59: #{sppelan_forward.6} parent=55 // pred_region
        %s827 = smul.u32 2, %s25
      $region60: #{sppelan_forward.6} parent=55 // pred_fallthru
        _
    $region56: #{sppelan_forward.6} parent=5 // pred_fallthru
      _
    %p828 = scmp.le.s32.totalorder 2, %s15
    // Predicated region
    $region61: #{sppelan_forward.6} parent=5 // pred_check
      %p829 = pneg %p828
    $region62: #{sppelan_forward.6} parent=5 // pred_check_branch
      %831 = sbr.rel (%p829) target = $region64
    $region63: #{sppelan_forward.6} parent=5 // pred_region
      %s832 = ssub.s32 %s15, 2
      // Predicated region
      $region65: #{sppelan_forward.6} parent=63 // pred_check
        %p833 = pneg %p275
      $region66: #{sppelan_forward.6} parent=63 // pred_check_branch
        %835 = sbr.rel (%p833) target = $region68
      $region67: #{sppelan_forward.6} parent=63 // pred_region
        %s836 = smul.u32 2, %s27
        %p837 = scmp.lt.s32.totalorder %s26, 1
        %s838 = scalar_select %p837, %s26, 1
        %p839 = scmp.lt.s32.totalorder %s836, 1
        %s840 = scalar_select %p839, %s836, 1
        %s841 = smul.addr %s838, 2
        %s842 = sadd.s32 %s840, %s841
        %s843 = smul.addr %s842, 8
        %s844 = scalar_lea.vmem %s9, %s843
      $region68: #{sppelan_forward.6} parent=63 // pred_fallthru
        _
    $region64: #{sppelan_forward.6} parent=5 // pred_fallthru
      _
  $region6: #{sppelan_forward.6} parent=0 // loop_footer
    %s19 = sadd.s32 1, %s15
  $region7: #{sppelan_forward.6} parent=0 // loop_footer_branch
    %14 = sbr.rel target = $region3
  $region8: #{sppelan_forward.6} parent=0 // loop_exit
    _

// kernel: sppelan_forward.4
$region0: #{sppelan_forward.4}
  #allocation0 [shape = 'u32[]', space=smem, size = 0x4, offset = 0x4, fixed_abs, tag = 'smem constant byte address 0x4 - core index']
  #allocation1 [shape = 'u32[144,128]{1,0:T(1,128)}', space=vmem, size = 0x12000, scoped, tag = 'internal scratch']
  %s0 = inlined_call_operand.vmem [shape: f32[2,8,256], index: 0, kind: input, shape index: {}]
  %s1 = inlined_call_operand.vmem [shape: f32[8,8], index: 1, kind: input, shape index: {}]
  %s2 = inlined_call_operand.vmem [shape: f32[8,8], index: 2, kind: input, shape index: {}]
  %s3 = inlined_call_operand.vmem [shape: f32[8,1], index: 3, kind: input, shape index: {}]
  %s4 = inlined_call_operand.vmem [shape: f32[8,1], index: 4, kind: input, shape index: {}]
  %s5 = inlined_call_operand.vmem [shape: f32[2,8,256], index: 5, kind: output, shape index: {0}]
  %s6 = inlined_call_operand.vmem [shape: f32[2,8,256], index: 6, kind: output, shape index: {1}]
  %7 = xla_tuple %s5, %s6
  %s8 = sld [smem:[#allocation0]]
  $region61: #{sppelan_forward.4} parent=0
    _
  %s10 = ssub.s32 1, %s8
  %s11 = scalar_select 0, %s10, %s8
  loop: start=0, step=1, limit=4
  $region2: #{sppelan_forward.4} parent=0 // loop_pre_header
    _
  $region3: #{sppelan_forward.4} parent=0 // loop_header
    %s13 = sphi 0, %s17
    %p14 = scmp.ge.s32.totalorder %s13, 4
    %s20 = sphi 0, %s32
    %s21 = sphi 0, %s28
    %s22 = sphi 0, %s20
    %s23 = sphi 0, %s21
    %s24 = sphi 0, %s22
    %s25 = sphi 0, %s23
    %s37 = sphi 0, %s39
    %s40 = sphi 0, %s37
    %s41 = sphi 0, %s40
    %s57 = sphi 0, %s41
    %s61 = sphi 0, %s61
    %s63 = sphi 0, %s61
    %s64 = sphi 0, %s63
    %s78 = sphi 0, %s64
    %s82 = sphi 0, %s82
    %s84 = sphi 0, %s82
    %s85 = sphi 0, %s84
    %s99 = sphi 0, %s85
    %s103 = sphi 0, %s103
    %s105 = sphi 0, %s103
    %s106 = sphi 0, %s105
    %s120 = sphi 0, %s106
    %s124 = sphi 0, %s124
    %s126 = sphi 0, %s124
    %s127 = sphi 0, %s126
    %s141 = sphi 0, %s127
    %s149 = sphi 0, %s151
    %s152 = sphi 0, %s149
    %s153 = sphi 0, %s152
    %s169 = sphi 0, %s153
    %s177 = sphi 0, %s179
    %s180 = sphi 0, %s177
    %s181 = sphi 0, %s180
    %s197 = sphi 0, %s181
  $region4: #{sppelan_forward.4} parent=0 // loop_header_branch
    %16 = sbr.rel (%p14) target = $region8
  $region5: #{sppelan_forward.4} parent=0 // loop_body
    %s18 = ssub.s32 %s13, 1
    %s19 = ssub.s32 %s13, 2
    %s26 = sadd.s32 1, %s21
    %p27 = scmp.ge.s32.totalorder %s26, 1
    %s28 = scalar_select %p27, 0, %s26
    %s29 = sadd.s32 1, %s20
    %s30 = scalar_select %p27, %s29, %s20
    %p31 = scmp.ge.s32.totalorder %s30, 2
    %s32 = scalar_select %p31, 0, %s30
    %s33 = ssub.s32 %s20, %s32
    %s34 = ssub.s32 %s21, %s28
    %s35 = sor.u32 %s33, %s34
    %p36 = scmp.eq.s32.totalorder %s35, 0
    %s38 = sadd.s32 %s37, 1
    %s39 = scalar_select %p36, %s37, %s38
    %p42 = pneg %p36
    %p43 = scmp.eq.s32.totalorder %s13, 1
    %p44 = por %p42, %p43
    %p45 = scmp.ne.s32.totalorder %s37, %s40
    %p46 = scmp.eq.s32.totalorder %s13, 0
    %p47 = por %p45, %p46
    %p48 = scmp.ne.s32.totalorder %s37, %s40
    %p49 = scmp.eq.s32.totalorder %s18, 1
    %p50 = por %p48, %p49
    %p51 = scmp.ne.s32.totalorder %s40, %s41
    %p52 = scmp.eq.s32.totalorder %s18, 0
    %p53 = por %p51, %p52
    %p54 = scmp.ne.s32.totalorder %s40, %s41
    %p55 = scmp.eq.s32.totalorder %s19, 1
    %p56 = por %p54, %p55
    %p58 = scmp.ne.s32.totalorder %s41, %s57
    %p59 = scmp.eq.s32.totalorder %s19, 0
    %p60 = por %p58, %p59
    %s62 = sadd.s32 %s61, 1
    %p65 = scmp.eq.s32.totalorder %s13, 1
    %p66 = scmp.ne.s32.totalorder %s61, %s63
    %p67 = scmp.eq.s32.totalorder %s13, 0
    %p68 = por %p66, %p67
    %p69 = scmp.ne.s32.totalorder %s61, %s63
    %p70 = scmp.eq.s32.totalorder %s18, 1
    %p71 = por %p69, %p70
    %p72 = scmp.ne.s32.totalorder %s63, %s64
    %p73 = scmp.eq.s32.totalorder %s18, 0
    %p74 = por %p72, %p73
    %p75 = scmp.ne.s32.totalorder %s63, %s64
    %p76 = scmp.eq.s32.totalorder %s19, 1
    %p77 = por %p75, %p76
    %p79 = scmp.ne.s32.totalorder %s64, %s78
    %p80 = scmp.eq.s32.totalorder %s19, 0
    %p81 = por %p79, %p80
    %s83 = sadd.s32 %s82, 1
    %p86 = scmp.eq.s32.totalorder %s13, 1
    %p87 = scmp.ne.s32.totalorder %s82, %s84
    %p88 = scmp.eq.s32.totalorder %s13, 0
    %p89 = por %p87, %p88
    %p90 = scmp.ne.s32.totalorder %s82, %s84
    %p91 = scmp.eq.s32.totalorder %s18, 1
    %p92 = por %p90, %p91
    %p93 = scmp.ne.s32.totalorder %s84, %s85
    %p94 = scmp.eq.s32.totalorder %s18, 0
    %p95 = por %p93, %p94
    %p96 = scmp.ne.s32.totalorder %s84, %s85
    %p97 = scmp.eq.s32.totalorder %s19, 1
    %p98 = por %p96, %p97
    %p100 = scmp.ne.s32.totalorder %s85, %s99
    %p101 = scmp.eq.s32.totalorder %s19, 0
    %p102 = por %p100, %p101
    %s104 = sadd.s32 %s103, 1
    %p107 = scmp.eq.s32.totalorder %s13, 1
    %p108 = scmp.ne.s32.totalorder %s103, %s105
    %p109 = scmp.eq.s32.totalorder %s13, 0
    %p110 = por %p108, %p109
    %p111 = scmp.ne.s32.totalorder %s103, %s105
    %p112 = scmp.eq.s32.totalorder %s18, 1
    %p113 = por %p111, %p112
    %p114 = scmp.ne.s32.totalorder %s105, %s106
    %p115 = scmp.eq.s32.totalorder %s18, 0
    %p116 = por %p114, %p115
    %p117 = scmp.ne.s32.totalorder %s105, %s106
    %p118 = scmp.eq.s32.totalorder %s19, 1
    %p119 = por %p117, %p118
    %p121 = scmp.ne.s32.totalorder %s106, %s120
    %p122 = scmp.eq.s32.totalorder %s19, 0
    %p123 = por %p121, %p122
    %s125 = sadd.s32 %s124, 1
    %p128 = scmp.eq.s32.totalorder %s13, 1
    %p129 = scmp.ne.s32.totalorder %s124, %s126
    %p130 = scmp.eq.s32.totalorder %s13, 0
    %p131 = por %p129, %p130
    %p132 = scmp.ne.s32.totalorder %s124, %s126
    %p133 = scmp.eq.s32.totalorder %s18, 1
    %p134 = por %p132, %p133
    %p135 = scmp.ne.s32.totalorder %s126, %s127
    %p136 = scmp.eq.s32.totalorder %s18, 0
    %p137 = por %p135, %p136
    %p138 = scmp.ne.s32.totalorder %s126, %s127
    %p139 = scmp.eq.s32.totalorder %s19, 1
    %p140 = por %p138, %p139
    %p142 = scmp.ne.s32.totalorder %s127, %s141
    %p143 = scmp.eq.s32.totalorder %s19, 0
    %p144 = por %p142, %p143
    %s145 = ssub.s32 %s20, %s32
    %s146 = ssub.s32 %s21, %s28
    %s147 = sor.u32 %s145, %s146
    %p148 = scmp.eq.s32.totalorder %s147, 0
    %s150 = sadd.s32 %s149, 1
    %s151 = scalar_select %p148, %s149, %s150
    %p154 = pneg %p148
    %p155 = scmp.eq.s32.totalorder %s13, 1
    %p156 = por %p154, %p155
    %p157 = scmp.ne.s32.totalorder %s149, %s152
    %p158 = scmp.eq.s32.totalorder %s13, 0
    %p159 = por %p157, %p158
    %p160 = scmp.ne.s32.totalorder %s149, %s152
    %p161 = scmp.eq.s32.totalorder %s18, 1
    %p162 = por %p160, %p161
    %p163 = scmp.ne.s32.totalorder %s152, %s153
    %p164 = scmp.eq.s32.totalorder %s18, 0
    %p165 = por %p163, %p164
    %p166 = scmp.ne.s32.totalorder %s152, %s153
    %p167 = scmp.eq.s32.totalorder %s19, 1
    %p168 = por %p166, %p167
    %p170 = scmp.ne.s32.totalorder %s153, %s169
    %p171 = scmp.eq.s32.totalorder %s19, 0
    %p172 = por %p170, %p171
    %s173 = ssub.s32 %s20, %s32
    %s174 = ssub.s32 %s21, %s28
    %s175 = sor.u32 %s173, %s174
    %p176 = scmp.eq.s32.totalorder %s175, 0
    %s178 = sadd.s32 %s177, 1
    %s179 = scalar_select %p176, %s177, %s178
    %p182 = pneg %p176
    %p183 = scmp.eq.s32.totalorder %s13, 1
    %p184 = por %p182, %p183
    %p185 = scmp.ne.s32.totalorder %s177, %s180
    %p186 = scmp.eq.s32.totalorder %s13, 0
    %p187 = por %p185, %p186
    %p188 = scmp.ne.s32.totalorder %s177, %s180
    %p189 = scmp.eq.s32.totalorder %s18, 1
    %p190 = por %p188, %p189
    %p191 = scmp.ne.s32.totalorder %s180, %s181
    %p192 = scmp.eq.s32.totalorder %s18, 0
    %p193 = por %p191, %p192
    %p194 = scmp.ne.s32.totalorder %s180, %s181
    %p195 = scmp.eq.s32.totalorder %s19, 1
    %p196 = por %p194, %p195
    %p198 = scmp.ne.s32.totalorder %s181, %s197
    %p199 = scmp.eq.s32.totalorder %s19, 0
    %p200 = por %p198, %p199
    %p201 = scmp.le.s32.totalorder 1, %s13
    %p202 = scmp.lt.s32.totalorder %s13, 3
    %p203 = pnand %p201, %p202
    %p204 = pneg %p203
    // Predicated region
    $region9: #{sppelan_forward.4} parent=5 // pred_check
      _
    $region10: #{sppelan_forward.4} parent=5 // pred_check_branch
      %206 = sbr.rel (%p203) target = $region12
    $region11: #{sppelan_forward.4} parent=5 // pred_region
      %s207 = ssub.s32 %s13, 1
      // Predicated region
      $region13: #{sppelan_forward.4} parent=11 // pred_check
        %p208 = pneg %p74
      $region14: #{sppelan_forward.4} parent=11 // pred_check_branch
        %210 = sbr.rel (%p208) target = $region16
      $region15: #{sppelan_forward.4} parent=11 // pred_region
        _
      $region16: #{sppelan_forward.4} parent=11 // pred_fallthru
        _
      // Predicated region
      $region17: #{sppelan_forward.4} parent=11 // pred_check
        %p211 = pneg %p95
      $region18: #{sppelan_forward.4} parent=11 // pred_check_branch
        %213 = sbr.rel (%p211) target = $region20
      $region19: #{sppelan_forward.4} parent=11 // pred_region
        _
      $region20: #{sppelan_forward.4} parent=11 // pred_fallthru
        _
      // Predicated region
      $region21: #{sppelan_forward.4} parent=11 // pred_check
        %p214 = pneg %p116
      $region22: #{sppelan_forward.4} parent=11 // pred_check_branch
        %216 = sbr.rel (%p214) target = $region24
      $region23: #{sppelan_forward.4} parent=11 // pred_region
        _
      $region24: #{sppelan_forward.4} parent=11 // pred_fallthru
        _
      // Predicated region
      $region25: #{sppelan_forward.4} parent=11 // pred_check
        %p217 = pneg %p137
      $region26: #{sppelan_forward.4} parent=11 // pred_check_branch
        %219 = sbr.rel (%p217) target = $region28
      $region27: #{sppelan_forward.4} parent=11 // pred_region
        _
      $region28: #{sppelan_forward.4} parent=11 // pred_fallthru
        _
    $region12: #{sppelan_forward.4} parent=5 // pred_fallthru
      _
    %p220 = scmp.lt.s32.totalorder %s13, 2
    // Predicated region
    $region29: #{sppelan_forward.4} parent=5 // pred_check
      %p221 = pneg %p220
    $region30: #{sppelan_forward.4} parent=5 // pred_check_branch
      %223 = sbr.rel (%p221) target = $region32
    $region31: #{sppelan_forward.4} parent=5 // pred_region
      // Predicated region
      $region33: #{sppelan_forward.4} parent=31 // pred_check
        %p224 = pneg %p47
      $region34: #{sppelan_forward.4} parent=31 // pred_check_branch
        %226 = sbr.rel (%p224) target = $region36
      $region35: #{sppelan_forward.4} parent=31 // pred_region
        %s227 = smul.u32 2, %s21
        %p228 = scmp.lt.s32.totalorder %s20, 1
        %s229 = scalar_select %p228, %s20, 1
        %p230 = scmp.lt.s32.totalorder %s227, 1
        %s231 = scalar_select %p230, %s227, 1
        %s232 = smul.addr %s229, 2
        %s233 = sadd.s32 %s231, %s232
        %s234 = smul.addr %s233, 8
        %s235 = scalar_lea.vmem %s0, %s234
        %s236 = smul.u32 2, %s21
      $region36: #{sppelan_forward.4} parent=31 // pred_fallthru
        _
    $region32: #{sppelan_forward.4} parent=5 // pred_fallthru
      _
    %p237 = scmp.le.s32.totalorder 1, %s13
    %p238 = scmp.lt.s32.totalorder %s13, 3
    %p239 = pnand %p237, %p238
    %p240 = pneg %p239
    // Predicated region
    $region37: #{sppelan_forward.4} parent=5 // pred_check
      _
    $region38: #{sppelan_forward.4} parent=5 // pred_check_branch
      %242 = sbr.rel (%p239) target = $region40
    $region39: #{sppelan_forward.4} parent=5 // pred_region
      %s243 = ssub.s32 %s13, 1
      %s244 = smul.u32 2, %s23
      %p245 = scmp.lt.s32.totalorder %s22, 1
      %s246 = scalar_select %p245, %s22, 1
      %p247 = scmp.lt.s32.totalorder %s244, 1
      %s248 = scalar_select %p247, %s244, 1
      %s249 = smul.addr %s246, 2
      %s250 = sadd.s32 %s248, %s249
      %s251 = smul.addr %s250, 8
      %s252 = scalar_lea.vmem %s0, %s251
      %p253 = pneg %p53
      %p254 = pneg %p50
      %p255 = pneg %p74
      %p256 = pneg %p71
      %p257 = pneg %p95
      %p258 = pneg %p92
      %p259 = pneg %p116
      %p260 = pneg %p113
      %p261 = pneg %p137
      %p262 = pneg %p134
      %p263 = pneg %p165
      %p264 = pneg %p162
      %s265 = smul.u32 2, %s23
      %p266 = scmp.lt.s32.totalorder %s22, 1
      %s267 = scalar_select %p266, %s22, 1
      %p268 = scmp.lt.s32.totalorder %s265, 1
      %s269 = scalar_select %p268, %s265, 1
      %s270 = smul.addr %s267, 2
      %s271 = sadd.s32 %s269, %s270
      %s272 = smul.addr %s271, 8
      %s273 = scalar_lea.vmem %s5, %s272
      %p274 = pneg %p193
      %p275 = pneg %p190
      %s276 = smul.u32 2, %s23
      %p277 = scmp.lt.s32.totalorder %s22, 1
      %s278 = scalar_select %p277, %s22, 1
      %p279 = scmp.lt.s32.totalorder %s276, 1
      %s280 = scalar_select %p279, %s276, 1
      %s281 = smul.addr %s278, 2
      %s282 = sadd.s32 %s280, %s281
      %s283 = smul.addr %s282, 8
      %s284 = scalar_lea.vmem %s6, %s283
      %s285 = smul.u32 2, %s23
      %p286 = scmp.lt.s32.totalorder %s22, 1
      %s287 = scalar_select %p286, %s22, 1
      %p288 = scmp.lt.s32.totalorder %s285, 1
      %s289 = scalar_select %p288, %s285, 1
      %s290 = smul.addr %s287, 2
      %s291 = sadd.s32 %s289, %s290
      %s292 = smul.addr %s291, 8
      %s293 = scalar_lea.vmem %s0, %s292
      %s294 = smul.u32 2, %s23
      %s295 = smul.u32 2, %s23
      %p296 = scmp.lt.s32.totalorder %s22, 1
      %s297 = scalar_select %p296, %s22, 1
      %p298 = scmp.lt.s32.totalorder %s295, 1
      %s299 = scalar_select %p298, %s295, 1
      %s300 = smul.addr %s297, 2
      %s301 = sadd.s32 %s299, %s300
      %s302 = smul.addr %s301, 8
      %s303 = scalar_lea.vmem %s5, %s302
      %s304 = smul.u32 2, %s23
      %s305 = smul.u32 2, %s23
      %p306 = scmp.lt.s32.totalorder %s22, 1
      %s307 = scalar_select %p306, %s22, 1
      %p308 = scmp.lt.s32.totalorder %s305, 1
      %s309 = scalar_select %p308, %s305, 1
      %s310 = smul.addr %s307, 2
      %s311 = sadd.s32 %s309, %s310
      %s312 = smul.addr %s311, 8
      %s313 = scalar_lea.vmem %s6, %s312
      %s314 = smul.u32 2, %s23
      %v315 = vld [vmem:[%s1] sm:$0xff]
      %v316 = vld [vmem:[%s293] sm:$0xff]
      %v317 = vld [vmem:[%s293 + $0x8] sm:$0xff]
      %v318 = vld [vmem:[%s3] sm:$0xff]
      %320 = vset.pattern.permute.xlu0 0
      %321 = vperm.xlu0 %320, %v318
      %v322 = vpop.permute.xlu0 %321
      %vm324 = vcmask 64512
      %v326 = vsel %vm324, %v315, 0
      %328 = vmatprep.subr.mxu0 0.0
      %329 = vmatpush1.msra.mxu0 0.0
      %330 = vmatprep.subr.mxu0 0.0
      %331 = vmatpush1.msra.mxu0 0.0
      %332 = vmatprep.subr.mxu0 0.0
      %333 = vmatpush1.msra.mxu0 0.0
      %334 = vmatprep.subr.mxu0 0.0
      %335 = vmatpush1.msra.mxu0 0.0
      %336 = vmatprep.subr.mxu0 0.0
      %337 = vmatpush1.msra.mxu0 0.0
      %338 = vmatprep.subr.mxu0 0.0
      %339 = vmatpush1.msra.mxu0 0.0
      %340 = vmatprep.subr.mxu0 0.0
      %341 = vmatpush1.msra.mxu0 0.0
      %342 = vmatprep.subr.mxu0 0.0
      %343 = vmatpush1.msra.mxu0 0.0
      %344 = vmatprep.subr.mxu0 0.0
      %345 = vmatpush1.msra.mxu0 0.0
      %346 = vmatprep.subr.mxu0 0.0
      %347 = vmatpush1.msra.mxu0 0.0
      %348 = vmatprep.subr.mxu0 0.0
      %349 = vmatpush1.msra.mxu0 0.0
      %350 = vmatprep.subr.mxu0 0.0
      %351 = vmatpush1.msra.mxu0 0.0
      %352 = vmatprep.subr.mxu0 0.0
      %353 = vmatpush1.msra.mxu0 0.0
      %354 = vmatprep.subr.mxu0 0.0
      %355 = vmatpush1.msra.mxu0 0.0
      %356 = vmatprep.subr.mxu0 0.0
      %357 = vmatpush1.msra.mxu0 0.0
      %358 = vmatprep.subr.mxu0 %v317
      %359 = vmatpush1.msra.mxu0 %v316
      %360 = vmatprep.subr.mxu0 0.0
      %361 = vmatpush2.msra.mxu0 0.0
      %362 = vmatprep.subr.mxu0 0.0
      %363 = vmatpush2.msra.mxu0 0.0
      %364 = vmatprep.subr.mxu0 0.0
      %365 = vmatpush2.msra.mxu0 0.0
      %366 = vmatprep.subr.mxu0 0.0
      %367 = vmatpush2.msra.mxu0 0.0
      %368 = vmatprep.subr.mxu0 0.0
      %369 = vmatpush2.msra.mxu0 0.0
      %370 = vmatprep.subr.mxu0 0.0
      %371 = vmatpush2.msra.mxu0 0.0
      %372 = vmatprep.subr.mxu0 0.0
      %373 = vmatpush2.msra.mxu0 0.0
      %374 = vmatprep.subr.mxu0 0.0
      %375 = vmatpush2.msra.mxu0 0.0
      %376 = vmatprep.subr.mxu0 0.0
      %377 = vmatpush2.msra.mxu0 0.0
      %378 = vmatprep.subr.mxu0 0.0
      %379 = vmatpush2.msra.mxu0 0.0
      %380 = vmatprep.subr.mxu0 0.0
      %381 = vmatpush2.msra.mxu0 0.0
      %382 = vmatprep.subr.mxu0 0.0
      %383 = vmatpush2.msra.mxu0 0.0
      %384 = vmatprep.subr.mxu0 0.0
      %385 = vmatpush2.msra.mxu0 0.0
      %386 = vmatprep.subr.mxu0 0.0
      %387 = vmatpush2.msra.mxu0 0.0
      %388 = vmatprep.subr.mxu0 0.0
      %389 = vmatpush2.msra.mxu0 0.0
      %390 = vmatprep.subr.mxu0 0.0
      %391 = vmatpush2.msra.mxu0 0.0
      %392 = vmatprep.mubr.f32.mxu0 0.0
      %393 = vmatmul.mubr.f32.gmra.mxu0 %v326
      %v394 = vpop.f32.mrf.mxu0
      %v395 = vadd.f32 %v322, %v394
      %v396 = vpop.f32.mrf.mxu0
      %v397 = vadd.f32 %v322, %v396
      %398 = vdwg.mxu0
      %v399 = vsub.f32 0.0, %v395
      %v400 = vsub.f32 0.0, %v397
      %v401 = vmul.f32 %v399, 1.442695
      %v402 = vpow.pop %v401
      %v403 = vmul.f32 %v400, 1.442695
      %v404 = vpow.pop %v403
      %v405 = vadd.f32 %v402, 1.0
      %v406 = vadd.f32 %v404, 1.0
      %v407 = vrcp.pop %v405
      %v408 = vrcp.pop %v406
      %v409 = vmul.f32 %v395, %v407
      %v410 = vmul.f32 %v397, %v408
      %411 = vst [vmem:[%s303] sm:$0xff] %v409
      %412 = vst [vmem:[%s303 + $0x8] sm:$0xff] %v410
      %v413 = vld [vmem:[%s2] sm:$0xff]
      %v414 = vld [vmem:[%s293] sm:$0xff]
      %v415 = vld [vmem:[%s293 + $0x8] sm:$0xff]
      %v416 = vld [vmem:[%s4] sm:$0xff]
      %418 = vset.pattern.permute.xlu0 0
      %419 = vperm.xlu0 %418, %v416
      %v420 = vpop.permute.xlu0 %419
      %v423 = vsel %vm324, %v413, 0
      %425 = vmatprep.subr.mxu0 0.0
      %426 = vmatpush1.msra.mxu0 0.0
      %427 = vmatprep.subr.mxu0 0.0
      %428 = vmatpush1.msra.mxu0 0.0
      %429 = vmatprep.subr.mxu0 0.0
      %430 = vmatpush1.msra.mxu0 0.0
      %431 = vmatprep.subr.mxu0 0.0
      %432 = vmatpush1.msra.mxu0 0.0
      %433 = vmatprep.subr.mxu0 0.0
      %434 = vmatpush1.msra.mxu0 0.0
      %435 = vmatprep.subr.mxu0 0.0
      %436 = vmatpush1.msra.mxu0 0.0
      %437 = vmatprep.subr.mxu0 0.0
      %438 = vmatpush1.msra.mxu0 0.0
      %439 = vmatprep.subr.mxu0 0.0
      %440 = vmatpush1.msra.mxu0 0.0
      %441 = vmatprep.subr.mxu0 0.0
      %442 = vmatpush1.msra.mxu0 0.0
      %443 = vmatprep.subr.mxu0 0.0
      %444 = vmatpush1.msra.mxu0 0.0
      %445 = vmatprep.subr.mxu0 0.0
      %446 = vmatpush1.msra.mxu0 0.0
      %447 = vmatprep.subr.mxu0 0.0
      %448 = vmatpush1.msra.mxu0 0.0
      %449 = vmatprep.subr.mxu0 0.0
      %450 = vmatpush1.msra.mxu0 0.0
      %451 = vmatprep.subr.mxu0 0.0
      %452 = vmatpush1.msra.mxu0 0.0
      %453 = vmatprep.subr.mxu0 0.0
      %454 = vmatpush1.msra.mxu0 0.0
      %455 = vmatprep.subr.mxu0 %v415
      %456 = vmatpush1.msra.mxu0 %v414
      %457 = vmatprep.subr.mxu0 0.0
      %458 = vmatpush2.msra.mxu0 0.0
      %459 = vmatprep.subr.mxu0 0.0
      %460 = vmatpush2.msra.mxu0 0.0
      %461 = vmatprep.subr.mxu0 0.0
      %462 = vmatpush2.msra.mxu0 0.0
      %463 = vmatprep.subr.mxu0 0.0
      %464 = vmatpush2.msra.mxu0 0.0
      %465 = vmatprep.subr.mxu0 0.0
      %466 = vmatpush2.msra.mxu0 0.0
      %467 = vmatprep.subr.mxu0 0.0
      %468 = vmatpush2.msra.mxu0 0.0
      %469 = vmatprep.subr.mxu0 0.0
      %470 = vmatpush2.msra.mxu0 0.0
      %471 = vmatprep.subr.mxu0 0.0
      %472 = vmatpush2.msra.mxu0 0.0
      %473 = vmatprep.subr.mxu0 0.0
      %474 = vmatpush2.msra.mxu0 0.0
      %475 = vmatprep.subr.mxu0 0.0
      %476 = vmatpush2.msra.mxu0 0.0
      %477 = vmatprep.subr.mxu0 0.0
      %478 = vmatpush2.msra.mxu0 0.0
      %479 = vmatprep.subr.mxu0 0.0
      %480 = vmatpush2.msra.mxu0 0.0
      %481 = vmatprep.subr.mxu0 0.0
      %482 = vmatpush2.msra.mxu0 0.0
      %483 = vmatprep.subr.mxu0 0.0
      %484 = vmatpush2.msra.mxu0 0.0
      %485 = vmatprep.subr.mxu0 0.0
      %486 = vmatpush2.msra.mxu0 0.0
      %487 = vmatprep.subr.mxu0 0.0
      %488 = vmatpush2.msra.mxu0 0.0
      %489 = vmatprep.mubr.f32.mxu0 0.0
      %490 = vmatmul.mubr.f32.gmra.mxu0 %v423
      %v491 = vpop.f32.mrf.mxu0
      %v492 = vadd.f32 %v420, %v491
      %v493 = vpop.f32.mrf.mxu0
      %v494 = vadd.f32 %v420, %v493
      %495 = vdwg.mxu0
      %v496 = vsub.f32 0.0, %v492
      %v497 = vsub.f32 0.0, %v494
      %v498 = vmul.f32 %v496, 1.442695
      %v499 = vpow.pop %v498
      %v500 = vmul.f32 %v497, 1.442695
      %v501 = vpow.pop %v500
      %v502 = vadd.f32 %v499, 1.0
      %v503 = vadd.f32 %v501, 1.0
      %v504 = vrcp.pop %v502
      %v505 = vrcp.pop %v503
      %v506 = vmul.f32 %v492, %v504
      %v507 = vmul.f32 %v494, %v505
      %508 = vst [vmem:[%s313] sm:$0xff] %v506
      %509 = vst [vmem:[%s313 + $0x8] sm:$0xff] %v507
      %s510 = smul.u32 2, %s23
      %p511 = scmp.lt.s32.totalorder %s22, 1
      %s512 = scalar_select %p511, %s22, 1
      %p513 = scmp.lt.s32.totalorder %s510, 1
      %s514 = scalar_select %p513, %s510, 1
      %s515 = smul.addr %s512, 2
      %s516 = sadd.s32 %s514, %s515
      %s517 = smul.addr %s516, 8
      %s518 = scalar_lea.vmem %s5, %s517
      %s519 = smul.u32 2, %s23
      %p520 = scmp.lt.s32.totalorder %s22, 1
      %s521 = scalar_select %p520, %s22, 1
      %p522 = scmp.lt.s32.totalorder %s519, 1
      %s523 = scalar_select %p522, %s519, 1
      %s524 = smul.addr %s521, 2
      %s525 = sadd.s32 %s523, %s524
      %s526 = smul.addr %s525, 8
      %s527 = scalar_lea.vmem %s6, %s526
      // Predicated region
      $region41: #{sppelan_forward.4} parent=39 // pred_check
        %p528 = pneg %p162
      $region42: #{sppelan_forward.4} parent=39 // pred_check_branch
        %530 = sbr.rel (%p528) target = $region44
      $region43: #{sppelan_forward.4} parent=39 // pred_region
        %s531 = smul.u32 2, %s23
      $region44: #{sppelan_forward.4} parent=39 // pred_fallthru
        _
      // Predicated region
      $region45: #{sppelan_forward.4} parent=39 // pred_check
        %p532 = pneg %p190
      $region46: #{sppelan_forward.4} parent=39 // pred_check_branch
        %534 = sbr.rel (%p532) target = $region48
      $region47: #{sppelan_forward.4} parent=39 // pred_region
        %s535 = smul.u32 2, %s23
      $region48: #{sppelan_forward.4} parent=39 // pred_fallthru
        _
    $region40: #{sppelan_forward.4} parent=5 // pred_fallthru
      _
    %p536 = scmp.le.s32.totalorder 2, %s13
    // Predicated region
    $region49: #{sppelan_forward.4} parent=5 // pred_check
      %p537 = pneg %p536
    $region50: #{sppelan_forward.4} parent=5 // pred_check_branch
      %539 = sbr.rel (%p537) target = $region52
    $region51: #{sppelan_forward.4} parent=5 // pred_region
      %s540 = ssub.s32 %s13, 2
      // Predicated region
      $region53: #{sppelan_forward.4} parent=51 // pred_check
        %p541 = pneg %p168
      $region54: #{sppelan_forward.4} parent=51 // pred_check_branch
        %543 = sbr.rel (%p541) target = $region56
      $region55: #{sppelan_forward.4} parent=51 // pred_region
        %s544 = smul.u32 2, %s25
        %p545 = scmp.lt.s32.totalorder %s24, 1
        %s546 = scalar_select %p545, %s24, 1
        %p547 = scmp.lt.s32.totalorder %s544, 1
        %s548 = scalar_select %p547, %s544, 1
        %s549 = smul.addr %s546, 2
        %s550 = sadd.s32 %s548, %s549
        %s551 = smul.addr %s550, 8
        %s552 = scalar_lea.vmem %s5, %s551
      $region56: #{sppelan_forward.4} parent=51 // pred_fallthru
        _
      // Predicated region
      $region57: #{sppelan_forward.4} parent=51 // pred_check
        %p553 = pneg %p196
      $region58: #{sppelan_forward.4} parent=51 // pred_check_branch
        %555 = sbr.rel (%p553) target = $region60
      $region59: #{sppelan_forward.4} parent=51 // pred_region
        %s556 = smul.u32 2, %s25
        %p557 = scmp.lt.s32.totalorder %s24, 1
        %s558 = scalar_select %p557, %s24, 1
        %p559 = scmp.lt.s32.totalorder %s556, 1
        %s560 = scalar_select %p559, %s556, 1
        %s561 = smul.addr %s558, 2
        %s562 = sadd.s32 %s560, %s561
        %s563 = smul.addr %s562, 8
        %s564 = scalar_lea.vmem %s6, %s563
      $region60: #{sppelan_forward.4} parent=51 // pred_fallthru
        _
    $region52: #{sppelan_forward.4} parent=5 // pred_fallthru
      _
  $region6: #{sppelan_forward.4} parent=0 // loop_footer
    %s17 = sadd.s32 1, %s13
  $region7: #{sppelan_forward.4} parent=0 // loop_footer_branch
    %12 = sbr.rel target = $region3
  $region8: #{sppelan_forward.4} parent=0 // loop_exit
    _

// kernel: sppelan_forward.7
$region0: #{sppelan_forward.7}
  #allocation0 [shape = 'u32[]', space=smem, size = 0x4, offset = 0x4, fixed_abs, tag = 'smem constant byte address 0x4 - core index']
  #allocation1 [shape = 'u32[144,128]{1,0:T(1,128)}', space=vmem, size = 0x12000, scoped, tag = 'internal scratch']
  %s0 = inlined_call_operand.vmem [shape: f32[2,8,256], index: 0, kind: input, shape index: {}]
  %s1 = inlined_call_operand.vmem [shape: f32[2,8,256], index: 1, kind: input, shape index: {}]
  %s2 = inlined_call_operand.vmem [shape: f32[8,8], index: 2, kind: input, shape index: {}]
  %s3 = inlined_call_operand.vmem [shape: f32[8,8], index: 3, kind: input, shape index: {}]
  %s4 = inlined_call_operand.vmem [shape: f32[8,1], index: 4, kind: input, shape index: {}]
  %s5 = inlined_call_operand.vmem [shape: f32[2,8,256], index: 5, kind: output, shape index: {}]
  %s6 = sld [smem:[#allocation0]]
  $region53: #{sppelan_forward.7} parent=0
    _
  %s8 = ssub.s32 1, %s6
  %s9 = scalar_select 0, %s8, %s6
  loop: start=0, step=1, limit=4
  $region2: #{sppelan_forward.7} parent=0 // loop_pre_header
    _
  $region3: #{sppelan_forward.7} parent=0 // loop_header
    %s11 = sphi 0, %s15
    %p12 = scmp.ge.s32.totalorder %s11, 4
    %s18 = sphi 0, %s30
    %s19 = sphi 0, %s26
    %s20 = sphi 0, %s18
    %s21 = sphi 0, %s19
    %s22 = sphi 0, %s20
    %s23 = sphi 0, %s21
    %s35 = sphi 0, %s37
    %s38 = sphi 0, %s35
    %s39 = sphi 0, %s38
    %s55 = sphi 0, %s39
    %s63 = sphi 0, %s65
    %s66 = sphi 0, %s63
    %s67 = sphi 0, %s66
    %s83 = sphi 0, %s67
    %s87 = sphi 0, %s87
    %s89 = sphi 0, %s87
    %s90 = sphi 0, %s89
    %s104 = sphi 0, %s90
    %s108 = sphi 0, %s108
    %s110 = sphi 0, %s108
    %s111 = sphi 0, %s110
    %s125 = sphi 0, %s111
    %s129 = sphi 0, %s129
    %s131 = sphi 0, %s129
    %s132 = sphi 0, %s131
    %s146 = sphi 0, %s132
    %s154 = sphi 0, %s156
    %s157 = sphi 0, %s154
    %s158 = sphi 0, %s157
    %s174 = sphi 0, %s158
  $region4: #{sppelan_forward.7} parent=0 // loop_header_branch
    %14 = sbr.rel (%p12) target = $region8
  $region5: #{sppelan_forward.7} parent=0 // loop_body
    %s16 = ssub.s32 %s11, 1
    %s17 = ssub.s32 %s11, 2
    %s24 = sadd.s32 1, %s19
    %p25 = scmp.ge.s32.totalorder %s24, 1
    %s26 = scalar_select %p25, 0, %s24
    %s27 = sadd.s32 1, %s18
    %s28 = scalar_select %p25, %s27, %s18
    %p29 = scmp.ge.s32.totalorder %s28, 2
    %s30 = scalar_select %p29, 0, %s28
    %s31 = ssub.s32 %s18, %s30
    %s32 = ssub.s32 %s19, %s26
    %s33 = sor.u32 %s31, %s32
    %p34 = scmp.eq.s32.totalorder %s33, 0
    %s36 = sadd.s32 %s35, 1
    %s37 = scalar_select %p34, %s35, %s36
    %p40 = pneg %p34
    %p41 = scmp.eq.s32.totalorder %s11, 1
    %p42 = por %p40, %p41
    %p43 = scmp.ne.s32.totalorder %s35, %s38
    %p44 = scmp.eq.s32.totalorder %s11, 0
    %p45 = por %p43, %p44
    %p46 = scmp.ne.s32.totalorder %s35, %s38
    %p47 = scmp.eq.s32.totalorder %s16, 1
    %p48 = por %p46, %p47
    %p49 = scmp.ne.s32.totalorder %s38, %s39
    %p50 = scmp.eq.s32.totalorder %s16, 0
    %p51 = por %p49, %p50
    %p52 = scmp.ne.s32.totalorder %s38, %s39
    %p53 = scmp.eq.s32.totalorder %s17, 1
    %p54 = por %p52, %p53
    %p56 = scmp.ne.s32.totalorder %s39, %s55
    %p57 = scmp.eq.s32.totalorder %s17, 0
    %p58 = por %p56, %p57
    %s59 = ssub.s32 %s18, %s30
    %s60 = ssub.s32 %s19, %s26
    %s61 = sor.u32 %s59, %s60
    %p62 = scmp.eq.s32.totalorder %s61, 0
    %s64 = sadd.s32 %s63, 1
    %s65 = scalar_select %p62, %s63, %s64
    %p68 = pneg %p62
    %p69 = scmp.eq.s32.totalorder %s11, 1
    %p70 = por %p68, %p69
    %p71 = scmp.ne.s32.totalorder %s63, %s66
    %p72 = scmp.eq.s32.totalorder %s11, 0
    %p73 = por %p71, %p72
    %p74 = scmp.ne.s32.totalorder %s63, %s66
    %p75 = scmp.eq.s32.totalorder %s16, 1
    %p76 = por %p74, %p75
    %p77 = scmp.ne.s32.totalorder %s66, %s67
    %p78 = scmp.eq.s32.totalorder %s16, 0
    %p79 = por %p77, %p78
    %p80 = scmp.ne.s32.totalorder %s66, %s67
    %p81 = scmp.eq.s32.totalorder %s17, 1
    %p82 = por %p80, %p81
    %p84 = scmp.ne.s32.totalorder %s67, %s83
    %p85 = scmp.eq.s32.totalorder %s17, 0
    %p86 = por %p84, %p85
    %s88 = sadd.s32 %s87, 1
    %p91 = scmp.eq.s32.totalorder %s11, 1
    %p92 = scmp.ne.s32.totalorder %s87, %s89
    %p93 = scmp.eq.s32.totalorder %s11, 0
    %p94 = por %p92, %p93
    %p95 = scmp.ne.s32.totalorder %s87, %s89
    %p96 = scmp.eq.s32.totalorder %s16, 1
    %p97 = por %p95, %p96
    %p98 = scmp.ne.s32.totalorder %s89, %s90
    %p99 = scmp.eq.s32.totalorder %s16, 0
    %p100 = por %p98, %p99
    %p101 = scmp.ne.s32.totalorder %s89, %s90
    %p102 = scmp.eq.s32.totalorder %s17, 1
    %p103 = por %p101, %p102
    %p105 = scmp.ne.s32.totalorder %s90, %s104
    %p106 = scmp.eq.s32.totalorder %s17, 0
    %p107 = por %p105, %p106
    %s109 = sadd.s32 %s108, 1
    %p112 = scmp.eq.s32.totalorder %s11, 1
    %p113 = scmp.ne.s32.totalorder %s108, %s110
    %p114 = scmp.eq.s32.totalorder %s11, 0
    %p115 = por %p113, %p114
    %p116 = scmp.ne.s32.totalorder %s108, %s110
    %p117 = scmp.eq.s32.totalorder %s16, 1
    %p118 = por %p116, %p117
    %p119 = scmp.ne.s32.totalorder %s110, %s111
    %p120 = scmp.eq.s32.totalorder %s16, 0
    %p121 = por %p119, %p120
    %p122 = scmp.ne.s32.totalorder %s110, %s111
    %p123 = scmp.eq.s32.totalorder %s17, 1
    %p124 = por %p122, %p123
    %p126 = scmp.ne.s32.totalorder %s111, %s125
    %p127 = scmp.eq.s32.totalorder %s17, 0
    %p128 = por %p126, %p127
    %s130 = sadd.s32 %s129, 1
    %p133 = scmp.eq.s32.totalorder %s11, 1
    %p134 = scmp.ne.s32.totalorder %s129, %s131
    %p135 = scmp.eq.s32.totalorder %s11, 0
    %p136 = por %p134, %p135
    %p137 = scmp.ne.s32.totalorder %s129, %s131
    %p138 = scmp.eq.s32.totalorder %s16, 1
    %p139 = por %p137, %p138
    %p140 = scmp.ne.s32.totalorder %s131, %s132
    %p141 = scmp.eq.s32.totalorder %s16, 0
    %p142 = por %p140, %p141
    %p143 = scmp.ne.s32.totalorder %s131, %s132
    %p144 = scmp.eq.s32.totalorder %s17, 1
    %p145 = por %p143, %p144
    %p147 = scmp.ne.s32.totalorder %s132, %s146
    %p148 = scmp.eq.s32.totalorder %s17, 0
    %p149 = por %p147, %p148
    %s150 = ssub.s32 %s18, %s30
    %s151 = ssub.s32 %s19, %s26
    %s152 = sor.u32 %s150, %s151
    %p153 = scmp.eq.s32.totalorder %s152, 0
    %s155 = sadd.s32 %s154, 1
    %s156 = scalar_select %p153, %s154, %s155
    %p159 = pneg %p153
    %p160 = scmp.eq.s32.totalorder %s11, 1
    %p161 = por %p159, %p160
    %p162 = scmp.ne.s32.totalorder %s154, %s157
    %p163 = scmp.eq.s32.totalorder %s11, 0
    %p164 = por %p162, %p163
    %p165 = scmp.ne.s32.totalorder %s154, %s157
    %p166 = scmp.eq.s32.totalorder %s16, 1
    %p167 = por %p165, %p166
    %p168 = scmp.ne.s32.totalorder %s157, %s158
    %p169 = scmp.eq.s32.totalorder %s16, 0
    %p170 = por %p168, %p169
    %p171 = scmp.ne.s32.totalorder %s157, %s158
    %p172 = scmp.eq.s32.totalorder %s17, 1
    %p173 = por %p171, %p172
    %p175 = scmp.ne.s32.totalorder %s158, %s174
    %p176 = scmp.eq.s32.totalorder %s17, 0
    %p177 = por %p175, %p176
    %p178 = scmp.le.s32.totalorder 1, %s11
    %p179 = scmp.lt.s32.totalorder %s11, 3
    %p180 = pnand %p178, %p179
    %p181 = pneg %p180
    // Predicated region
    $region9: #{sppelan_forward.7} parent=5 // pred_check
      _
    $region10: #{sppelan_forward.7} parent=5 // pred_check_branch
      %183 = sbr.rel (%p180) target = $region12
    $region11: #{sppelan_forward.7} parent=5 // pred_region
      %s184 = ssub.s32 %s11, 1
      // Predicated region
      $region13: #{sppelan_forward.7} parent=11 // pred_check
        %p185 = pneg %p100
      $region14: #{sppelan_forward.7} parent=11 // pred_check_branch
        %187 = sbr.rel (%p185) target = $region16
      $region15: #{sppelan_forward.7} parent=11 // pred_region
        _
      $region16: #{sppelan_forward.7} parent=11 // pred_fallthru
        _
      // Predicated region
      $region17: #{sppelan_forward.7} parent=11 // pred_check
        %p188 = pneg %p121
      $region18: #{sppelan_forward.7} parent=11 // pred_check_branch
        %190 = sbr.rel (%p188) target = $region20
      $region19: #{sppelan_forward.7} parent=11 // pred_region
        _
      $region20: #{sppelan_forward.7} parent=11 // pred_fallthru
        _
      // Predicated region
      $region21: #{sppelan_forward.7} parent=11 // pred_check
        %p191 = pneg %p142
      $region22: #{sppelan_forward.7} parent=11 // pred_check_branch
        %193 = sbr.rel (%p191) target = $region24
      $region23: #{sppelan_forward.7} parent=11 // pred_region
        _
      $region24: #{sppelan_forward.7} parent=11 // pred_fallthru
        _
    $region12: #{sppelan_forward.7} parent=5 // pred_fallthru
      _
    %p194 = scmp.lt.s32.totalorder %s11, 2
    // Predicated region
    $region25: #{sppelan_forward.7} parent=5 // pred_check
      %p195 = pneg %p194
    $region26: #{sppelan_forward.7} parent=5 // pred_check_branch
      %197 = sbr.rel (%p195) target = $region28
    $region27: #{sppelan_forward.7} parent=5 // pred_region
      // Predicated region
      $region29: #{sppelan_forward.7} parent=27 // pred_check
        %p198 = pneg %p45
      $region30: #{sppelan_forward.7} parent=27 // pred_check_branch
        %200 = sbr.rel (%p198) target = $region32
      $region31: #{sppelan_forward.7} parent=27 // pred_region
        %s201 = smul.u32 2, %s19
        %p202 = scmp.lt.s32.totalorder %s18, 1
        %s203 = scalar_select %p202, %s18, 1
        %p204 = scmp.lt.s32.totalorder %s201, 1
        %s205 = scalar_select %p204, %s201, 1
        %s206 = smul.addr %s203, 2
        %s207 = sadd.s32 %s205, %s206
        %s208 = smul.addr %s207, 8
        %s209 = scalar_lea.vmem %s0, %s208
        %s210 = smul.u32 2, %s19
      $region32: #{sppelan_forward.7} parent=27 // pred_fallthru
        _
      // Predicated region
      $region33: #{sppelan_forward.7} parent=27 // pred_check
        %p211 = pneg %p73
      $region34: #{sppelan_forward.7} parent=27 // pred_check_branch
        %213 = sbr.rel (%p211) target = $region36
      $region35: #{sppelan_forward.7} parent=27 // pred_region
        %s214 = smul.u32 2, %s19
        %p215 = scmp.lt.s32.totalorder %s18, 1
        %s216 = scalar_select %p215, %s18, 1
        %p217 = scmp.lt.s32.totalorder %s214, 1
        %s218 = scalar_select %p217, %s214, 1
        %s219 = smul.addr %s216, 2
        %s220 = sadd.s32 %s218, %s219
        %s221 = smul.addr %s220, 8
        %s222 = scalar_lea.vmem %s1, %s221
        %s223 = smul.u32 2, %s19
      $region36: #{sppelan_forward.7} parent=27 // pred_fallthru
        _
    $region28: #{sppelan_forward.7} parent=5 // pred_fallthru
      _
    %p224 = scmp.le.s32.totalorder 1, %s11
    %p225 = scmp.lt.s32.totalorder %s11, 3
    %p226 = pnand %p224, %p225
    %p227 = pneg %p226
    // Predicated region
    $region37: #{sppelan_forward.7} parent=5 // pred_check
      _
    $region38: #{sppelan_forward.7} parent=5 // pred_check_branch
      %229 = sbr.rel (%p226) target = $region40
    $region39: #{sppelan_forward.7} parent=5 // pred_region
      %s230 = ssub.s32 %s11, 1
      %s231 = smul.u32 2, %s21
      %p232 = scmp.lt.s32.totalorder %s20, 1
      %s233 = scalar_select %p232, %s20, 1
      %p234 = scmp.lt.s32.totalorder %s231, 1
      %s235 = scalar_select %p234, %s231, 1
      %s236 = smul.addr %s233, 2
      %s237 = sadd.s32 %s235, %s236
      %s238 = smul.addr %s237, 8
      %s239 = scalar_lea.vmem %s0, %s238
      %p240 = pneg %p51
      %p241 = pneg %p48
      %s242 = smul.u32 2, %s21
      %p243 = scmp.lt.s32.totalorder %s20, 1
      %s244 = scalar_select %p243, %s20, 1
      %p245 = scmp.lt.s32.totalorder %s242, 1
      %s246 = scalar_select %p245, %s242, 1
      %s247 = smul.addr %s244, 2
      %s248 = sadd.s32 %s246, %s247
      %s249 = smul.addr %s248, 8
      %s250 = scalar_lea.vmem %s1, %s249
      %p251 = pneg %p79
      %p252 = pneg %p76
      %p253 = pneg %p100
      %p254 = pneg %p97
      %p255 = pneg %p121
      %p256 = pneg %p118
      %p257 = pneg %p142
      %p258 = pneg %p139
      %p259 = pneg %p170
      %p260 = pneg %p167
      %s261 = smul.u32 2, %s21
      %p262 = scmp.lt.s32.totalorder %s20, 1
      %s263 = scalar_select %p262, %s20, 1
      %p264 = scmp.lt.s32.totalorder %s261, 1
      %s265 = scalar_select %p264, %s261, 1
      %s266 = smul.addr %s263, 2
      %s267 = sadd.s32 %s265, %s266
      %s268 = smul.addr %s267, 8
      %s269 = scalar_lea.vmem %s5, %s268
      %s270 = smul.u32 2, %s21
      %p271 = scmp.lt.s32.totalorder %s20, 1
      %s272 = scalar_select %p271, %s20, 1
      %p273 = scmp.lt.s32.totalorder %s270, 1
      %s274 = scalar_select %p273, %s270, 1
      %s275 = smul.addr %s272, 2
      %s276 = sadd.s32 %s274, %s275
      %s277 = smul.addr %s276, 8
      %s278 = scalar_lea.vmem %s0, %s277
      %s279 = smul.u32 2, %s21
      %s280 = smul.u32 2, %s21
      %p281 = scmp.lt.s32.totalorder %s20, 1
      %s282 = scalar_select %p281, %s20, 1
      %p283 = scmp.lt.s32.totalorder %s280, 1
      %s284 = scalar_select %p283, %s280, 1
      %s285 = smul.addr %s282, 2
      %s286 = sadd.s32 %s284, %s285
      %s287 = smul.addr %s286, 8
      %s288 = scalar_lea.vmem %s1, %s287
      %s289 = smul.u32 2, %s21
      %s290 = smul.u32 2, %s21
      %p291 = scmp.lt.s32.totalorder %s20, 1
      %s292 = scalar_select %p291, %s20, 1
      %p293 = scmp.lt.s32.totalorder %s290, 1
      %s294 = scalar_select %p293, %s290, 1
      %s295 = smul.addr %s292, 2
      %s296 = sadd.s32 %s294, %s295
      %s297 = smul.addr %s296, 8
      %s298 = scalar_lea.vmem %s5, %s297
      %s299 = smul.u32 2, %s21
      %v300 = vld [vmem:[%s2] sm:$0xff]
      %v301 = vld [vmem:[%s278] sm:$0xff]
      %v302 = vld [vmem:[%s278 + $0x8] sm:$0xff]
      %v303 = vld [vmem:[%s3] sm:$0xff]
      %v304 = vld [vmem:[%s288] sm:$0xff]
      %v305 = vld [vmem:[%s288 + $0x8] sm:$0xff]
      %vm306 = vcmask 64512
      %v308 = vsel %vm306, %v303, 0
      %310 = vmatprep.subr.mxu0 0.0
      %311 = vmatpush1.msra.mxu0 0.0
      %312 = vmatprep.subr.mxu0 0.0
      %313 = vmatpush1.msra.mxu0 0.0
      %314 = vmatprep.subr.mxu0 0.0
      %315 = vmatpush1.msra.mxu0 0.0
      %316 = vmatprep.subr.mxu0 0.0
      %317 = vmatpush1.msra.mxu0 0.0
      %318 = vmatprep.subr.mxu0 0.0
      %319 = vmatpush1.msra.mxu0 0.0
      %320 = vmatprep.subr.mxu0 0.0
      %321 = vmatpush1.msra.mxu0 0.0
      %322 = vmatprep.subr.mxu0 0.0
      %323 = vmatpush1.msra.mxu0 0.0
      %324 = vmatprep.subr.mxu0 0.0
      %325 = vmatpush1.msra.mxu0 0.0
      %326 = vmatprep.subr.mxu0 0.0
      %327 = vmatpush1.msra.mxu0 0.0
      %328 = vmatprep.subr.mxu0 0.0
      %329 = vmatpush1.msra.mxu0 0.0
      %330 = vmatprep.subr.mxu0 0.0
      %331 = vmatpush1.msra.mxu0 0.0
      %332 = vmatprep.subr.mxu0 0.0
      %333 = vmatpush1.msra.mxu0 0.0
      %334 = vmatprep.subr.mxu0 0.0
      %335 = vmatpush1.msra.mxu0 0.0
      %336 = vmatprep.subr.mxu0 0.0
      %337 = vmatpush1.msra.mxu0 0.0
      %338 = vmatprep.subr.mxu0 0.0
      %339 = vmatpush1.msra.mxu0 0.0
      %340 = vmatprep.subr.mxu0 %v305
      %341 = vmatpush1.msra.mxu0 %v304
      %342 = vmatprep.subr.mxu0 0.0
      %343 = vmatpush2.msra.mxu0 0.0
      %344 = vmatprep.subr.mxu0 0.0
      %345 = vmatpush2.msra.mxu0 0.0
      %346 = vmatprep.subr.mxu0 0.0
      %347 = vmatpush2.msra.mxu0 0.0
      %348 = vmatprep.subr.mxu0 0.0
      %349 = vmatpush2.msra.mxu0 0.0
      %350 = vmatprep.subr.mxu0 0.0
      %351 = vmatpush2.msra.mxu0 0.0
      %352 = vmatprep.subr.mxu0 0.0
      %353 = vmatpush2.msra.mxu0 0.0
      %354 = vmatprep.subr.mxu0 0.0
      %355 = vmatpush2.msra.mxu0 0.0
      %356 = vmatprep.subr.mxu0 0.0
      %357 = vmatpush2.msra.mxu0 0.0
      %358 = vmatprep.subr.mxu0 0.0
      %359 = vmatpush2.msra.mxu0 0.0
      %360 = vmatprep.subr.mxu0 0.0
      %361 = vmatpush2.msra.mxu0 0.0
      %362 = vmatprep.subr.mxu0 0.0
      %363 = vmatpush2.msra.mxu0 0.0
      %364 = vmatprep.subr.mxu0 0.0
      %365 = vmatpush2.msra.mxu0 0.0
      %366 = vmatprep.subr.mxu0 0.0
      %367 = vmatpush2.msra.mxu0 0.0
      %368 = vmatprep.subr.mxu0 0.0
      %369 = vmatpush2.msra.mxu0 0.0
      %370 = vmatprep.subr.mxu0 0.0
      %371 = vmatpush2.msra.mxu0 0.0
      %372 = vmatprep.subr.mxu0 0.0
      %373 = vmatpush2.msra.mxu0 0.0
      %374 = vmatprep.mubr.f32.mxu0 0.0
      %375 = vmatmul.mubr.f32.gmra.mxu0 %v308
      %v376 = vpop.f32.mrf.mxu0
      %v377 = vadd.f32 0.0, %v376
      %v378 = vpop.f32.mrf.mxu0
      %v379 = vadd.f32 0.0, %v378
      %380 = vdwg.mxu0
      %v382 = vsel %vm306, %v300, 0
      %384 = vmatprep.subr.mxu0 0.0
      %385 = vmatpush1.msra.mxu0 0.0
      %386 = vmatprep.subr.mxu0 0.0
      %387 = vmatpush1.msra.mxu0 0.0
      %388 = vmatprep.subr.mxu0 0.0
      %389 = vmatpush1.msra.mxu0 0.0
      %390 = vmatprep.subr.mxu0 0.0
      %391 = vmatpush1.msra.mxu0 0.0
      %392 = vmatprep.subr.mxu0 0.0
      %393 = vmatpush1.msra.mxu0 0.0
      %394 = vmatprep.subr.mxu0 0.0
      %395 = vmatpush1.msra.mxu0 0.0
      %396 = vmatprep.subr.mxu0 0.0
      %397 = vmatpush1.msra.mxu0 0.0
      %398 = vmatprep.subr.mxu0 0.0
      %399 = vmatpush1.msra.mxu0 0.0
      %400 = vmatprep.subr.mxu0 0.0
      %401 = vmatpush1.msra.mxu0 0.0
      %402 = vmatprep.subr.mxu0 0.0
      %403 = vmatpush1.msra.mxu0 0.0
      %404 = vmatprep.subr.mxu0 0.0
      %405 = vmatpush1.msra.mxu0 0.0
      %406 = vmatprep.subr.mxu0 0.0
      %407 = vmatpush1.msra.mxu0 0.0
      %408 = vmatprep.subr.mxu0 0.0
      %409 = vmatpush1.msra.mxu0 0.0
      %410 = vmatprep.subr.mxu0 0.0
      %411 = vmatpush1.msra.mxu0 0.0
      %412 = vmatprep.subr.mxu0 0.0
      %413 = vmatpush1.msra.mxu0 0.0
      %414 = vmatprep.subr.mxu0 %v302
      %415 = vmatpush1.msra.mxu0 %v301
      %416 = vmatprep.subr.mxu0 0.0
      %417 = vmatpush2.msra.mxu0 0.0
      %418 = vmatprep.subr.mxu0 0.0
      %419 = vmatpush2.msra.mxu0 0.0
      %420 = vmatprep.subr.mxu0 0.0
      %421 = vmatpush2.msra.mxu0 0.0
      %422 = vmatprep.subr.mxu0 0.0
      %423 = vmatpush2.msra.mxu0 0.0
      %424 = vmatprep.subr.mxu0 0.0
      %425 = vmatpush2.msra.mxu0 0.0
      %426 = vmatprep.subr.mxu0 0.0
      %427 = vmatpush2.msra.mxu0 0.0
      %428 = vmatprep.subr.mxu0 0.0
      %429 = vmatpush2.msra.mxu0 0.0
      %430 = vmatprep.subr.mxu0 0.0
      %431 = vmatpush2.msra.mxu0 0.0
      %432 = vmatprep.subr.mxu0 0.0
      %433 = vmatpush2.msra.mxu0 0.0
      %434 = vmatprep.subr.mxu0 0.0
      %435 = vmatpush2.msra.mxu0 0.0
      %436 = vmatprep.subr.mxu0 0.0
      %437 = vmatpush2.msra.mxu0 0.0
      %438 = vmatprep.subr.mxu0 0.0
      %439 = vmatpush2.msra.mxu0 0.0
      %440 = vmatprep.subr.mxu0 0.0
      %441 = vmatpush2.msra.mxu0 0.0
      %442 = vmatprep.subr.mxu0 0.0
      %443 = vmatpush2.msra.mxu0 0.0
      %444 = vmatprep.subr.mxu0 0.0
      %445 = vmatpush2.msra.mxu0 0.0
      %446 = vmatprep.subr.mxu0 0.0
      %447 = vmatpush2.msra.mxu0 0.0
      %448 = vmatprep.mubr.f32.mxu0 0.0
      %449 = vmatmul.mubr.f32.gmra.mxu0 %v382
      %v450 = vpop.f32.mrf.mxu0
      %v451 = vadd.f32 %v377, %v450
      %v452 = vpop.f32.mrf.mxu0
      %v453 = vadd.f32 %v379, %v452
      %454 = vdwg.mxu0
      %v455 = vld [vmem:[%s4] sm:$0xff]
      %457 = vset.pattern.permute.xlu0 0
      %458 = vperm.xlu0 %457, %v455
      %v459 = vpop.permute.xlu0 %458
      %v461 = vadd.f32 %v451, %v459
      %v462 = vadd.f32 %v453, %v459
      %v463 = vsub.f32 0.0, %v461
      %v464 = vsub.f32 0.0, %v462
      %v465 = vmul.f32 %v463, 1.442695
      %v466 = vpow.pop %v465
      %v467 = vmul.f32 %v464, 1.442695
      %v468 = vpow.pop %v467
      %v469 = vadd.f32 %v466, 1.0
      %v470 = vadd.f32 %v468, 1.0
      %v471 = vrcp.pop %v469
      %v472 = vrcp.pop %v470
      %v473 = vmul.f32 %v461, %v471
      %v474 = vmul.f32 %v462, %v472
      %475 = vst [vmem:[%s298] sm:$0xff] %v473
      %476 = vst [vmem:[%s298 + $0x8] sm:$0xff] %v474
      %s477 = smul.u32 2, %s21
      %p478 = scmp.lt.s32.totalorder %s20, 1
      %s479 = scalar_select %p478, %s20, 1
      %p480 = scmp.lt.s32.totalorder %s477, 1
      %s481 = scalar_select %p480, %s477, 1
      %s482 = smul.addr %s479, 2
      %s483 = sadd.s32 %s481, %s482
      %s484 = smul.addr %s483, 8
      %s485 = scalar_lea.vmem %s5, %s484
      // Predicated region
      $region41: #{sppelan_forward.7} parent=39 // pred_check
        %p486 = pneg %p167
      $region42: #{sppelan_forward.7} parent=39 // pred_check_branch
        %488 = sbr.rel (%p486) target = $region44
      $region43: #{sppelan_forward.7} parent=39 // pred_region
        %s489 = smul.u32 2, %s21
      $region44: #{sppelan_forward.7} parent=39 // pred_fallthru
        _
    $region40: #{sppelan_forward.7} parent=5 // pred_fallthru
      _
    %p490 = scmp.le.s32.totalorder 2, %s11
    // Predicated region
    $region45: #{sppelan_forward.7} parent=5 // pred_check
      %p491 = pneg %p490
    $region46: #{sppelan_forward.7} parent=5 // pred_check_branch
      %493 = sbr.rel (%p491) target = $region48
    $region47: #{sppelan_forward.7} parent=5 // pred_region
      %s494 = ssub.s32 %s11, 2
      // Predicated region
      $region49: #{sppelan_forward.7} parent=47 // pred_check
        %p495 = pneg %p173
      $region50: #{sppelan_forward.7} parent=47 // pred_check_branch
        %497 = sbr.rel (%p495) target = $region52
      $region51: #{sppelan_forward.7} parent=47 // pred_region
        %s498 = smul.u32 2, %s23
        %p499 = scmp.lt.s32.totalorder %s22, 1
        %s500 = scalar_select %p499, %s22, 1
        %p501 = scmp.lt.s32.totalorder %s498, 1
        %s502 = scalar_select %p501, %s498, 1
        %s503 = smul.addr %s500, 2
        %s504 = sadd.s32 %s502, %s503
        %s505 = smul.addr %s504, 8
        %s506 = scalar_lea.vmem %s5, %s505
      $region52: #{sppelan_forward.7} parent=47 // pred_fallthru
        _
    $region48: #{sppelan_forward.7} parent=5 // pred_fallthru
      _
  $region6: #{sppelan_forward.7} parent=0 // loop_footer
    %s15 = sadd.s32 1, %s11
  $region7: #{sppelan_forward.7} parent=0 // loop_footer_branch
    %10 = sbr.rel target = $region3
  $region8: #{sppelan_forward.7} parent=0 // loop_exit
    _

// kernel: sppelan_forward.5
$region0: #{sppelan_forward.5}
  #allocation0 [shape = 'u32[]', space=smem, size = 0x4, offset = 0x4, fixed_abs, tag = 'smem constant byte address 0x4 - core index']
  #allocation1 [shape = 'u32[144,128]{1,0:T(1,128)}', space=vmem, size = 0x12000, scoped, tag = 'internal scratch']
  %s0 = inlined_call_operand.vmem [shape: f32[2,8,256], index: 0, kind: input, shape index: {}]
  %s1 = inlined_call_operand.vmem [shape: f32[2,8,256], index: 1, kind: output, shape index: {0}]
  %s2 = inlined_call_operand.vmem [shape: f32[2,8,256], index: 2, kind: output, shape index: {1}]
  %s3 = inlined_call_operand.vmem [shape: f32[2,8,256], index: 3, kind: output, shape index: {2}]
  %4 = xla_tuple %s1, %s2, %s3
  %s5 = sld [smem:[#allocation0]]
  $region53: #{sppelan_forward.5} parent=0
    _
  %s7 = ssub.s32 1, %s5
  %s8 = scalar_select 0, %s7, %s5
  loop: start=0, step=1, limit=4
  $region2: #{sppelan_forward.5} parent=0 // loop_pre_header
    _
  $region3: #{sppelan_forward.5} parent=0 // loop_header
    %s10 = sphi 0, %s14
    %p11 = scmp.ge.s32.totalorder %s10, 4
    %s17 = sphi 0, %s29
    %s18 = sphi 0, %s25
    %s19 = sphi 0, %s17
    %s20 = sphi 0, %s18
    %s21 = sphi 0, %s19
    %s22 = sphi 0, %s20
    %s34 = sphi 0, %s36
    %s37 = sphi 0, %s34
    %s38 = sphi 0, %s37
    %s54 = sphi 0, %s38
    %s62 = sphi 0, %s64
    %s65 = sphi 0, %s62
    %s66 = sphi 0, %s65
    %s82 = sphi 0, %s66
    %s90 = sphi 0, %s92
    %s93 = sphi 0, %s90
    %s94 = sphi 0, %s93
    %s110 = sphi 0, %s94
    %s118 = sphi 0, %s120
    %s121 = sphi 0, %s118
    %s122 = sphi 0, %s121
    %s138 = sphi 0, %s122
  $region4: #{sppelan_forward.5} parent=0 // loop_header_branch
    %13 = sbr.rel (%p11) target = $region8
  $region5: #{sppelan_forward.5} parent=0 // loop_body
    %s15 = ssub.s32 %s10, 1
    %s16 = ssub.s32 %s10, 2
    %s23 = sadd.s32 1, %s18
    %p24 = scmp.ge.s32.totalorder %s23, 1
    %s25 = scalar_select %p24, 0, %s23
    %s26 = sadd.s32 1, %s17
    %s27 = scalar_select %p24, %s26, %s17
    %p28 = scmp.ge.s32.totalorder %s27, 2
    %s29 = scalar_select %p28, 0, %s27
    %s30 = ssub.s32 %s17, %s29
    %s31 = ssub.s32 %s18, %s25
    %s32 = sor.u32 %s30, %s31
    %p33 = scmp.eq.s32.totalorder %s32, 0
    %s35 = sadd.s32 %s34, 1
    %s36 = scalar_select %p33, %s34, %s35
    %p39 = pneg %p33
    %p40 = scmp.eq.s32.totalorder %s10, 1
    %p41 = por %p39, %p40
    %p42 = scmp.ne.s32.totalorder %s34, %s37
    %p43 = scmp.eq.s32.totalorder %s10, 0
    %p44 = por %p42, %p43
    %p45 = scmp.ne.s32.totalorder %s34, %s37
    %p46 = scmp.eq.s32.totalorder %s15, 1
    %p47 = por %p45, %p46
    %p48 = scmp.ne.s32.totalorder %s37, %s38
    %p49 = scmp.eq.s32.totalorder %s15, 0
    %p50 = por %p48, %p49
    %p51 = scmp.ne.s32.totalorder %s37, %s38
    %p52 = scmp.eq.s32.totalorder %s16, 1
    %p53 = por %p51, %p52
    %p55 = scmp.ne.s32.totalorder %s38, %s54
    %p56 = scmp.eq.s32.totalorder %s16, 0
    %p57 = por %p55, %p56
    %s58 = ssub.s32 %s17, %s29
    %s59 = ssub.s32 %s18, %s25
    %s60 = sor.u32 %s58, %s59
    %p61 = scmp.eq.s32.totalorder %s60, 0
    %s63 = sadd.s32 %s62, 1
    %s64 = scalar_select %p61, %s62, %s63
    %p67 = pneg %p61
    %p68 = scmp.eq.s32.totalorder %s10, 1
    %p69 = por %p67, %p68
    %p70 = scmp.ne.s32.totalorder %s62, %s65
    %p71 = scmp.eq.s32.totalorder %s10, 0
    %p72 = por %p70, %p71
    %p73 = scmp.ne.s32.totalorder %s62, %s65
    %p74 = scmp.eq.s32.totalorder %s15, 1
    %p75 = por %p73, %p74
    %p76 = scmp.ne.s32.totalorder %s65, %s66
    %p77 = scmp.eq.s32.totalorder %s15, 0
    %p78 = por %p76, %p77
    %p79 = scmp.ne.s32.totalorder %s65, %s66
    %p80 = scmp.eq.s32.totalorder %s16, 1
    %p81 = por %p79, %p80
    %p83 = scmp.ne.s32.totalorder %s66, %s82
    %p84 = scmp.eq.s32.totalorder %s16, 0
    %p85 = por %p83, %p84
    %s86 = ssub.s32 %s17, %s29
    %s87 = ssub.s32 %s18, %s25
    %s88 = sor.u32 %s86, %s87
    %p89 = scmp.eq.s32.totalorder %s88, 0
    %s91 = sadd.s32 %s90, 1
    %s92 = scalar_select %p89, %s90, %s91
    %p95 = pneg %p89
    %p96 = scmp.eq.s32.totalorder %s10, 1
    %p97 = por %p95, %p96
    %p98 = scmp.ne.s32.totalorder %s90, %s93
    %p99 = scmp.eq.s32.totalorder %s10, 0
    %p100 = por %p98, %p99
    %p101 = scmp.ne.s32.totalorder %s90, %s93
    %p102 = scmp.eq.s32.totalorder %s15, 1
    %p103 = por %p101, %p102
    %p104 = scmp.ne.s32.totalorder %s93, %s94
    %p105 = scmp.eq.s32.totalorder %s15, 0
    %p106 = por %p104, %p105
    %p107 = scmp.ne.s32.totalorder %s93, %s94
    %p108 = scmp.eq.s32.totalorder %s16, 1
    %p109 = por %p107, %p108
    %p111 = scmp.ne.s32.totalorder %s94, %s110
    %p112 = scmp.eq.s32.totalorder %s16, 0
    %p113 = por %p111, %p112
    %s114 = ssub.s32 %s17, %s29
    %s115 = ssub.s32 %s18, %s25
    %s116 = sor.u32 %s114, %s115
    %p117 = scmp.eq.s32.totalorder %s116, 0
    %s119 = sadd.s32 %s118, 1
    %s120 = scalar_select %p117, %s118, %s119
    %p123 = pneg %p117
    %p124 = scmp.eq.s32.totalorder %s10, 1
    %p125 = por %p123, %p124
    %p126 = scmp.ne.s32.totalorder %s118, %s121
    %p127 = scmp.eq.s32.totalorder %s10, 0
    %p128 = por %p126, %p127
    %p129 = scmp.ne.s32.totalorder %s118, %s121
    %p130 = scmp.eq.s32.totalorder %s15, 1
    %p131 = por %p129, %p130
    %p132 = scmp.ne.s32.totalorder %s121, %s122
    %p133 = scmp.eq.s32.totalorder %s15, 0
    %p134 = por %p132, %p133
    %p135 = scmp.ne.s32.totalorder %s121, %s122
    %p136 = scmp.eq.s32.totalorder %s16, 1
    %p137 = por %p135, %p136
    %p139 = scmp.ne.s32.totalorder %s122, %s138
    %p140 = scmp.eq.s32.totalorder %s16, 0
    %p141 = por %p139, %p140
    %p142 = scmp.le.s32.totalorder 1, %s10
    %p143 = scmp.lt.s32.totalorder %s10, 3
    %p144 = pnand %p142, %p143
    %p145 = pneg %p144
    // Predicated region
    $region9: #{sppelan_forward.5} parent=5 // pred_check
      _
    $region10: #{sppelan_forward.5} parent=5 // pred_check_branch
      %147 = sbr.rel (%p144) target = $region12
    $region11: #{sppelan_forward.5} parent=5 // pred_region
      %s148 = ssub.s32 %s10, 1
    $region12: #{sppelan_forward.5} parent=5 // pred_fallthru
      _
    %p149 = scmp.lt.s32.totalorder %s10, 2
    // Predicated region
    $region13: #{sppelan_forward.5} parent=5 // pred_check
      %p150 = pneg %p149
    $region14: #{sppelan_forward.5} parent=5 // pred_check_branch
      %152 = sbr.rel (%p150) target = $region16
    $region15: #{sppelan_forward.5} parent=5 // pred_region
      // Predicated region
      $region17: #{sppelan_forward.5} parent=15 // pred_check
        %p153 = pneg %p44
      $region18: #{sppelan_forward.5} parent=15 // pred_check_branch
        %155 = sbr.rel (%p153) target = $region20
      $region19: #{sppelan_forward.5} parent=15 // pred_region
        %p156 = scmp.lt.s32.totalorder %s17, 1
        %s157 = scalar_select %p156, %s17, 1
        %p158 = scmp.lt.s32.totalorder %s18, 0
        %s159 = scalar_select %p158, %s18, 0
        %s160 = smul.addr %s159, 2
        %s161 = smul.addr %s157, 2
        %s162 = sadd.s32 %s160, %s161
        %s163 = smul.addr %s162, 8
        %s164 = scalar_lea.vmem %s0, %s163
      $region20: #{sppelan_forward.5} parent=15 // pred_fallthru
        _
    $region16: #{sppelan_forward.5} parent=5 // pred_fallthru
      _
    %p165 = scmp.le.s32.totalorder 1, %s10
    %p166 = scmp.lt.s32.totalorder %s10, 3
    %p167 = pnand %p165, %p166
    %p168 = pneg %p167
    // Predicated region
    $region21: #{sppelan_forward.5} parent=5 // pred_check
      _
    $region22: #{sppelan_forward.5} parent=5 // pred_check_branch
      %170 = sbr.rel (%p167) target = $region24
    $region23: #{sppelan_forward.5} parent=5 // pred_region
      %s171 = ssub.s32 %s10, 1
      %p172 = scmp.lt.s32.totalorder %s19, 1
      %s173 = scalar_select %p172, %s19, 1
      %p174 = scmp.lt.s32.totalorder %s20, 0
      %s175 = scalar_select %p174, %s20, 0
      %s176 = smul.addr %s175, 2
      %s177 = smul.addr %s173, 2
      %s178 = sadd.s32 %s176, %s177
      %s179 = smul.addr %s178, 8
      %s180 = scalar_lea.vmem %s0, %s179
      %p181 = pneg %p50
      %p182 = pneg %p47
      %p183 = pneg %p78
      %p184 = pneg %p75
      %p185 = scmp.lt.s32.totalorder %s19, 1
      %s186 = scalar_select %p185, %s19, 1
      %p187 = scmp.lt.s32.totalorder %s20, 0
      %s188 = scalar_select %p187, %s20, 0
      %s189 = smul.addr %s188, 2
      %s190 = smul.addr %s186, 2
      %s191 = sadd.s32 %s189, %s190
      %s192 = smul.addr %s191, 8
      %s193 = scalar_lea.vmem %s1, %s192
      %p194 = pneg %p106
      %p195 = pneg %p103
      %p196 = scmp.lt.s32.totalorder %s19, 1
      %s197 = scalar_select %p196, %s19, 1
      %p198 = scmp.lt.s32.totalorder %s20, 0
      %s199 = scalar_select %p198, %s20, 0
      %s200 = smul.addr %s199, 2
      %s201 = smul.addr %s197, 2
      %s202 = sadd.s32 %s200, %s201
      %s203 = smul.addr %s202, 8
      %s204 = scalar_lea.vmem %s2, %s203
      %p205 = pneg %p134
      %p206 = pneg %p131
      %p207 = scmp.lt.s32.totalorder %s19, 1
      %s208 = scalar_select %p207, %s19, 1
      %p209 = scmp.lt.s32.totalorder %s20, 0
      %s210 = scalar_select %p209, %s20, 0
      %s211 = smul.addr %s210, 2
      %s212 = smul.addr %s208, 2
      %s213 = sadd.s32 %s211, %s212
      %s214 = smul.addr %s213, 8
      %s215 = scalar_lea.vmem %s3, %s214
      %p216 = scmp.lt.s32.totalorder %s19, 1
      %s217 = scalar_select %p216, %s19, 1
      %p218 = scmp.lt.s32.totalorder %s20, 0
      %s219 = scalar_select %p218, %s20, 0
      %s220 = smul.addr %s219, 2
      %s221 = smul.addr %s217, 2
      %s222 = sadd.s32 %s220, %s221
      %s223 = smul.addr %s222, 8
      %s224 = scalar_lea.vmem %s0, %s223
      %p225 = scmp.lt.s32.totalorder %s19, 1
      %s226 = scalar_select %p225, %s19, 1
      %p227 = scmp.lt.s32.totalorder %s20, 0
      %s228 = scalar_select %p227, %s20, 0
      %s229 = smul.addr %s228, 2
      %s230 = smul.addr %s226, 2
      %s231 = sadd.s32 %s229, %s230
      %s232 = smul.addr %s231, 8
      %s233 = scalar_lea.vmem %s1, %s232
      %p234 = scmp.lt.s32.totalorder %s19, 1
      %s235 = scalar_select %p234, %s19, 1
      %p236 = scmp.lt.s32.totalorder %s20, 0
      %s237 = scalar_select %p236, %s20, 0
      %s238 = smul.addr %s237, 2
      %s239 = smul.addr %s235, 2
      %s240 = sadd.s32 %s238, %s239
      %s241 = smul.addr %s240, 8
      %s242 = scalar_lea.vmem %s2, %s241
      %p243 = scmp.lt.s32.totalorder %s19, 1
      %s244 = scalar_select %p243, %s19, 1
      %p245 = scmp.lt.s32.totalorder %s20, 0
      %s246 = scalar_select %p245, %s20, 0
      %s247 = smul.addr %s246, 2
      %s248 = smul.addr %s244, 2
      %s249 = sadd.s32 %s247, %s248
      %s250 = smul.addr %s249, 8
      %s251 = scalar_lea.vmem %s3, %s250
      %v252 = vld [vmem:[%s224] sm:$0xff]
      %v253 = vld [vmem:[%s224 + $0x8] sm:$0xff]
      %v254 = vlaneseq
      %v255 = vand.u32 %v254, 127
      %v256 = vadd.s32 %v255, 128
      %vm257 = vcmp.lt.s32.totalorder %v255, 0
      %v258 = vsub.s32 0, %v255
      %v259 = vsel %vm257, %v258, %v255
      %v260 = vshrl.u32 %v259, 4
      %v261 = vand.u32 %v259, 15
      %v262 = vsub.s32 0, %v261
      %v263 = vsel %vm257, %v262, %v261
      %vm264 = vcmp.lt.s32.totalorder %v256, 0
      %v265 = vsub.s32 0, %v256
      %v266 = vsel %vm264, %v265, %v256
      %v267 = vshrl.u32 %v266, 4
      %v268 = vand.u32 %v266, 15
      %v269 = vsub.s32 0, %v268
      %v270 = vsel %vm264, %v269, %v268
      %vm271 = vcmp.ne.s32.totalorder %v263, 0
      %vm272 = vcmp.ne.s32.totalorder %v270, 0
      %vm273 = vcmp.lt.s32.totalorder %v263, 0
      %vm274 = vcmp.lt.s32.totalorder %v270, 0
      %vm275 = vmand %vm273, %vm271
      %vm276 = vmand %vm274, %vm272
      %v277 = vadd.s32 %v263, 16
      %v278 = vadd.s32 %v270, 16
      %v279 = vsel %vm275, %v277, %v263
      %v280 = vsel %vm276, %v278, %v270
      %vm281 = vcmp.lt.s32.totalorder %v279, 15
      %vm282 = vcmp.lt.s32.totalorder %v280, 15
      %283 = vrot.lane.b32.xlu0 %v252, 127
      %v284 = vpop.permute.xlu0 %283
      %285 = vrot.lane.b32.xlu0 %v253, 127
      %v286 = vpop.permute.xlu0 %285
      %vm287 = vcmp.lt.s32.totalorder %v255, 127
      %v288 = vsel %vm287, %v284, %v286
      %v289 = vsel %vm287, %v286, %v284
      %v290 = vsel %vm281, 1, 0
      %v291 = vsel %vm282, 1, 0
      %vm292 = vcmp.eq.s32.totalorder %v290, 1
      %vm293 = vcmp.eq.s32.totalorder %v291, 1
      %v294 = vsel %vm292, %v288, -inf
      %v295 = vsel %vm293, %v289, -inf
      %v296 = vmax.f32 %v252, %v294
      %v297 = vmax.f32 %v253, %v295
      %vm298 = vcmp.ge.s32.totalorder %v279, 1
      %vm299 = vcmp.ge.s32.totalorder %v280, 1
      %300 = vrot.lane.b32.xlu0 %v252, 1
      %v301 = vpop.permute.xlu0 %300
      %302 = vrot.lane.b32.xlu0 %v253, 1
      %v303 = vpop.permute.xlu0 %302
      %vm304 = vcmp.lt.s32.totalorder %v255, 1
      %v305 = vsel %vm304, %v301, %v303
      %v306 = vsel %vm304, %v303, %v301
      %v307 = vsel %vm298, 1, 0
      %v308 = vsel %vm299, 1, 0
      %vm309 = vcmp.eq.s32.totalorder %v307, 1
      %vm310 = vcmp.eq.s32.totalorder %v308, 1
      %v311 = vsel %vm309, %v306, -inf
      %v312 = vsel %vm310, %v305, -inf
      %v313 = vmax.f32 %v296, %v311
      %v314 = vmax.f32 %v297, %v312
      %vm315 = vcmp.lt.s32.totalorder %v279, 14
      %vm316 = vcmp.lt.s32.totalorder %v280, 14
      %317 = vrot.lane.b32.xlu0 %v252, 126
      %v318 = vpop.permute.xlu0 %317
      %319 = vrot.lane.b32.xlu0 %v253, 126
      %v320 = vpop.permute.xlu0 %319
      %vm321 = vcmp.lt.s32.totalorder %v255, 126
      %v322 = vsel %vm321, %v318, %v320
      %v323 = vsel %vm321, %v320, %v318
      %v324 = vsel %vm315, 1, 0
      %v325 = vsel %vm316, 1, 0
      %vm326 = vcmp.eq.s32.totalorder %v324, 1
      %vm327 = vcmp.eq.s32.totalorder %v325, 1
      %v328 = vsel %vm326, %v322, -inf
      %v329 = vsel %vm327, %v323, -inf
      %v330 = vmax.f32 %v313, %v328
      %v331 = vmax.f32 %v314, %v329
      %vm332 = vcmp.ge.s32.totalorder %v279, 2
      %vm333 = vcmp.ge.s32.totalorder %v280, 2
      %334 = vrot.lane.b32.xlu0 %v252, 2
      %v335 = vpop.permute.xlu0 %334
      %336 = vrot.lane.b32.xlu0 %v253, 2
      %v337 = vpop.permute.xlu0 %336
      %vm338 = vcmp.lt.s32.totalorder %v255, 2
      %v339 = vsel %vm338, %v335, %v337
      %v340 = vsel %vm338, %v337, %v335
      %v341 = vsel %vm332, 1, 0
      %v342 = vsel %vm333, 1, 0
      %vm343 = vcmp.eq.s32.totalorder %v341, 1
      %vm344 = vcmp.eq.s32.totalorder %v342, 1
      %v345 = vsel %vm343, %v340, -inf
      %v346 = vsel %vm344, %v339, -inf
      %v347 = vmax.f32 %v330, %v345
      %v348 = vmax.f32 %v331, %v346
      %vm349 = vcmp.lt.s32.totalorder %v255, 240
      %vm350 = vcmp.lt.s32.totalorder %v256, 240
      %351 = vrot.lane.b32.xlu0 %v347, 112
      %v352 = vpop.permute.xlu0 %351
      %353 = vrot.lane.b32.xlu0 %v348, 112
      %v354 = vpop.permute.xlu0 %353
      %vm355 = vcmp.lt.s32.totalorder %v255, 112
      %v356 = vsel %vm355, %v352, %v354
      %v357 = vsel %vm355, %v354, %v352
      %v358 = vsel %vm349, 1, 0
      %v359 = vsel %vm350, 1, 0
      %vm360 = vcmp.eq.s32.totalorder %v358, 1
      %vm361 = vcmp.eq.s32.totalorder %v359, 1
      %v362 = vsel %vm360, %v356, -inf
      %v363 = vsel %vm361, %v357, -inf
      %v364 = vmax.f32 %v347, %v362
      %v365 = vmax.f32 %v348, %v363
      %vm366 = vcmp.ge.s32.totalorder %v255, 16
      %vm367 = vcmp.ge.s32.totalorder %v256, 16
      %368 = vrot.lane.b32.xlu0 %v347, 16
      %v369 = vpop.permute.xlu0 %368
      %370 = vrot.lane.b32.xlu0 %v348, 16
      %v371 = vpop.permute.xlu0 %370
      %vm372 = vcmp.lt.s32.totalorder %v255, 16
      %v373 = vsel %vm372, %v369, %v371
      %v374 = vsel %vm372, %v371, %v369
      %v375 = vsel %vm366, 1, 0
      %v376 = vsel %vm367, 1, 0
      %vm377 = vcmp.eq.s32.totalorder %v375, 1
      %vm378 = vcmp.eq.s32.totalorder %v376, 1
      %v379 = vsel %vm377, %v374, -inf
      %v380 = vsel %vm378, %v373, -inf
      %v381 = vmax.f32 %v364, %v379
      %v382 = vmax.f32 %v365, %v380
      %vm383 = vcmp.lt.s32.totalorder %v255, 224
      %vm384 = vcmp.lt.s32.totalorder %v256, 224
      %385 = vrot.lane.b32.xlu0 %v347, 96
      %v386 = vpop.permute.xlu0 %385
      %387 = vrot.lane.b32.xlu0 %v348, 96
      %v388 = vpop.permute.xlu0 %387
      %vm389 = vcmp.lt.s32.totalorder %v255, 96
      %v390 = vsel %vm389, %v386, %v388
      %v391 = vsel %vm389, %v388, %v386
      %v392 = vsel %vm383, 1, 0
      %v393 = vsel %vm384, 1, 0
      %vm394 = vcmp.eq.s32.totalorder %v392, 1
      %vm395 = vcmp.eq.s32.totalorder %v393, 1
      %v396 = vsel %vm394, %v390, -inf
      %v397 = vsel %vm395, %v391, -inf
      %v398 = vmax.f32 %v381, %v396
      %v399 = vmax.f32 %v382, %v397
      %vm400 = vcmp.ge.s32.totalorder %v255, 32
      %vm401 = vcmp.ge.s32.totalorder %v256, 32
      %402 = vrot.lane.b32.xlu0 %v347, 32
      %v403 = vpop.permute.xlu0 %402
      %404 = vrot.lane.b32.xlu0 %v348, 32
      %v405 = vpop.permute.xlu0 %404
      %vm406 = vcmp.lt.s32.totalorder %v255, 32
      %v407 = vsel %vm406, %v403, %v405
      %v408 = vsel %vm406, %v405, %v403
      %v409 = vsel %vm400, 1, 0
      %v410 = vsel %vm401, 1, 0
      %vm411 = vcmp.eq.s32.totalorder %v409, 1
      %vm412 = vcmp.eq.s32.totalorder %v410, 1
      %v413 = vsel %vm411, %v408, -inf
      %v414 = vsel %vm412, %v407, -inf
      %v415 = vmax.f32 %v398, %v413
      %v416 = vmax.f32 %v399, %v414
      %417 = vrot.lane.b32.xlu0 %v415, 127
      %v418 = vpop.permute.xlu0 %417
      %419 = vrot.lane.b32.xlu0 %v416, 127
      %v420 = vpop.permute.xlu0 %419
      %v421 = vsel %vm287, %v418, %v420
      %v422 = vsel %vm287, %v420, %v418
      %v423 = vsel %vm292, %v421, -inf
      %v424 = vsel %vm293, %v422, -inf
      %v425 = vmax.f32 %v415, %v423
      %v426 = vmax.f32 %v416, %v424
      %427 = vrot.lane.b32.xlu0 %v415, 1
      %v428 = vpop.permute.xlu0 %427
      %429 = vrot.lane.b32.xlu0 %v416, 1
      %v430 = vpop.permute.xlu0 %429
      %v431 = vsel %vm304, %v428, %v430
      %v432 = vsel %vm304, %v430, %v428
      %v433 = vsel %vm309, %v432, -inf
      %v434 = vsel %vm310, %v431, -inf
      %v435 = vmax.f32 %v425, %v433
      %v436 = vmax.f32 %v426, %v434
      %437 = vrot.lane.b32.xlu0 %v415, 126
      %v438 = vpop.permute.xlu0 %437
      %439 = vrot.lane.b32.xlu0 %v416, 126
      %v440 = vpop.permute.xlu0 %439
      %v441 = vsel %vm321, %v438, %v440
      %v442 = vsel %vm321, %v440, %v438
      %v443 = vsel %vm326, %v441, -inf
      %v444 = vsel %vm327, %v442, -inf
      %v445 = vmax.f32 %v435, %v443
      %v446 = vmax.f32 %v436, %v444
      %447 = vrot.lane.b32.xlu0 %v415, 2
      %v448 = vpop.permute.xlu0 %447
      %449 = vrot.lane.b32.xlu0 %v416, 2
      %v450 = vpop.permute.xlu0 %449
      %v451 = vsel %vm338, %v448, %v450
      %v452 = vsel %vm338, %v450, %v448
      %v453 = vsel %vm343, %v452, -inf
      %v454 = vsel %vm344, %v451, -inf
      %v455 = vmax.f32 %v445, %v453
      %v456 = vmax.f32 %v446, %v454
      %457 = vrot.lane.b32.xlu0 %v455, 112
      %v458 = vpop.permute.xlu0 %457
      %459 = vrot.lane.b32.xlu0 %v456, 112
      %v460 = vpop.permute.xlu0 %459
      %v461 = vsel %vm355, %v458, %v460
      %v462 = vsel %vm355, %v460, %v458
      %v463 = vsel %vm360, %v461, -inf
      %v464 = vsel %vm361, %v462, -inf
      %v465 = vmax.f32 %v455, %v463
      %v466 = vmax.f32 %v456, %v464
      %467 = vrot.lane.b32.xlu0 %v455, 16
      %v468 = vpop.permute.xlu0 %467
      %469 = vrot.lane.b32.xlu0 %v456, 16
      %v470 = vpop.permute.xlu0 %469
      %v471 = vsel %vm372, %v468, %v470
      %v472 = vsel %vm372, %v470, %v468
      %v473 = vsel %vm377, %v472, -inf
      %v474 = vsel %vm378, %v471, -inf
      %v475 = vmax.f32 %v465, %v473
      %v476 = vmax.f32 %v466, %v474
      %477 = vrot.lane.b32.xlu0 %v455, 96
      %v478 = vpop.permute.xlu0 %477
      %479 = vrot.lane.b32.xlu0 %v456, 96
      %v480 = vpop.permute.xlu0 %479
      %v481 = vsel %vm389, %v478, %v480
      %v482 = vsel %vm389, %v480, %v478
      %v483 = vsel %vm394, %v481, -inf
      %v484 = vsel %vm395, %v482, -inf
      %v485 = vmax.f32 %v475, %v483
      %v486 = vmax.f32 %v476, %v484
      %487 = vrot.lane.b32.xlu0 %v455, 32
      %v488 = vpop.permute.xlu0 %487
      %489 = vrot.lane.b32.xlu0 %v456, 32
      %v490 = vpop.permute.xlu0 %489
      %v491 = vsel %vm406, %v488, %v490
      %v492 = vsel %vm406, %v490, %v488
      %v493 = vsel %vm411, %v492, -inf
      %v494 = vsel %vm412, %v491, -inf
      %v495 = vmax.f32 %v485, %v493
      %v496 = vmax.f32 %v486, %v494
      %497 = vrot.lane.b32.xlu0 %v495, 127
      %v498 = vpop.permute.xlu0 %497
      %499 = vrot.lane.b32.xlu0 %v496, 127
      %v500 = vpop.permute.xlu0 %499
      %v501 = vsel %vm287, %v498, %v500
      %v502 = vsel %vm287, %v500, %v498
      %v503 = vsel %vm292, %v501, -inf
      %v504 = vsel %vm293, %v502, -inf
      %v505 = vmax.f32 %v495, %v503
      %v506 = vmax.f32 %v496, %v504
      %507 = vrot.lane.b32.xlu0 %v495, 1
      %v508 = vpop.permute.xlu0 %507
      %509 = vrot.lane.b32.xlu0 %v496, 1
      %v510 = vpop.permute.xlu0 %509
      %v511 = vsel %vm304, %v508, %v510
      %v512 = vsel %vm304, %v510, %v508
      %v513 = vsel %vm309, %v512, -inf
      %v514 = vsel %vm310, %v511, -inf
      %v515 = vmax.f32 %v505, %v513
      %v516 = vmax.f32 %v506, %v514
      %517 = vrot.lane.b32.xlu0 %v495, 126
      %v518 = vpop.permute.xlu0 %517
      %519 = vrot.lane.b32.xlu0 %v496, 126
      %v520 = vpop.permute.xlu0 %519
      %v521 = vsel %vm321, %v518, %v520
      %v522 = vsel %vm321, %v520, %v518
      %v523 = vsel %vm326, %v521, -inf
      %v524 = vsel %vm327, %v522, -inf
      %v525 = vmax.f32 %v515, %v523
      %v526 = vmax.f32 %v516, %v524
      %527 = vrot.lane.b32.xlu0 %v495, 2
      %v528 = vpop.permute.xlu0 %527
      %529 = vrot.lane.b32.xlu0 %v496, 2
      %v530 = vpop.permute.xlu0 %529
      %v531 = vsel %vm338, %v528, %v530
      %v532 = vsel %vm338, %v530, %v528
      %v533 = vsel %vm343, %v532, -inf
      %v534 = vsel %vm344, %v531, -inf
      %v535 = vmax.f32 %v525, %v533
      %v536 = vmax.f32 %v526, %v534
      %537 = vrot.lane.b32.xlu0 %v535, 112
      %v538 = vpop.permute.xlu0 %537
      %539 = vrot.lane.b32.xlu0 %v536, 112
      %v540 = vpop.permute.xlu0 %539
      %v541 = vsel %vm355, %v538, %v540
      %v542 = vsel %vm355, %v540, %v538
      %v543 = vsel %vm360, %v541, -inf
      %v544 = vsel %vm361, %v542, -inf
      %v545 = vmax.f32 %v535, %v543
      %v546 = vmax.f32 %v536, %v544
      %547 = vrot.lane.b32.xlu0 %v535, 16
      %v548 = vpop.permute.xlu0 %547
      %549 = vrot.lane.b32.xlu0 %v536, 16
      %v550 = vpop.permute.xlu0 %549
      %v551 = vsel %vm372, %v548, %v550
      %v552 = vsel %vm372, %v550, %v548
      %v553 = vsel %vm377, %v552, -inf
      %v554 = vsel %vm378, %v551, -inf
      %v555 = vmax.f32 %v545, %v553
      %v556 = vmax.f32 %v546, %v554
      %557 = vrot.lane.b32.xlu0 %v535, 96
      %v558 = vpop.permute.xlu0 %557
      %559 = vrot.lane.b32.xlu0 %v536, 96
      %v560 = vpop.permute.xlu0 %559
      %v561 = vsel %vm389, %v558, %v560
      %v562 = vsel %vm389, %v560, %v558
      %v563 = vsel %vm394, %v561, -inf
      %v564 = vsel %vm395, %v562, -inf
      %v565 = vmax.f32 %v555, %v563
      %v566 = vmax.f32 %v556, %v564
      %567 = vrot.lane.b32.xlu0 %v535, 32
      %v568 = vpop.permute.xlu0 %567
      %569 = vrot.lane.b32.xlu0 %v536, 32
      %v570 = vpop.permute.xlu0 %569
      %v571 = vsel %vm406, %v568, %v570
      %v572 = vsel %vm406, %v570, %v568
      %v573 = vsel %vm411, %v572, -inf
      %v574 = vsel %vm412, %v571, -inf
      %v575 = vmax.f32 %v565, %v573
      %v576 = vmax.f32 %v566, %v574
      %577 = vst [vmem:[%s233] sm:$0xff] %v415
      %578 = vst [vmem:[%s233 + $0x8] sm:$0xff] %v416
      %579 = vst [vmem:[%s242] sm:$0xff] %v495
      %580 = vst [vmem:[%s242 + $0x8] sm:$0xff] %v496
      %581 = vst [vmem:[%s251] sm:$0xff] %v575
      %582 = vst [vmem:[%s251 + $0x8] sm:$0xff] %v576
      %p583 = scmp.lt.s32.totalorder %s19, 1
      %s584 = scalar_select %p583, %s19, 1
      %p585 = scmp.lt.s32.totalorder %s20, 0
      %s586 = scalar_select %p585, %s20, 0
      %s587 = smul.addr %s586, 2
      %s588 = smul.addr %s584, 2
      %s589 = sadd.s32 %s587, %s588
      %s590 = smul.addr %s589, 8
      %s591 = scalar_lea.vmem %s1, %s590
      %p592 = scmp.lt.s32.totalorder %s19, 1
      %s593 = scalar_select %p592, %s19, 1
      %p594 = scmp.lt.s32.totalorder %s20, 0
      %s595 = scalar_select %p594, %s20, 0
      %s596 = smul.addr %s595, 2
      %s597 = smul.addr %s593, 2
      %s598 = sadd.s32 %s596, %s597
      %s599 = smul.addr %s598, 8
      %s600 = scalar_lea.vmem %s2, %s599
      %p601 = scmp.lt.s32.totalorder %s19, 1
      %s602 = scalar_select %p601, %s19, 1
      %p603 = scmp.lt.s32.totalorder %s20, 0
      %s604 = scalar_select %p603, %s20, 0
      %s605 = smul.addr %s604, 2
      %s606 = smul.addr %s602, 2
      %s607 = sadd.s32 %s605, %s606
      %s608 = smul.addr %s607, 8
      %s609 = scalar_lea.vmem %s3, %s608
      // Predicated region
      $region25: #{sppelan_forward.5} parent=23 // pred_check
        %p610 = pneg %p75
      $region26: #{sppelan_forward.5} parent=23 // pred_check_branch
        %612 = sbr.rel (%p610) target = $region28
      $region27: #{sppelan_forward.5} parent=23 // pred_region
        _
      $region28: #{sppelan_forward.5} parent=23 // pred_fallthru
        _
      // Predicated region
      $region29: #{sppelan_forward.5} parent=23 // pred_check
        %p613 = pneg %p103
      $region30: #{sppelan_forward.5} parent=23 // pred_check_branch
        %615 = sbr.rel (%p613) target = $region32
      $region31: #{sppelan_forward.5} parent=23 // pred_region
        _
      $region32: #{sppelan_forward.5} parent=23 // pred_fallthru
        _
      // Predicated region
      $region33: #{sppelan_forward.5} parent=23 // pred_check
        %p616 = pneg %p131
      $region34: #{sppelan_forward.5} parent=23 // pred_check_branch
        %618 = sbr.rel (%p616) target = $region36
      $region35: #{sppelan_forward.5} parent=23 // pred_region
        _
      $region36: #{sppelan_forward.5} parent=23 // pred_fallthru
        _
    $region24: #{sppelan_forward.5} parent=5 // pred_fallthru
      _
    %p619 = scmp.le.s32.totalorder 2, %s10
    // Predicated region
    $region37: #{sppelan_forward.5} parent=5 // pred_check
      %p620 = pneg %p619
    $region38: #{sppelan_forward.5} parent=5 // pred_check_branch
      %622 = sbr.rel (%p620) target = $region40
    $region39: #{sppelan_forward.5} parent=5 // pred_region
      %s623 = ssub.s32 %s10, 2
      // Predicated region
      $region41: #{sppelan_forward.5} parent=39 // pred_check
        %p624 = pneg %p81
      $region42: #{sppelan_forward.5} parent=39 // pred_check_branch
        %626 = sbr.rel (%p624) target = $region44
      $region43: #{sppelan_forward.5} parent=39 // pred_region
        %p627 = scmp.lt.s32.totalorder %s21, 1
        %s628 = scalar_select %p627, %s21, 1
        %p629 = scmp.lt.s32.totalorder %s22, 0
        %s630 = scalar_select %p629, %s22, 0
        %s631 = smul.addr %s630, 2
        %s632 = smul.addr %s628, 2
        %s633 = sadd.s32 %s631, %s632
        %s634 = smul.addr %s633, 8
        %s635 = scalar_lea.vmem %s1, %s634
      $region44: #{sppelan_forward.5} parent=39 // pred_fallthru
        _
      // Predicated region
      $region45: #{sppelan_forward.5} parent=39 // pred_check
        %p636 = pneg %p109
      $region46: #{sppelan_forward.5} parent=39 // pred_check_branch
        %638 = sbr.rel (%p636) target = $region48
      $region47: #{sppelan_forward.5} parent=39 // pred_region
        %p639 = scmp.lt.s32.totalorder %s21, 1
        %s640 = scalar_select %p639, %s21, 1
        %p641 = scmp.lt.s32.totalorder %s22, 0
        %s642 = scalar_select %p641, %s22, 0
        %s643 = smul.addr %s642, 2
        %s644 = smul.addr %s640, 2
        %s645 = sadd.s32 %s643, %s644
        %s646 = smul.addr %s645, 8
        %s647 = scalar_lea.vmem %s2, %s646
      $region48: #{sppelan_forward.5} parent=39 // pred_fallthru
        _
      // Predicated region
      $region49: #{sppelan_forward.5} parent=39 // pred_check
        %p648 = pneg %p137
      $region50: #{sppelan_forward.5} parent=39 // pred_check_branch
        %650 = sbr.rel (%p648) target = $region52
      $region51: #{sppelan_forward.5} parent=39 // pred_region
        %p651 = scmp.lt.s32.totalorder %s21, 1
        %s652 = scalar_select %p651, %s21, 1
        %p653 = scmp.lt.s32.totalorder %s22, 0
        %s654 = scalar_select %p653, %s22, 0
        %s655 = smul.addr %s654, 2
        %s656 = smul.addr %s652, 2
        %s657 = sadd.s32 %s655, %s656
        %s658 = smul.addr %s657, 8
        %s659 = scalar_lea.vmem %s3, %s658
      $region52: #{sppelan_forward.5} parent=39 // pred_fallthru
        _
    $region40: #{sppelan_forward.5} parent=5 // pred_fallthru
      _
  $region6: #{sppelan_forward.5} parent=0 // loop_footer
    %s14 = sadd.s32 1, %s10
  $region7: #{sppelan_forward.5} parent=0 // loop_footer_branch
    %9 = sbr.rel target = $region3
  $region8: #{sppelan_forward.5} parent=0 // loop_exit
    _

</llo_original>
